<compile_context>
chip_gen: v7x
topology: tpu7x:2x2x1
jax: 0.10.0
libtpu: 0.0.40
codegen_flags: <defaults>
</compile_context>

<pallas_src>
import functools
import math

import jax
import jax.numpy as jnp
import numpy as np
from jax.experimental import pallas as pl
from jax.experimental.pallas import tpu as pltpu


def _round_up(x, m):
    return ((x + m - 1) // m) * m


def _vmem_limit_bytes():
    # Generation-aware VMEM budget: ~75% of physical, capped at 96 MiB
    # (v5e/v6e: 128 MiB physical -> 96 MiB; v7x: 64 MiB physical -> 48 MiB).
    try:
        cap = int(pltpu.get_tpu_info().vmem_capacity_bytes)
    except Exception:
        cap = 64 * 1024 * 1024
    return max(32 * 1024 * 1024, min((cap * 3) // 4, 96 * 1024 * 1024))


# ---------------------------------------------------------------------------
# Fused Pallas kernel: embed+PE (q,k,v) -> encoder layer -> final projection
# ---------------------------------------------------------------------------

def fused_encoder_kernel(xqkv_ref, emb_w_ref, pe3_ref,
                         wq_ref, bq_ref, wk_ref, bk_ref, wv_ref, bv_ref,
                         wo_ref, bo_ref, w1_ref, b1_ref, w2_ref, b2_ref,
                         fin_w_ref, fin_b_ref,
                         o_ref, ctx_scr, *, num_heads, seq_len):
    # Activations: (1, 3S, Din) input block, (1, S, Dpad) output block.
    # Weights are full-size, single-buffered, bf16 in VMEM; biases / PE f32.
    bf16 = jnp.bfloat16

    def wdot(x_f32, w_ref, b_ref):
        # bf16 operands on the MXU, f32 accumulation, f32 bias add.
        return jnp.dot(x_f32.astype(bf16), w_ref[...],
                       preferred_element_type=jnp.float32) + b_ref[...]

    # One fused (3S, Din) x (Din, H) embedding matmul for q/k/v; pe3 already
    # holds (emb_b + positional encoding) tiled 3x, so a single f32 add covers
    # bias and PE for all three streams.
    x = xqkv_ref[0]                                               # (3S, Din)
    qkv = jnp.dot(x.astype(bf16), emb_w_ref[...],
                  preferred_element_type=jnp.float32) + pe3_ref[...]
    S = seq_len
    q = qkv[0 * S:1 * S]                                          # (S, H) f32
    k = qkv[1 * S:2 * S]
    v = qkv[2 * S:3 * S]

    H = q.shape[1]
    dh = H // num_heads
    scale = 1.0 / math.sqrt(dh)

    # fold the 1/sqrt(dh) score scale into the q projection (one (S,H) multiply)
    qp = wdot(q, wq_ref, bq_ref) * scale
    kp = wdot(k, wk_ref, bk_ref)
    vp = wdot(v, wv_ref, bv_ref)

    # Static Python loop over heads (num_heads is small and static).
    # Attention matmuls use bf16 operands on the MXU (f32 accumulate); softmax
    # math stays f32. Per-head context is written into VMEM scratch (no concat).
    for h in range(num_heads):
        qh = qp[:, h * dh:(h + 1) * dh].astype(bf16)              # (S, dh)
        kh = kp[:, h * dh:(h + 1) * dh].astype(bf16)              # (S, dh)
        vh = vp[:, h * dh:(h + 1) * dh].astype(bf16)              # (S, dh)
        # trans_b contraction: no materialized kh.T / XLU transpose.
        s = jax.lax.dot_general(qh, kh, (((1,), (1,)), ((), ())),
                                preferred_element_type=jnp.float32)  # (S, S)
        s = s - jnp.max(s, axis=-1, keepdims=True)
        p = jnp.exp(s)
        p = p * pl.reciprocal(jnp.sum(p, axis=-1, keepdims=True), approx=True)
        ctx_scr[:, h * dh:(h + 1) * dh] = jnp.dot(
            p.astype(bf16), vh, preferred_element_type=jnp.float32)

    attn_out = wdot(ctx_scr[...], wo_ref, bo_ref)
    resid = q + attn_out

    ff = jnp.maximum(wdot(resid, w1_ref, b1_ref), 0.0)
    ff = wdot(ff, w2_ref, b2_ref)
    y = resid + ff                                                # (S, H)

    out = wdot(y, fin_w_ref, fin_b_ref)                           # (S, Dpad)
    o_ref[0] = out.astype(o_ref.dtype)                            # lane-dense store


# ---------------------------------------------------------------------------
# Wrapper
# ---------------------------------------------------------------------------

def transformer_encoder(params, input_q, input_k, input_v, num_heads):
    B, S, Din = input_q.shape
    H = params["emb_w"].shape[1]
    Dout = params["fin_w"].shape[1]
    Dpad = _round_up(Dout, 128)   # lane-dense output slab (avoid masked vst)

    # Dead-layer elision: in the original module every layer consumes the same
    # q/k/v and only the last layer's output survives the loop, so running only
    # the last layer is bit-identical to running all of them.
    lp = params["layers"][-1]
    Hff = lp["w1"].shape[1]

    bf16 = jnp.bfloat16
    pe_b = params["pos_enc"][:S] + params["emb_b"]            # emb_b + PE (S, H)
    pe3 = jnp.concatenate([pe_b, pe_b, pe_b], axis=0)         # (3S, H)
    emb_w = params["emb_w"].astype(bf16)
    fin_w = (jnp.zeros((H, Dpad), jnp.float32)
             .at[:, :Dout].set(params["fin_w"]).astype(bf16))
    fin_b = jnp.zeros((1, Dpad), jnp.float32).at[:, :Dout].set(params["fin_b"])

    # q/k/v stacked along rows -> one fused embedding matmul in-kernel.
    xqkv = jnp.concatenate([input_q, input_k, input_v], axis=1)  # (B, 3S, Din)

    kern = functools.partial(fused_encoder_kernel, num_heads=num_heads, seq_len=S)

    args = (xqkv,
            emb_w, pe3,
            lp["wq"].astype(bf16), lp["bq"],
            lp["wk"].astype(bf16), lp["bk"],
            lp["wv"].astype(bf16), lp["bv"],
            lp["wo"].astype(bf16), lp["bo"],
            lp["w1"].astype(bf16), lp["b1"],
            lp["w2"].astype(bf16), lp["b2"],
            fin_w, fin_b)

    def build(single_buffer_weights):
        def const_spec(shape):
            idx = lambda b, _n=len(shape): (0,) * _n
            if single_buffer_weights:
                # constant index_map -> default Buffered(2) would just duplicate
                # the weights in VMEM; single-buffer them.
                return pl.BlockSpec(shape, idx, pipeline_mode=pl.Buffered(1))
            return pl.BlockSpec(shape, idx)

        in_specs = [
            pl.BlockSpec((1, 3 * S, Din), lambda b: (b, 0, 0)),       # xqkv
            const_spec((Din, H)), const_spec((3 * S, H)),             # emb_w, pe3
            const_spec((H, H)), const_spec((1, H)),                   # wq, bq
            const_spec((H, H)), const_spec((1, H)),                   # wk, bk
            const_spec((H, H)), const_spec((1, H)),                   # wv, bv
            const_spec((H, H)), const_spec((1, H)),                   # wo, bo
            const_spec((H, Hff)), const_spec((1, Hff)),               # w1, b1
            const_spec((Hff, H)), const_spec((1, H)),                 # w2, b2
            const_spec((H, Dpad)), const_spec((1, Dpad)),             # fin_w, fin_b
        ]
        return pl.pallas_call(
            kern,
            out_shape=jax.ShapeDtypeStruct((B, S, Dpad), jnp.float32),
            grid=(B,),
            in_specs=in_specs,
            out_specs=pl.BlockSpec((1, S, Dpad), lambda b: (b, 0, 0)),
            scratch_shapes=[pltpu.VMEM((S, H), jnp.float32)],          # per-head ctx
            compiler_params=pltpu.CompilerParams(
                dimension_semantics=("parallel",),
                vmem_limit_bytes=_vmem_limit_bytes(),
            ),
        )

    try:
        out = build(single_buffer_weights=True)(*args)
    except Exception:
        # Fallback if this jax version rejects Buffered(1) pipeline_mode.
        out = build(single_buffer_weights=False)(*args)
    return out[:, :, :Dout]


# ---------------------------------------------------------------------------
# Parameter construction (deterministic, nn.Linear-style uniform init, f32)
# ---------------------------------------------------------------------------

def _linear_params(key, fan_in, fan_out):
    kw, kb = jax.random.split(key)
    bound = 1.0 / math.sqrt(fan_in)
    w = jax.random.uniform(kw, (fan_in, fan_out), jnp.float32, -bound, bound)
    b = jax.random.uniform(kb, (1, fan_out), jnp.float32, -bound, bound)
    return w, b


def make_params(key, input_size, hidden_size, num_layers, max_seq_length=2048):
    keys = jax.random.split(key, 2 + num_layers)
    params = {}
    params["emb_w"], params["emb_b"] = _linear_params(keys[0], input_size, hidden_size)
    params["fin_w"], params["fin_b"] = _linear_params(keys[1], hidden_size, input_size)

    position = np.arange(max_seq_length, dtype=np.float32)[:, None]
    div_term = np.exp(np.arange(0, hidden_size, 2, dtype=np.float32)
                      * (-math.log(10000.0) / hidden_size))
    pe = np.zeros((max_seq_length, hidden_size), dtype=np.float32)
    pe[:, 0::2] = np.sin(position * div_term)
    pe[:, 1::2] = np.cos(position * div_term)
    params["pos_enc"] = jnp.asarray(pe)

    layers = []
    for i in range(num_layers):
        lk = jax.random.split(keys[2 + i], 6)
        lp = {}
        lp["wq"], lp["bq"] = _linear_params(lk[0], hidden_size, hidden_size)
        lp["wk"], lp["bk"] = _linear_params(lk[1], hidden_size, hidden_size)
        lp["wv"], lp["bv"] = _linear_params(lk[2], hidden_size, hidden_size)
        lp["wo"], lp["bo"] = _linear_params(lk[3], hidden_size, hidden_size)
        lp["w1"], lp["b1"] = _linear_params(lk[4], hidden_size, 4 * hidden_size)
        lp["w2"], lp["b2"] = _linear_params(lk[5], 4 * hidden_size, hidden_size)
        layers.append(lp)
    params["layers"] = layers
    return params


# ---------------------------------------------------------------------------
# Pure-JAX references (f32, and a bf16-matmul-mirrored variant)
# ---------------------------------------------------------------------------

def _mm(x, w, cast):
    if cast:
        x = x.astype(jnp.bfloat16)
        w = w.astype(jnp.bfloat16)
    return jnp.dot(x, w, preferred_element_type=jnp.float32)


def _amm(a, b, cast, eq):
    if cast:
        a = a.astype(jnp.bfloat16)
        b = b.astype(jnp.bfloat16)
    return jnp.einsum(eq, a, b, preferred_element_type=jnp.float32)


def ref_layer(lp, q, k, v, num_heads, cast):
    B, S, H = q.shape
    dh = H // num_heads
    qp = (_mm(q, lp["wq"], cast) + lp["bq"]) * (1.0 / math.sqrt(dh))
    kp = _mm(k, lp["wk"], cast) + lp["bk"]
    vp = _mm(v, lp["wv"], cast) + lp["bv"]
    qh = qp.reshape(B, S, num_heads, dh).transpose(0, 2, 1, 3)
    kh = kp.reshape(B, S, num_heads, dh).transpose(0, 2, 1, 3)
    vh = vp.reshape(B, S, num_heads, dh).transpose(0, 2, 1, 3)
    s = _amm(qh, kh, cast, "bhqd,bhkd->bhqk")
    p = jax.nn.softmax(s, axis=-1)
    ctx = _amm(p, vh, cast, "bhqk,bhkd->bhqd").transpose(0, 2, 1, 3).reshape(B, S, H)
    attn = _mm(ctx, lp["wo"], cast) + lp["bo"]
    resid = q + attn
    ff = jnp.maximum(_mm(resid, lp["w1"], cast) + lp["b1"], 0.0)
    ff = _mm(ff, lp["w2"], cast) + lp["b2"]
    return resid + ff


def ref_forward(params, iq, ik, iv, num_heads, cast=False):
    S = iq.shape[1]
    pe = params["pos_enc"][:S]
    q = _mm(iq, params["emb_w"], cast) + params["emb_b"] + pe
    k = _mm(ik, params["emb_w"], cast) + params["emb_b"] + pe
    v = _mm(iv, params["emb_w"], cast) + params["emb_b"] + pe
    out = None
    for lp in params["layers"]:   # matches the original module; only last survives
        out = ref_layer(lp, q, k, v, num_heads, cast)
    return _mm(out, params["fin_w"], cast) + params["fin_b"]


# ---------------------------------------------------------------------------

if __name__ == "__main__":
    B, S = 2, 8
    input_size, hidden_size = 16, 32
    num_layers, num_heads = 2, 4

    key = jax.random.PRNGKey(0)
    kparam, kq, kk, kv = jax.random.split(key, 4)
    params = make_params(kparam, input_size, hidden_size, num_layers)

    input_q = jax.random.normal(kq, (B, S, input_size), jnp.float32)
    input_k = jax.random.normal(kk, (B, S, input_size), jnp.float32)
    input_v = jax.random.normal(kv, (B, S, input_size), jnp.float32)

    out = transformer_encoder(params, input_q, input_k, input_v, num_heads)
    out = jax.block_until_ready(out)
    assert out.shape == (B, S, input_size), out.shape

    # Check 1: against a reference that mirrors the kernel's bf16-matmul strategy.
    ref_bf16 = jax.block_until_ready(
        ref_forward(params, input_q, input_k, input_v, num_heads, cast=True))
    np.testing.assert_allclose(np.asarray(out), np.asarray(ref_bf16),
                               atol=2e-2, rtol=2e-2)

    # Check 2 (loose): against the pure-f32 reference for semantic fidelity.
    ref_f32 = jax.block_until_ready(
        ref_forward(params, input_q, input_k, input_v, num_heads, cast=False))
    np.testing.assert_allclose(np.asarray(out), np.asarray(ref_f32),
                               atol=1e-1, rtol=1e-1)

    print("KERNEL_OK")
</pallas_src>

<mosaic_0001>
module attributes {stable_mosaic.version = 11 : i64} {
  func.func @fused_encoder_kernel(%arg0: i32, %arg1: memref<1x24x16xf32, #tpu.memory_space<vmem>>, %arg2: memref<16x32xbf16, #tpu.memory_space<vmem>>, %arg3: memref<24x32xf32, #tpu.memory_space<vmem>>, %arg4: memref<32x32xbf16, #tpu.memory_space<vmem>>, %arg5: memref<1x32xf32, #tpu.memory_space<vmem>>, %arg6: memref<32x32xbf16, #tpu.memory_space<vmem>>, %arg7: memref<1x32xf32, #tpu.memory_space<vmem>>, %arg8: memref<32x32xbf16, #tpu.memory_space<vmem>>, %arg9: memref<1x32xf32, #tpu.memory_space<vmem>>, %arg10: memref<32x32xbf16, #tpu.memory_space<vmem>>, %arg11: memref<1x32xf32, #tpu.memory_space<vmem>>, %arg12: memref<32x128xbf16, #tpu.memory_space<vmem>>, %arg13: memref<1x128xf32, #tpu.memory_space<vmem>>, %arg14: memref<128x32xbf16, #tpu.memory_space<vmem>>, %arg15: memref<1x32xf32, #tpu.memory_space<vmem>>, %arg16: memref<32x128xbf16, #tpu.memory_space<vmem>>, %arg17: memref<1x128xf32, #tpu.memory_space<vmem>>, %arg18: memref<1x8x128xf32, #tpu.memory_space<vmem>>, %arg19: memref<8x32xf32, #tpu.memory_space<vmem>>) attributes {dimension_semantics = [#tpu.dimension_semantics<parallel>], iteration_bounds = array<i64: 2>, scalar_prefetch = 0 : i64, scratch_operands = 1 : i64, tpu.core_type = #tpu.core_type<tc>, window_params = [{transform_indices = @transform_0, window_bounds = array<i64: 1, 24, 16>}, {pipeline_mode = #tpu.pipeline_mode<synchronous>, transform_indices = @transform_1, window_bounds = array<i64: 16, 32>}, {pipeline_mode = #tpu.pipeline_mode<synchronous>, transform_indices = @transform_2, window_bounds = array<i64: 24, 32>}, {pipeline_mode = #tpu.pipeline_mode<synchronous>, transform_indices = @transform_3, window_bounds = array<i64: 32, 32>}, {pipeline_mode = #tpu.pipeline_mode<synchronous>, transform_indices = @transform_4, window_bounds = array<i64: 1, 32>}, {pipeline_mode = #tpu.pipeline_mode<synchronous>, transform_indices = @transform_5, window_bounds = array<i64: 32, 32>}, {pipeline_mode = #tpu.pipeline_mode<synchronous>, transform_indices = @transform_6, window_bounds = array<i64: 1, 32>}, {pipeline_mode = #tpu.pipeline_mode<synchronous>, transform_indices = @transform_7, window_bounds = array<i64: 32, 32>}, {pipeline_mode = #tpu.pipeline_mode<synchronous>, transform_indices = @transform_8, window_bounds = array<i64: 1, 32>}, {pipeline_mode = #tpu.pipeline_mode<synchronous>, transform_indices = @transform_9, window_bounds = array<i64: 32, 32>}, {pipeline_mode = #tpu.pipeline_mode<synchronous>, transform_indices = @transform_10, window_bounds = array<i64: 1, 32>}, {pipeline_mode = #tpu.pipeline_mode<synchronous>, transform_indices = @transform_11, window_bounds = array<i64: 32, 128>}, {pipeline_mode = #tpu.pipeline_mode<synchronous>, transform_indices = @transform_12, window_bounds = array<i64: 1, 128>}, {pipeline_mode = #tpu.pipeline_mode<synchronous>, transform_indices = @transform_13, window_bounds = array<i64: 128, 32>}, {pipeline_mode = #tpu.pipeline_mode<synchronous>, transform_indices = @transform_14, window_bounds = array<i64: 1, 32>}, {pipeline_mode = #tpu.pipeline_mode<synchronous>, transform_indices = @transform_15, window_bounds = array<i64: 32, 128>}, {pipeline_mode = #tpu.pipeline_mode<synchronous>, transform_indices = @transform_16, window_bounds = array<i64: 1, 128>}, {transform_indices = @transform_17, window_bounds = array<i64: 1, 8, 128>}]} {
    %c0 = arith.constant 0 : index
    %c0_0 = arith.constant 0 : index
    %c0_1 = arith.constant 0 : index
    %0 = vector.load %arg1[%c0, %c0_0, %c0_1] : memref<1x24x16xf32, #tpu.memory_space<vmem>>, vector<1x24x16xf32>
    %1 = vector.shape_cast %0 : vector<1x24x16xf32> to vector<24x16xf32>
    %2 = arith.truncf %1 : vector<24x16xf32> to vector<24x16xbf16>
    %c0_2 = arith.constant 0 : index
    %c0_3 = arith.constant 0 : index
    %3 = vector.load %arg2[%c0_2, %c0_3] : memref<16x32xbf16, #tpu.memory_space<vmem>>, vector<16x32xbf16>
    %cst = arith.constant dense<0.000000e+00> : vector<24x32xf32>
    %4 = tpu.matmul %2, %3, %cst {dimension_numbers = #tpu.dot_dimension_numbers<[1], [0], [0], [1], [0, 0, 1, 1], [], []>} : vector<24x16xbf16>, vector<16x32xbf16>, vector<24x32xf32> -> vector<24x32xf32>
    %c0_4 = arith.constant 0 : index
    %c0_5 = arith.constant 0 : index
    %5 = vector.load %arg3[%c0_4, %c0_5] : memref<24x32xf32, #tpu.memory_space<vmem>>, vector<24x32xf32>
    %6 = arith.addf %4, %5 : vector<24x32xf32>
    %7 = vector.extract_strided_slice %6 {offsets = [0, 0], sizes = [8, 32], strides = [1, 1]} : vector<24x32xf32> to vector<8x32xf32>
    %8 = vector.extract_strided_slice %6 {offsets = [8, 0], sizes = [8, 32], strides = [1, 1]} : vector<24x32xf32> to vector<8x32xf32>
    %9 = vector.extract_strided_slice %6 {offsets = [16, 0], sizes = [8, 32], strides = [1, 1]} : vector<24x32xf32> to vector<8x32xf32>
    %10 = arith.truncf %7 : vector<8x32xf32> to vector<8x32xbf16>
    %c0_6 = arith.constant 0 : index
    %c0_7 = arith.constant 0 : index
    %11 = vector.load %arg4[%c0_6, %c0_7] : memref<32x32xbf16, #tpu.memory_space<vmem>>, vector<32x32xbf16>
    %cst_8 = arith.constant dense<0.000000e+00> : vector<8x32xf32>
    %12 = tpu.matmul %10, %11, %cst_8 {dimension_numbers = #tpu.dot_dimension_numbers<[1], [0], [0], [1], [0, 0, 1, 1], [], []>} : vector<8x32xbf16>, vector<32x32xbf16>, vector<8x32xf32> -> vector<8x32xf32>
    %c0_9 = arith.constant 0 : index
    %c0_10 = arith.constant 0 : index
    %13 = vector.load %arg5[%c0_9, %c0_10] : memref<1x32xf32, #tpu.memory_space<vmem>>, vector<1x32xf32>
    %14 = vector.broadcast %13 : vector<1x32xf32> to vector<8x32xf32>
    %15 = arith.addf %12, %14 : vector<8x32xf32>
    %cst_11 = arith.constant 0.353553385 : f32
    %16 = vector.broadcast %cst_11 : f32 to vector<8x32xf32>
    %17 = arith.mulf %15, %16 : vector<8x32xf32>
    %18 = arith.truncf %8 : vector<8x32xf32> to vector<8x32xbf16>
    %c0_12 = arith.constant 0 : index
    %c0_13 = arith.constant 0 : index
    %19 = vector.load %arg6[%c0_12, %c0_13] : memref<32x32xbf16, #tpu.memory_space<vmem>>, vector<32x32xbf16>
    %cst_14 = arith.constant dense<0.000000e+00> : vector<8x32xf32>
    %20 = tpu.matmul %18, %19, %cst_14 {dimension_numbers = #tpu.dot_dimension_numbers<[1], [0], [0], [1], [0, 0, 1, 1], [], []>} : vector<8x32xbf16>, vector<32x32xbf16>, vector<8x32xf32> -> vector<8x32xf32>
    %c0_15 = arith.constant 0 : index
    %c0_16 = arith.constant 0 : index
    %21 = vector.load %arg7[%c0_15, %c0_16] : memref<1x32xf32, #tpu.memory_space<vmem>>, vector<1x32xf32>
    %22 = vector.broadcast %21 : vector<1x32xf32> to vector<8x32xf32>
    %23 = arith.addf %20, %22 : vector<8x32xf32>
    %24 = arith.truncf %9 : vector<8x32xf32> to vector<8x32xbf16>
    %c0_17 = arith.constant 0 : index
    %c0_18 = arith.constant 0 : index
    %25 = vector.load %arg8[%c0_17, %c0_18] : memref<32x32xbf16, #tpu.memory_space<vmem>>, vector<32x32xbf16>
    %cst_19 = arith.constant dense<0.000000e+00> : vector<8x32xf32>
    %26 = tpu.matmul %24, %25, %cst_19 {dimension_numbers = #tpu.dot_dimension_numbers<[1], [0], [0], [1], [0, 0, 1, 1], [], []>} : vector<8x32xbf16>, vector<32x32xbf16>, vector<8x32xf32> -> vector<8x32xf32>
    %c0_20 = arith.constant 0 : index
    %c0_21 = arith.constant 0 : index
    %27 = vector.load %arg9[%c0_20, %c0_21] : memref<1x32xf32, #tpu.memory_space<vmem>>, vector<1x32xf32>
    %28 = vector.broadcast %27 : vector<1x32xf32> to vector<8x32xf32>
    %29 = arith.addf %26, %28 : vector<8x32xf32>
    %30 = vector.extract_strided_slice %17 {offsets = [0, 0], sizes = [8, 8], strides = [1, 1]} : vector<8x32xf32> to vector<8x8xf32>
    %31 = arith.truncf %30 : vector<8x8xf32> to vector<8x8xbf16>
    %32 = vector.extract_strided_slice %23 {offsets = [0, 0], sizes = [8, 8], strides = [1, 1]} : vector<8x32xf32> to vector<8x8xf32>
    %33 = arith.truncf %32 : vector<8x8xf32> to vector<8x8xbf16>
    %34 = vector.extract_strided_slice %29 {offsets = [0, 0], sizes = [8, 8], strides = [1, 1]} : vector<8x32xf32> to vector<8x8xf32>
    %35 = arith.truncf %34 : vector<8x8xf32> to vector<8x8xbf16>
    %cst_22 = arith.constant dense<0.000000e+00> : vector<8x8xf32>
    %36 = tpu.matmul %31, %33, %cst_22 {dimension_numbers = #tpu.dot_dimension_numbers<[1], [1], [0], [0], [0, 0, 1, 0], [], []>} : vector<8x8xbf16>, vector<8x8xbf16>, vector<8x8xf32> -> vector<8x8xf32>
    %cst_23 = arith.constant dense<0xFF800000> : vector<8xf32>
    %37 = vector.multi_reduction <maximumf>, %36, %cst_23 [1] : vector<8x8xf32> to vector<8xf32>
    %38 = vector.shape_cast %37 : vector<8xf32> to vector<8x1xf32>
    %39 = vector.broadcast %38 : vector<8x1xf32> to vector<8x8xf32>
    %40 = arith.subf %36, %39 : vector<8x8xf32>
    %41 = math.exp %40 : vector<8x8xf32>
    %cst_24 = arith.constant dense<0.000000e+00> : vector<8xf32>
    %42 = vector.multi_reduction <add>, %41, %cst_24 [1] : vector<8x8xf32> to vector<8xf32>
    %43 = vector.shape_cast %42 : vector<8xf32> to vector<8x1xf32>
    %44 = tpu.reciprocal %43 {approx = true} : vector<8x1xf32> -> vector<8x1xf32>
    %45 = vector.broadcast %44 : vector<8x1xf32> to vector<8x8xf32>
    %46 = arith.mulf %41, %45 : vector<8x8xf32>
    %47 = arith.truncf %46 : vector<8x8xf32> to vector<8x8xbf16>
    %cst_25 = arith.constant dense<0.000000e+00> : vector<8x8xf32>
    %48 = tpu.matmul %47, %35, %cst_25 {dimension_numbers = #tpu.dot_dimension_numbers<[1], [0], [0], [1], [0, 0, 1, 1], [], []>} : vector<8x8xbf16>, vector<8x8xbf16>, vector<8x8xf32> -> vector<8x8xf32>
    %c0_26 = arith.constant 0 : index
    %c0_27 = arith.constant 0 : index
    %49 = vector.load %arg19[%c0_26, %c0_27] : memref<8x32xf32, #tpu.memory_space<vmem>>, vector<8x8xf32>
    tpu.vector_store %arg19[%c0_26, %c0_27], %48 {strides = array<i32>} : memref<8x32xf32, #tpu.memory_space<vmem>>, vector<8x8xf32>,
    %50 = vector.extract_strided_slice %17 {offsets = [0, 8], sizes = [8, 8], strides = [1, 1]} : vector<8x32xf32> to vector<8x8xf32>
    %51 = arith.truncf %50 : vector<8x8xf32> to vector<8x8xbf16>
    %52 = vector.extract_strided_slice %23 {offsets = [0, 8], sizes = [8, 8], strides = [1, 1]} : vector<8x32xf32> to vector<8x8xf32>
    %53 = arith.truncf %52 : vector<8x8xf32> to vector<8x8xbf16>
    %54 = vector.extract_strided_slice %29 {offsets = [0, 8], sizes = [8, 8], strides = [1, 1]} : vector<8x32xf32> to vector<8x8xf32>
    %55 = arith.truncf %54 : vector<8x8xf32> to vector<8x8xbf16>
    %cst_28 = arith.constant dense<0.000000e+00> : vector<8x8xf32>
    %56 = tpu.matmul %51, %53, %cst_28 {dimension_numbers = #tpu.dot_dimension_numbers<[1], [1], [0], [0], [0, 0, 1, 0], [], []>} : vector<8x8xbf16>, vector<8x8xbf16>, vector<8x8xf32> -> vector<8x8xf32>
    %cst_29 = arith.constant dense<0xFF800000> : vector<8xf32>
    %57 = vector.multi_reduction <maximumf>, %56, %cst_29 [1] : vector<8x8xf32> to vector<8xf32>
    %58 = vector.shape_cast %57 : vector<8xf32> to vector<8x1xf32>
    %59 = vector.broadcast %58 : vector<8x1xf32> to vector<8x8xf32>
    %60 = arith.subf %56, %59 : vector<8x8xf32>
    %61 = math.exp %60 : vector<8x8xf32>
    %cst_30 = arith.constant dense<0.000000e+00> : vector<8xf32>
    %62 = vector.multi_reduction <add>, %61, %cst_30 [1] : vector<8x8xf32> to vector<8xf32>
    %63 = vector.shape_cast %62 : vector<8xf32> to vector<8x1xf32>
    %64 = tpu.reciprocal %63 {approx = true} : vector<8x1xf32> -> vector<8x1xf32>
    %65 = vector.broadcast %64 : vector<8x1xf32> to vector<8x8xf32>
    %66 = arith.mulf %61, %65 : vector<8x8xf32>
    %67 = arith.truncf %66 : vector<8x8xf32> to vector<8x8xbf16>
    %cst_31 = arith.constant dense<0.000000e+00> : vector<8x8xf32>
    %68 = tpu.matmul %67, %55, %cst_31 {dimension_numbers = #tpu.dot_dimension_numbers<[1], [0], [0], [1], [0, 0, 1, 1], [], []>} : vector<8x8xbf16>, vector<8x8xbf16>, vector<8x8xf32> -> vector<8x8xf32>
    %c0_32 = arith.constant 0 : index
    %c8 = arith.constant 8 : index
    %69 = vector.load %arg19[%c0_32, %c8] : memref<8x32xf32, #tpu.memory_space<vmem>>, vector<8x8xf32>
    tpu.vector_store %arg19[%c0_32, %c8], %68 {strides = array<i32>} : memref<8x32xf32, #tpu.memory_space<vmem>>, vector<8x8xf32>,
    %70 = vector.extract_strided_slice %17 {offsets = [0, 16], sizes = [8, 8], strides = [1, 1]} : vector<8x32xf32> to vector<8x8xf32>
    %71 = arith.truncf %70 : vector<8x8xf32> to vector<8x8xbf16>
    %72 = vector.extract_strided_slice %23 {offsets = [0, 16], sizes = [8, 8], strides = [1, 1]} : vector<8x32xf32> to vector<8x8xf32>
    %73 = arith.truncf %72 : vector<8x8xf32> to vector<8x8xbf16>
    %74 = vector.extract_strided_slice %29 {offsets = [0, 16], sizes = [8, 8], strides = [1, 1]} : vector<8x32xf32> to vector<8x8xf32>
    %75 = arith.truncf %74 : vector<8x8xf32> to vector<8x8xbf16>
    %cst_33 = arith.constant dense<0.000000e+00> : vector<8x8xf32>
    %76 = tpu.matmul %71, %73, %cst_33 {dimension_numbers = #tpu.dot_dimension_numbers<[1], [1], [0], [0], [0, 0, 1, 0], [], []>} : vector<8x8xbf16>, vector<8x8xbf16>, vector<8x8xf32> -> vector<8x8xf32>
    %cst_34 = arith.constant dense<0xFF800000> : vector<8xf32>
    %77 = vector.multi_reduction <maximumf>, %76, %cst_34 [1] : vector<8x8xf32> to vector<8xf32>
    %78 = vector.shape_cast %77 : vector<8xf32> to vector<8x1xf32>
    %79 = vector.broadcast %78 : vector<8x1xf32> to vector<8x8xf32>
    %80 = arith.subf %76, %79 : vector<8x8xf32>
    %81 = math.exp %80 : vector<8x8xf32>
    %cst_35 = arith.constant dense<0.000000e+00> : vector<8xf32>
    %82 = vector.multi_reduction <add>, %81, %cst_35 [1] : vector<8x8xf32> to vector<8xf32>
    %83 = vector.shape_cast %82 : vector<8xf32> to vector<8x1xf32>
    %84 = tpu.reciprocal %83 {approx = true} : vector<8x1xf32> -> vector<8x1xf32>
    %85 = vector.broadcast %84 : vector<8x1xf32> to vector<8x8xf32>
    %86 = arith.mulf %81, %85 : vector<8x8xf32>
    %87 = arith.truncf %86 : vector<8x8xf32> to vector<8x8xbf16>
    %cst_36 = arith.constant dense<0.000000e+00> : vector<8x8xf32>
    %88 = tpu.matmul %87, %75, %cst_36 {dimension_numbers = #tpu.dot_dimension_numbers<[1], [0], [0], [1], [0, 0, 1, 1], [], []>} : vector<8x8xbf16>, vector<8x8xbf16>, vector<8x8xf32> -> vector<8x8xf32>
    %c0_37 = arith.constant 0 : index
    %c16 = arith.constant 16 : index
    %89 = vector.load %arg19[%c0_37, %c16] : memref<8x32xf32, #tpu.memory_space<vmem>>, vector<8x8xf32>
    tpu.vector_store %arg19[%c0_37, %c16], %88 {strides = array<i32>} : memref<8x32xf32, #tpu.memory_space<vmem>>, vector<8x8xf32>,
    %90 = vector.extract_strided_slice %17 {offsets = [0, 24], sizes = [8, 8], strides = [1, 1]} : vector<8x32xf32> to vector<8x8xf32>
    %91 = arith.truncf %90 : vector<8x8xf32> to vector<8x8xbf16>
    %92 = vector.extract_strided_slice %23 {offsets = [0, 24], sizes = [8, 8], strides = [1, 1]} : vector<8x32xf32> to vector<8x8xf32>
    %93 = arith.truncf %92 : vector<8x8xf32> to vector<8x8xbf16>
    %94 = vector.extract_strided_slice %29 {offsets = [0, 24], sizes = [8, 8], strides = [1, 1]} : vector<8x32xf32> to vector<8x8xf32>
    %95 = arith.truncf %94 : vector<8x8xf32> to vector<8x8xbf16>
    %cst_38 = arith.constant dense<0.000000e+00> : vector<8x8xf32>
    %96 = tpu.matmul %91, %93, %cst_38 {dimension_numbers = #tpu.dot_dimension_numbers<[1], [1], [0], [0], [0, 0, 1, 0], [], []>} : vector<8x8xbf16>, vector<8x8xbf16>, vector<8x8xf32> -> vector<8x8xf32>
    %cst_39 = arith.constant dense<0xFF800000> : vector<8xf32>
    %97 = vector.multi_reduction <maximumf>, %96, %cst_39 [1] : vector<8x8xf32> to vector<8xf32>
    %98 = vector.shape_cast %97 : vector<8xf32> to vector<8x1xf32>
    %99 = vector.broadcast %98 : vector<8x1xf32> to vector<8x8xf32>
    %100 = arith.subf %96, %99 : vector<8x8xf32>
    %101 = math.exp %100 : vector<8x8xf32>
    %cst_40 = arith.constant dense<0.000000e+00> : vector<8xf32>
    %102 = vector.multi_reduction <add>, %101, %cst_40 [1] : vector<8x8xf32> to vector<8xf32>
    %103 = vector.shape_cast %102 : vector<8xf32> to vector<8x1xf32>
    %104 = tpu.reciprocal %103 {approx = true} : vector<8x1xf32> -> vector<8x1xf32>
    %105 = vector.broadcast %104 : vector<8x1xf32> to vector<8x8xf32>
    %106 = arith.mulf %101, %105 : vector<8x8xf32>
    %107 = arith.truncf %106 : vector<8x8xf32> to vector<8x8xbf16>
    %cst_41 = arith.constant dense<0.000000e+00> : vector<8x8xf32>
    %108 = tpu.matmul %107, %95, %cst_41 {dimension_numbers = #tpu.dot_dimension_numbers<[1], [0], [0], [1], [0, 0, 1, 1], [], []>} : vector<8x8xbf16>, vector<8x8xbf16>, vector<8x8xf32> -> vector<8x8xf32>
    %c0_42 = arith.constant 0 : index
    %c24 = arith.constant 24 : index
    %109 = vector.load %arg19[%c0_42, %c24] : memref<8x32xf32, #tpu.memory_space<vmem>>, vector<8x8xf32>
    tpu.vector_store %arg19[%c0_42, %c24], %108 {strides = array<i32>} : memref<8x32xf32, #tpu.memory_space<vmem>>, vector<8x8xf32>,
    %c0_43 = arith.constant 0 : index
    %c0_44 = arith.constant 0 : index
    %110 = vector.load %arg19[%c0_43, %c0_44] : memref<8x32xf32, #tpu.memory_space<vmem>>, vector<8x32xf32>
    %111 = arith.truncf %110 : vector<8x32xf32> to vector<8x32xbf16>
    %c0_45 = arith.constant 0 : index
    %c0_46 = arith.constant 0 : index
    %112 = vector.load %arg10[%c0_45, %c0_46] : memref<32x32xbf16, #tpu.memory_space<vmem>>, vector<32x32xbf16>
    %cst_47 = arith.constant dense<0.000000e+00> : vector<8x32xf32>
    %113 = tpu.matmul %111, %112, %cst_47 {dimension_numbers = #tpu.dot_dimension_numbers<[1], [0], [0], [1], [0, 0, 1, 1], [], []>} : vector<8x32xbf16>, vector<32x32xbf16>, vector<8x32xf32> -> vector<8x32xf32>
    %c0_48 = arith.constant 0 : index
    %c0_49 = arith.constant 0 : index
    %114 = vector.load %arg11[%c0_48, %c0_49] : memref<1x32xf32, #tpu.memory_space<vmem>>, vector<1x32xf32>
    %115 = vector.broadcast %114 : vector<1x32xf32> to vector<8x32xf32>
    %116 = arith.addf %113, %115 : vector<8x32xf32>
    %117 = arith.addf %7, %116 : vector<8x32xf32>
    %118 = arith.truncf %117 : vector<8x32xf32> to vector<8x32xbf16>
    %c0_50 = arith.constant 0 : index
    %c0_51 = arith.constant 0 : index
    %119 = vector.load %arg12[%c0_50, %c0_51] : memref<32x128xbf16, #tpu.memory_space<vmem>>, vector<32x128xbf16>
    %cst_52 = arith.constant dense<0.000000e+00> : vector<8x128xf32>
    %120 = tpu.matmul %118, %119, %cst_52 {dimension_numbers = #tpu.dot_dimension_numbers<[1], [0], [0], [1], [0, 0, 1, 1], [], []>} : vector<8x32xbf16>, vector<32x128xbf16>, vector<8x128xf32> -> vector<8x128xf32>
    %c0_53 = arith.constant 0 : index
    %c0_54 = arith.constant 0 : index
    %121 = vector.load %arg13[%c0_53, %c0_54] : memref<1x128xf32, #tpu.memory_space<vmem>>, vector<1x128xf32>
    %122 = vector.broadcast %121 : vector<1x128xf32> to vector<8x128xf32>
    %123 = arith.addf %120, %122 : vector<8x128xf32>
    %cst_55 = arith.constant 0.000000e+00 : f32
    %124 = vector.broadcast %cst_55 : f32 to vector<8x128xf32>
    %125 = arith.maximumf %123, %124 : vector<8x128xf32>
    %126 = arith.truncf %125 : vector<8x128xf32> to vector<8x128xbf16>
    %c0_56 = arith.constant 0 : index
    %c0_57 = arith.constant 0 : index
    %127 = vector.load %arg14[%c0_56, %c0_57] : memref<128x32xbf16, #tpu.memory_space<vmem>>, vector<128x32xbf16>
    %cst_58 = arith.constant dense<0.000000e+00> : vector<8x32xf32>
    %128 = tpu.matmul %126, %127, %cst_58 {dimension_numbers = #tpu.dot_dimension_numbers<[1], [0], [0], [1], [0, 0, 1, 1], [], []>} : vector<8x128xbf16>, vector<128x32xbf16>, vector<8x32xf32> -> vector<8x32xf32>
    %c0_59 = arith.constant 0 : index
    %c0_60 = arith.constant 0 : index
    %129 = vector.load %arg15[%c0_59, %c0_60] : memref<1x32xf32, #tpu.memory_space<vmem>>, vector<1x32xf32>
    %130 = vector.broadcast %129 : vector<1x32xf32> to vector<8x32xf32>
    %131 = arith.addf %128, %130 : vector<8x32xf32>
    %132 = arith.addf %117, %131 : vector<8x32xf32>
    %133 = arith.truncf %132 : vector<8x32xf32> to vector<8x32xbf16>
    %c0_61 = arith.constant 0 : index
    %c0_62 = arith.constant 0 : index
    %134 = vector.load %arg16[%c0_61, %c0_62] : memref<32x128xbf16, #tpu.memory_space<vmem>>, vector<32x128xbf16>
    %cst_63 = arith.constant dense<0.000000e+00> : vector<8x128xf32>
    %135 = tpu.matmul %133, %134, %cst_63 {dimension_numbers = #tpu.dot_dimension_numbers<[1], [0], [0], [1], [0, 0, 1, 1], [], []>} : vector<8x32xbf16>, vector<32x128xbf16>, vector<8x128xf32> -> vector<8x128xf32>
    %c0_64 = arith.constant 0 : index
    %c0_65 = arith.constant 0 : index
    %136 = vector.load %arg17[%c0_64, %c0_65] : memref<1x128xf32, #tpu.memory_space<vmem>>, vector<1x128xf32>
    %137 = vector.broadcast %136 : vector<1x128xf32> to vector<8x128xf32>
    %138 = arith.addf %135, %137 : vector<8x128xf32>
    %c0_66 = arith.constant 0 : index
    %c0_67 = arith.constant 0 : index
    %c0_68 = arith.constant 0 : index
    %139 = vector.load %arg18[%c0_66, %c0_67, %c0_68] : memref<1x8x128xf32, #tpu.memory_space<vmem>>, vector<1x8x128xf32>
    %140 = vector.shape_cast %139 : vector<1x8x128xf32> to vector<8x128xf32>
    %141 = vector.shape_cast %138 : vector<8x128xf32> to vector<1x8x128xf32>
    tpu.vector_store %arg18[%c0_66, %c0_67, %c0_68], %141 {strides = array<i32>} : memref<1x8x128xf32, #tpu.memory_space<vmem>>, vector<1x8x128xf32>,
    return
  }
  func.func @transform_0(%arg0: i32) -> (i32, i32, i32) {
    %c0_i32 = arith.constant 0 : i32
    %c0_i32_0 = arith.constant 0 : i32
    %c0_i32_1 = arith.constant 0 : i32
    return %arg0, %c0_i32, %c0_i32_0 : i32, i32, i32
  }
  func.func @transform_1(%arg0: i32) -> (i32, i32) {
    %c0_i32 = arith.constant 0 : i32
    %c0_i32_0 = arith.constant 0 : i32
    %c0_i32_1 = arith.constant 0 : i32
    return %c0_i32, %c0_i32_0 : i32, i32
  }
  func.func @transform_2(%arg0: i32) -> (i32, i32) {
    %c0_i32 = arith.constant 0 : i32
    %c0_i32_0 = arith.constant 0 : i32
    %c0_i32_1 = arith.constant 0 : i32
    return %c0_i32, %c0_i32_0 : i32, i32
  }
  func.func @transform_3(%arg0: i32) -> (i32, i32) {
    %c0_i32 = arith.constant 0 : i32
    %c0_i32_0 = arith.constant 0 : i32
    %c0_i32_1 = arith.constant 0 : i32
    return %c0_i32, %c0_i32_0 : i32, i32
  }
  func.func @transform_4(%arg0: i32) -> (i32, i32) {
    %c0_i32 = arith.constant 0 : i32
    %c0_i32_0 = arith.constant 0 : i32
    %c0_i32_1 = arith.constant 0 : i32
    return %c0_i32, %c0_i32_0 : i32, i32
  }
  func.func @transform_5(%arg0: i32) -> (i32, i32) {
    %c0_i32 = arith.constant 0 : i32
    %c0_i32_0 = arith.constant 0 : i32
    %c0_i32_1 = arith.constant 0 : i32
    return %c0_i32, %c0_i32_0 : i32, i32
  }
  func.func @transform_6(%arg0: i32) -> (i32, i32) {
    %c0_i32 = arith.constant 0 : i32
    %c0_i32_0 = arith.constant 0 : i32
    %c0_i32_1 = arith.constant 0 : i32
    return %c0_i32, %c0_i32_0 : i32, i32
  }
  func.func @transform_7(%arg0: i32) -> (i32, i32) {
    %c0_i32 = arith.constant 0 : i32
    %c0_i32_0 = arith.constant 0 : i32
    %c0_i32_1 = arith.constant 0 : i32
    return %c0_i32, %c0_i32_0 : i32, i32
  }
  func.func @transform_8(%arg0: i32) -> (i32, i32) {
    %c0_i32 = arith.constant 0 : i32
    %c0_i32_0 = arith.constant 0 : i32
    %c0_i32_1 = arith.constant 0 : i32
    return %c0_i32, %c0_i32_0 : i32, i32
  }
  func.func @transform_9(%arg0: i32) -> (i32, i32) {
    %c0_i32 = arith.constant 0 : i32
    %c0_i32_0 = arith.constant 0 : i32
    %c0_i32_1 = arith.constant 0 : i32
    return %c0_i32, %c0_i32_0 : i32, i32
  }
  func.func @transform_10(%arg0: i32) -> (i32, i32) {
    %c0_i32 = arith.constant 0 : i32
    %c0_i32_0 = arith.constant 0 : i32
    %c0_i32_1 = arith.constant 0 : i32
    return %c0_i32, %c0_i32_0 : i32, i32
  }
  func.func @transform_11(%arg0: i32) -> (i32, i32) {
    %c0_i32 = arith.constant 0 : i32
    %c0_i32_0 = arith.constant 0 : i32
    %c0_i32_1 = arith.constant 0 : i32
    return %c0_i32, %c0_i32_0 : i32, i32
  }
  func.func @transform_12(%arg0: i32) -> (i32, i32) {
    %c0_i32 = arith.constant 0 : i32
    %c0_i32_0 = arith.constant 0 : i32
    %c0_i32_1 = arith.constant 0 : i32
    return %c0_i32, %c0_i32_0 : i32, i32
  }
  func.func @transform_13(%arg0: i32) -> (i32, i32) {
    %c0_i32 = arith.constant 0 : i32
    %c0_i32_0 = arith.constant 0 : i32
    %c0_i32_1 = arith.constant 0 : i32
    return %c0_i32, %c0_i32_0 : i32, i32
  }
  func.func @transform_14(%arg0: i32) -> (i32, i32) {
    %c0_i32 = arith.constant 0 : i32
    %c0_i32_0 = arith.constant 0 : i32
    %c0_i32_1 = arith.constant 0 : i32
    return %c0_i32, %c0_i32_0 : i32, i32
  }
  func.func @transform_15(%arg0: i32) -> (i32, i32) {
    %c0_i32 = arith.constant 0 : i32
    %c0_i32_0 = arith.constant 0 : i32
    %c0_i32_1 = arith.constant 0 : i32
    return %c0_i32, %c0_i32_0 : i32, i32
  }
  func.func @transform_16(%arg0: i32) -> (i32, i32) {
    %c0_i32 = arith.constant 0 : i32
    %c0_i32_0 = arith.constant 0 : i32
    %c0_i32_1 = arith.constant 0 : i32
    return %c0_i32, %c0_i32_0 : i32, i32
  }
  func.func @transform_17(%arg0: i32) -> (i32, i32, i32) {
    %c0_i32 = arith.constant 0 : i32
    %c0_i32_0 = arith.constant 0 : i32
    %c0_i32_1 = arith.constant 0 : i32
    return %arg0, %c0_i32, %c0_i32_0 : i32, i32, i32
  }
}

module attributes {stable_mosaic.version = 11 : i64} {
  func.func @fused_encoder_kernel(%arg0: i32, %arg1: memref<1x24x16xf32, #tpu.memory_space<vmem>>, %arg2: memref<16x32xbf16, #tpu.memory_space<vmem>>, %arg3: memref<24x32xf32, #tpu.memory_space<vmem>>, %arg4: memref<32x32xbf16, #tpu.memory_space<vmem>>, %arg5: memref<1x32xf32, #tpu.memory_space<vmem>>, %arg6: memref<32x32xbf16, #tpu.memory_space<vmem>>, %arg7: memref<1x32xf32, #tpu.memory_space<vmem>>, %arg8: memref<32x32xbf16, #tpu.memory_space<vmem>>, %arg9: memref<1x32xf32, #tpu.memory_space<vmem>>, %arg10: memref<32x32xbf16, #tpu.memory_space<vmem>>, %arg11: memref<1x32xf32, #tpu.memory_space<vmem>>, %arg12: memref<32x128xbf16, #tpu.memory_space<vmem>>, %arg13: memref<1x128xf32, #tpu.memory_space<vmem>>, %arg14: memref<128x32xbf16, #tpu.memory_space<vmem>>, %arg15: memref<1x32xf32, #tpu.memory_space<vmem>>, %arg16: memref<32x128xbf16, #tpu.memory_space<vmem>>, %arg17: memref<1x128xf32, #tpu.memory_space<vmem>>, %arg18: memref<1x8x128xf32, #tpu.memory_space<vmem>>, %arg19: memref<8x32xf32, #tpu.memory_space<vmem>>) attributes {dimension_semantics = [#tpu.dimension_semantics<parallel>], iteration_bounds = array<i64: 2>, scalar_prefetch = 0 : i64, scratch_operands = 1 : i64, tpu.core_type = #tpu.core_type<tc>, window_params = [{transform_indices = @transform_0, window_bounds = array<i64: 1, 24, 16>}, {pipeline_mode = #tpu.pipeline_mode<synchronous>, transform_indices = @transform_1, window_bounds = array<i64: 16, 32>}, {pipeline_mode = #tpu.pipeline_mode<synchronous>, transform_indices = @transform_2, window_bounds = array<i64: 24, 32>}, {pipeline_mode = #tpu.pipeline_mode<synchronous>, transform_indices = @transform_3, window_bounds = array<i64: 32, 32>}, {pipeline_mode = #tpu.pipeline_mode<synchronous>, transform_indices = @transform_4, window_bounds = array<i64: 1, 32>}, {pipeline_mode = #tpu.pipeline_mode<synchronous>, transform_indices = @transform_5, window_bounds = array<i64: 32, 32>}, {pipeline_mode = #tpu.pipeline_mode<synchronous>, transform_indices = @transform_6, window_bounds = array<i64: 1, 32>}, {pipeline_mode = #tpu.pipeline_mode<synchronous>, transform_indices = @transform_7, window_bounds = array<i64: 32, 32>}, {pipeline_mode = #tpu.pipeline_mode<synchronous>, transform_indices = @transform_8, window_bounds = array<i64: 1, 32>}, {pipeline_mode = #tpu.pipeline_mode<synchronous>, transform_indices = @transform_9, window_bounds = array<i64: 32, 32>}, {pipeline_mode = #tpu.pipeline_mode<synchronous>, transform_indices = @transform_10, window_bounds = array<i64: 1, 32>}, {pipeline_mode = #tpu.pipeline_mode<synchronous>, transform_indices = @transform_11, window_bounds = array<i64: 32, 128>}, {pipeline_mode = #tpu.pipeline_mode<synchronous>, transform_indices = @transform_12, window_bounds = array<i64: 1, 128>}, {pipeline_mode = #tpu.pipeline_mode<synchronous>, transform_indices = @transform_13, window_bounds = array<i64: 128, 32>}, {pipeline_mode = #tpu.pipeline_mode<synchronous>, transform_indices = @transform_14, window_bounds = array<i64: 1, 32>}, {pipeline_mode = #tpu.pipeline_mode<synchronous>, transform_indices = @transform_15, window_bounds = array<i64: 32, 128>}, {pipeline_mode = #tpu.pipeline_mode<synchronous>, transform_indices = @transform_16, window_bounds = array<i64: 1, 128>}, {transform_indices = @transform_17, window_bounds = array<i64: 1, 8, 128>}]} {
    %c0 = arith.constant 0 : index
    %c0_0 = arith.constant 0 : index
    %c0_1 = arith.constant 0 : index
    %0 = vector.load %arg1[%c0, %c0_0, %c0_1] : memref<1x24x16xf32, #tpu.memory_space<vmem>>, vector<1x24x16xf32>
    %1 = vector.shape_cast %0 : vector<1x24x16xf32> to vector<24x16xf32>
    %2 = arith.truncf %1 : vector<24x16xf32> to vector<24x16xbf16>
    %c0_2 = arith.constant 0 : index
    %c0_3 = arith.constant 0 : index
    %3 = vector.load %arg2[%c0_2, %c0_3] : memref<16x32xbf16, #tpu.memory_space<vmem>>, vector<16x32xbf16>
    %cst = arith.constant dense<0.000000e+00> : vector<24x32xf32>
    %4 = tpu.matmul %2, %3, %cst {dimension_numbers = #tpu.dot_dimension_numbers<[1], [0], [0], [1], [0, 0, 1, 1], [], []>} : vector<24x16xbf16>, vector<16x32xbf16>, vector<24x32xf32> -> vector<24x32xf32>
    %c0_4 = arith.constant 0 : index
    %c0_5 = arith.constant 0 : index
    %5 = vector.load %arg3[%c0_4, %c0_5] : memref<24x32xf32, #tpu.memory_space<vmem>>, vector<24x32xf32>
    %6 = arith.addf %4, %5 : vector<24x32xf32>
    %7 = vector.extract_strided_slice %6 {offsets = [0, 0], sizes = [8, 32], strides = [1, 1]} : vector<24x32xf32> to vector<8x32xf32>
    %8 = vector.extract_strided_slice %6 {offsets = [8, 0], sizes = [8, 32], strides = [1, 1]} : vector<24x32xf32> to vector<8x32xf32>
    %9 = vector.extract_strided_slice %6 {offsets = [16, 0], sizes = [8, 32], strides = [1, 1]} : vector<24x32xf32> to vector<8x32xf32>
    %10 = arith.truncf %7 : vector<8x32xf32> to vector<8x32xbf16>
    %c0_6 = arith.constant 0 : index
    %c0_7 = arith.constant 0 : index
    %11 = vector.load %arg4[%c0_6, %c0_7] : memref<32x32xbf16, #tpu.memory_space<vmem>>, vector<32x32xbf16>
    %cst_8 = arith.constant dense<0.000000e+00> : vector<8x32xf32>
    %12 = tpu.matmul %10, %11, %cst_8 {dimension_numbers = #tpu.dot_dimension_numbers<[1], [0], [0], [1], [0, 0, 1, 1], [], []>} : vector<8x32xbf16>, vector<32x32xbf16>, vector<8x32xf32> -> vector<8x32xf32>
    %c0_9 = arith.constant 0 : index
    %c0_10 = arith.constant 0 : index
    %13 = vector.load %arg5[%c0_9, %c0_10] : memref<1x32xf32, #tpu.memory_space<vmem>>, vector<1x32xf32>
    %14 = vector.broadcast %13 : vector<1x32xf32> to vector<8x32xf32>
    %15 = arith.addf %12, %14 : vector<8x32xf32>
    %cst_11 = arith.constant 0.353553385 : f32
    %16 = vector.broadcast %cst_11 : f32 to vector<8x32xf32>
    %17 = arith.mulf %15, %16 : vector<8x32xf32>
    %18 = arith.truncf %8 : vector<8x32xf32> to vector<8x32xbf16>
    %c0_12 = arith.constant 0 : index
    %c0_13 = arith.constant 0 : index
    %19 = vector.load %arg6[%c0_12, %c0_13] : memref<32x32xbf16, #tpu.memory_space<vmem>>, vector<32x32xbf16>
    %cst_14 = arith.constant dense<0.000000e+00> : vector<8x32xf32>
    %20 = tpu.matmul %18, %19, %cst_14 {dimension_numbers = #tpu.dot_dimension_numbers<[1], [0], [0], [1], [0, 0, 1, 1], [], []>} : vector<8x32xbf16>, vector<32x32xbf16>, vector<8x32xf32> -> vector<8x32xf32>
    %c0_15 = arith.constant 0 : index
    %c0_16 = arith.constant 0 : index
    %21 = vector.load %arg7[%c0_15, %c0_16] : memref<1x32xf32, #tpu.memory_space<vmem>>, vector<1x32xf32>
    %22 = vector.broadcast %21 : vector<1x32xf32> to vector<8x32xf32>
    %23 = arith.addf %20, %22 : vector<8x32xf32>
    %24 = arith.truncf %9 : vector<8x32xf32> to vector<8x32xbf16>
    %c0_17 = arith.constant 0 : index
    %c0_18 = arith.constant 0 : index
    %25 = vector.load %arg8[%c0_17, %c0_18] : memref<32x32xbf16, #tpu.memory_space<vmem>>, vector<32x32xbf16>
    %cst_19 = arith.constant dense<0.000000e+00> : vector<8x32xf32>
    %26 = tpu.matmul %24, %25, %cst_19 {dimension_numbers = #tpu.dot_dimension_numbers<[1], [0], [0], [1], [0, 0, 1, 1], [], []>} : vector<8x32xbf16>, vector<32x32xbf16>, vector<8x32xf32> -> vector<8x32xf32>
    %c0_20 = arith.constant 0 : index
    %c0_21 = arith.constant 0 : index
    %27 = vector.load %arg9[%c0_20, %c0_21] : memref<1x32xf32, #tpu.memory_space<vmem>>, vector<1x32xf32>
    %28 = vector.broadcast %27 : vector<1x32xf32> to vector<8x32xf32>
    %29 = arith.addf %26, %28 : vector<8x32xf32>
    %30 = vector.extract_strided_slice %17 {offsets = [0, 0], sizes = [8, 8], strides = [1, 1]} : vector<8x32xf32> to vector<8x8xf32>
    %31 = arith.truncf %30 : vector<8x8xf32> to vector<8x8xbf16>
    %32 = vector.extract_strided_slice %23 {offsets = [0, 0], sizes = [8, 8], strides = [1, 1]} : vector<8x32xf32> to vector<8x8xf32>
    %33 = arith.truncf %32 : vector<8x8xf32> to vector<8x8xbf16>
    %34 = vector.extract_strided_slice %29 {offsets = [0, 0], sizes = [8, 8], strides = [1, 1]} : vector<8x32xf32> to vector<8x8xf32>
    %35 = arith.truncf %34 : vector<8x8xf32> to vector<8x8xbf16>
    %cst_22 = arith.constant dense<0.000000e+00> : vector<8x8xf32>
    %36 = tpu.matmul %31, %33, %cst_22 {dimension_numbers = #tpu.dot_dimension_numbers<[1], [1], [0], [0], [0, 0, 1, 0], [], []>} : vector<8x8xbf16>, vector<8x8xbf16>, vector<8x8xf32> -> vector<8x8xf32>
    %cst_23 = arith.constant dense<0xFF800000> : vector<8xf32>
    %37 = vector.multi_reduction <maximumf>, %36, %cst_23 [1] : vector<8x8xf32> to vector<8xf32>
    %38 = vector.shape_cast %37 : vector<8xf32> to vector<8x1xf32>
    %39 = vector.broadcast %38 : vector<8x1xf32> to vector<8x8xf32>
    %40 = arith.subf %36, %39 : vector<8x8xf32>
    %41 = math.exp %40 : vector<8x8xf32>
    %cst_24 = arith.constant dense<0.000000e+00> : vector<8xf32>
    %42 = vector.multi_reduction <add>, %41, %cst_24 [1] : vector<8x8xf32> to vector<8xf32>
    %43 = vector.shape_cast %42 : vector<8xf32> to vector<8x1xf32>
    %44 = tpu.reciprocal %43 {approx = true} : vector<8x1xf32> -> vector<8x1xf32>
    %45 = vector.broadcast %44 : vector<8x1xf32> to vector<8x8xf32>
    %46 = arith.mulf %41, %45 : vector<8x8xf32>
    %47 = arith.truncf %46 : vector<8x8xf32> to vector<8x8xbf16>
    %cst_25 = arith.constant dense<0.000000e+00> : vector<8x8xf32>
    %48 = tpu.matmul %47, %35, %cst_25 {dimension_numbers = #tpu.dot_dimension_numbers<[1], [0], [0], [1], [0, 0, 1, 1], [], []>} : vector<8x8xbf16>, vector<8x8xbf16>, vector<8x8xf32> -> vector<8x8xf32>
    %c0_26 = arith.constant 0 : index
    %c0_27 = arith.constant 0 : index
    %49 = vector.load %arg19[%c0_26, %c0_27] : memref<8x32xf32, #tpu.memory_space<vmem>>, vector<8x8xf32>
    tpu.vector_store %arg19[%c0_26, %c0_27], %48 {strides = array<i32>} : memref<8x32xf32, #tpu.memory_space<vmem>>, vector<8x8xf32>,
    %50 = vector.extract_strided_slice %17 {offsets = [0, 8], sizes = [8, 8], strides = [1, 1]} : vector<8x32xf32> to vector<8x8xf32>
    %51 = arith.truncf %50 : vector<8x8xf32> to vector<8x8xbf16>
    %52 = vector.extract_strided_slice %23 {offsets = [0, 8], sizes = [8, 8], strides = [1, 1]} : vector<8x32xf32> to vector<8x8xf32>
    %53 = arith.truncf %52 : vector<8x8xf32> to vector<8x8xbf16>
    %54 = vector.extract_strided_slice %29 {offsets = [0, 8], sizes = [8, 8], strides = [1, 1]} : vector<8x32xf32> to vector<8x8xf32>
    %55 = arith.truncf %54 : vector<8x8xf32> to vector<8x8xbf16>
    %cst_28 = arith.constant dense<0.000000e+00> : vector<8x8xf32>
    %56 = tpu.matmul %51, %53, %cst_28 {dimension_numbers = #tpu.dot_dimension_numbers<[1], [1], [0], [0], [0, 0, 1, 0], [], []>} : vector<8x8xbf16>, vector<8x8xbf16>, vector<8x8xf32> -> vector<8x8xf32>
    %cst_29 = arith.constant dense<0xFF800000> : vector<8xf32>
    %57 = vector.multi_reduction <maximumf>, %56, %cst_29 [1] : vector<8x8xf32> to vector<8xf32>
    %58 = vector.shape_cast %57 : vector<8xf32> to vector<8x1xf32>
    %59 = vector.broadcast %58 : vector<8x1xf32> to vector<8x8xf32>
    %60 = arith.subf %56, %59 : vector<8x8xf32>
    %61 = math.exp %60 : vector<8x8xf32>
    %cst_30 = arith.constant dense<0.000000e+00> : vector<8xf32>
    %62 = vector.multi_reduction <add>, %61, %cst_30 [1] : vector<8x8xf32> to vector<8xf32>
    %63 = vector.shape_cast %62 : vector<8xf32> to vector<8x1xf32>
    %64 = tpu.reciprocal %63 {approx = true} : vector<8x1xf32> -> vector<8x1xf32>
    %65 = vector.broadcast %64 : vector<8x1xf32> to vector<8x8xf32>
    %66 = arith.mulf %61, %65 : vector<8x8xf32>
    %67 = arith.truncf %66 : vector<8x8xf32> to vector<8x8xbf16>
    %cst_31 = arith.constant dense<0.000000e+00> : vector<8x8xf32>
    %68 = tpu.matmul %67, %55, %cst_31 {dimension_numbers = #tpu.dot_dimension_numbers<[1], [0], [0], [1], [0, 0, 1, 1], [], []>} : vector<8x8xbf16>, vector<8x8xbf16>, vector<8x8xf32> -> vector<8x8xf32>
    %c0_32 = arith.constant 0 : index
    %c8 = arith.constant 8 : index
    %69 = vector.load %arg19[%c0_32, %c8] : memref<8x32xf32, #tpu.memory_space<vmem>>, vector<8x8xf32>
    tpu.vector_store %arg19[%c0_32, %c8], %68 {strides = array<i32>} : memref<8x32xf32, #tpu.memory_space<vmem>>, vector<8x8xf32>,
    %70 = vector.extract_strided_slice %17 {offsets = [0, 16], sizes = [8, 8], strides = [1, 1]} : vector<8x32xf32> to vector<8x8xf32>
    %71 = arith.truncf %70 : vector<8x8xf32> to vector<8x8xbf16>
    %72 = vector.extract_strided_slice %23 {offsets = [0, 16], sizes = [8, 8], strides = [1, 1]} : vector<8x32xf32> to vector<8x8xf32>
    %73 = arith.truncf %72 : vector<8x8xf32> to vector<8x8xbf16>
    %74 = vector.extract_strided_slice %29 {offsets = [0, 16], sizes = [8, 8], strides = [1, 1]} : vector<8x32xf32> to vector<8x8xf32>
    %75 = arith.truncf %74 : vector<8x8xf32> to vector<8x8xbf16>
    %cst_33 = arith.constant dense<0.000000e+00> : vector<8x8xf32>
    %76 = tpu.matmul %71, %73, %cst_33 {dimension_numbers = #tpu.dot_dimension_numbers<[1], [1], [0], [0], [0, 0, 1, 0], [], []>} : vector<8x8xbf16>, vector<8x8xbf16>, vector<8x8xf32> -> vector<8x8xf32>
    %cst_34 = arith.constant dense<0xFF800000> : vector<8xf32>
    %77 = vector.multi_reduction <maximumf>, %76, %cst_34 [1] : vector<8x8xf32> to vector<8xf32>
    %78 = vector.shape_cast %77 : vector<8xf32> to vector<8x1xf32>
    %79 = vector.broadcast %78 : vector<8x1xf32> to vector<8x8xf32>
    %80 = arith.subf %76, %79 : vector<8x8xf32>
    %81 = math.exp %80 : vector<8x8xf32>
    %cst_35 = arith.constant dense<0.000000e+00> : vector<8xf32>
    %82 = vector.multi_reduction <add>, %81, %cst_35 [1] : vector<8x8xf32> to vector<8xf32>
    %83 = vector.shape_cast %82 : vector<8xf32> to vector<8x1xf32>
    %84 = tpu.reciprocal %83 {approx = true} : vector<8x1xf32> -> vector<8x1xf32>
    %85 = vector.broadcast %84 : vector<8x1xf32> to vector<8x8xf32>
    %86 = arith.mulf %81, %85 : vector<8x8xf32>
    %87 = arith.truncf %86 : vector<8x8xf32> to vector<8x8xbf16>
    %cst_36 = arith.constant dense<0.000000e+00> : vector<8x8xf32>
    %88 = tpu.matmul %87, %75, %cst_36 {dimension_numbers = #tpu.dot_dimension_numbers<[1], [0], [0], [1], [0, 0, 1, 1], [], []>} : vector<8x8xbf16>, vector<8x8xbf16>, vector<8x8xf32> -> vector<8x8xf32>
    %c0_37 = arith.constant 0 : index
    %c16 = arith.constant 16 : index
    %89 = vector.load %arg19[%c0_37, %c16] : memref<8x32xf32, #tpu.memory_space<vmem>>, vector<8x8xf32>
    tpu.vector_store %arg19[%c0_37, %c16], %88 {strides = array<i32>} : memref<8x32xf32, #tpu.memory_space<vmem>>, vector<8x8xf32>,
    %90 = vector.extract_strided_slice %17 {offsets = [0, 24], sizes = [8, 8], strides = [1, 1]} : vector<8x32xf32> to vector<8x8xf32>
    %91 = arith.truncf %90 : vector<8x8xf32> to vector<8x8xbf16>
    %92 = vector.extract_strided_slice %23 {offsets = [0, 24], sizes = [8, 8], strides = [1, 1]} : vector<8x32xf32> to vector<8x8xf32>
    %93 = arith.truncf %92 : vector<8x8xf32> to vector<8x8xbf16>
    %94 = vector.extract_strided_slice %29 {offsets = [0, 24], sizes = [8, 8], strides = [1, 1]} : vector<8x32xf32> to vector<8x8xf32>
    %95 = arith.truncf %94 : vector<8x8xf32> to vector<8x8xbf16>
    %cst_38 = arith.constant dense<0.000000e+00> : vector<8x8xf32>
    %96 = tpu.matmul %91, %93, %cst_38 {dimension_numbers = #tpu.dot_dimension_numbers<[1], [1], [0], [0], [0, 0, 1, 0], [], []>} : vector<8x8xbf16>, vector<8x8xbf16>, vector<8x8xf32> -> vector<8x8xf32>
    %cst_39 = arith.constant dense<0xFF800000> : vector<8xf32>
    %97 = vector.multi_reduction <maximumf>, %96, %cst_39 [1] : vector<8x8xf32> to vector<8xf32>
    %98 = vector.shape_cast %97 : vector<8xf32> to vector<8x1xf32>
    %99 = vector.broadcast %98 : vector<8x1xf32> to vector<8x8xf32>
    %100 = arith.subf %96, %99 : vector<8x8xf32>
    %101 = math.exp %100 : vector<8x8xf32>
    %cst_40 = arith.constant dense<0.000000e+00> : vector<8xf32>
    %102 = vector.multi_reduction <add>, %101, %cst_40 [1] : vector<8x8xf32> to vector<8xf32>
    %103 = vector.shape_cast %102 : vector<8xf32> to vector<8x1xf32>
    %104 = tpu.reciprocal %103 {approx = true} : vector<8x1xf32> -> vector<8x1xf32>
    %105 = vector.broadcast %104 : vector<8x1xf32> to vector<8x8xf32>
    %106 = arith.mulf %101, %105 : vector<8x8xf32>
    %107 = arith.truncf %106 : vector<8x8xf32> to vector<8x8xbf16>
    %cst_41 = arith.constant dense<0.000000e+00> : vector<8x8xf32>
    %108 = tpu.matmul %107, %95, %cst_41 {dimension_numbers = #tpu.dot_dimension_numbers<[1], [0], [0], [1], [0, 0, 1, 1], [], []>} : vector<8x8xbf16>, vector<8x8xbf16>, vector<8x8xf32> -> vector<8x8xf32>
    %c0_42 = arith.constant 0 : index
    %c24 = arith.constant 24 : index
    %109 = vector.load %arg19[%c0_42, %c24] : memref<8x32xf32, #tpu.memory_space<vmem>>, vector<8x8xf32>
    tpu.vector_store %arg19[%c0_42, %c24], %108 {strides = array<i32>} : memref<8x32xf32, #tpu.memory_space<vmem>>, vector<8x8xf32>,
    %c0_43 = arith.constant 0 : index
    %c0_44 = arith.constant 0 : index
    %110 = vector.load %arg19[%c0_43, %c0_44] : memref<8x32xf32, #tpu.memory_space<vmem>>, vector<8x32xf32>
    %111 = arith.truncf %110 : vector<8x32xf32> to vector<8x32xbf16>
    %c0_45 = arith.constant 0 : index
    %c0_46 = arith.constant 0 : index
    %112 = vector.load %arg10[%c0_45, %c0_46] : memref<32x32xbf16, #tpu.memory_space<vmem>>, vector<32x32xbf16>
    %cst_47 = arith.constant dense<0.000000e+00> : vector<8x32xf32>
    %113 = tpu.matmul %111, %112, %cst_47 {dimension_numbers = #tpu.dot_dimension_numbers<[1], [0], [0], [1], [0, 0, 1, 1], [], []>} : vector<8x32xbf16>, vector<32x32xbf16>, vector<8x32xf32> -> vector<8x32xf32>
    %c0_48 = arith.constant 0 : index
    %c0_49 = arith.constant 0 : index
    %114 = vector.load %arg11[%c0_48, %c0_49] : memref<1x32xf32, #tpu.memory_space<vmem>>, vector<1x32xf32>
    %115 = vector.broadcast %114 : vector<1x32xf32> to vector<8x32xf32>
    %116 = arith.addf %113, %115 : vector<8x32xf32>
    %117 = arith.addf %7, %116 : vector<8x32xf32>
    %118 = arith.truncf %117 : vector<8x32xf32> to vector<8x32xbf16>
    %c0_50 = arith.constant 0 : index
    %c0_51 = arith.constant 0 : index
    %119 = vector.load %arg12[%c0_50, %c0_51] : memref<32x128xbf16, #tpu.memory_space<vmem>>, vector<32x128xbf16>
    %cst_52 = arith.constant dense<0.000000e+00> : vector<8x128xf32>
    %120 = tpu.matmul %118, %119, %cst_52 {dimension_numbers = #tpu.dot_dimension_numbers<[1], [0], [0], [1], [0, 0, 1, 1], [], []>} : vector<8x32xbf16>, vector<32x128xbf16>, vector<8x128xf32> -> vector<8x128xf32>
    %c0_53 = arith.constant 0 : index
    %c0_54 = arith.constant 0 : index
    %121 = vector.load %arg13[%c0_53, %c0_54] : memref<1x128xf32, #tpu.memory_space<vmem>>, vector<1x128xf32>
    %122 = vector.broadcast %121 : vector<1x128xf32> to vector<8x128xf32>
    %123 = arith.addf %120, %122 : vector<8x128xf32>
    %cst_55 = arith.constant 0.000000e+00 : f32
    %124 = vector.broadcast %cst_55 : f32 to vector<8x128xf32>
    %125 = arith.maximumf %123, %124 : vector<8x128xf32>
    %126 = arith.truncf %125 : vector<8x128xf32> to vector<8x128xbf16>
    %c0_56 = arith.constant 0 : index
    %c0_57 = arith.constant 0 : index
    %127 = vector.load %arg14[%c0_56, %c0_57] : memref<128x32xbf16, #tpu.memory_space<vmem>>, vector<128x32xbf16>
    %cst_58 = arith.constant dense<0.000000e+00> : vector<8x32xf32>
    %128 = tpu.matmul %126, %127, %cst_58 {dimension_numbers = #tpu.dot_dimension_numbers<[1], [0], [0], [1], [0, 0, 1, 1], [], []>} : vector<8x128xbf16>, vector<128x32xbf16>, vector<8x32xf32> -> vector<8x32xf32>
    %c0_59 = arith.constant 0 : index
    %c0_60 = arith.constant 0 : index
    %129 = vector.load %arg15[%c0_59, %c0_60] : memref<1x32xf32, #tpu.memory_space<vmem>>, vector<1x32xf32>
    %130 = vector.broadcast %129 : vector<1x32xf32> to vector<8x32xf32>
    %131 = arith.addf %128, %130 : vector<8x32xf32>
    %132 = arith.addf %117, %131 : vector<8x32xf32>
    %133 = arith.truncf %132 : vector<8x32xf32> to vector<8x32xbf16>
    %c0_61 = arith.constant 0 : index
    %c0_62 = arith.constant 0 : index
    %134 = vector.load %arg16[%c0_61, %c0_62] : memref<32x128xbf16, #tpu.memory_space<vmem>>, vector<32x128xbf16>
    %cst_63 = arith.constant dense<0.000000e+00> : vector<8x128xf32>
    %135 = tpu.matmul %133, %134, %cst_63 {dimension_numbers = #tpu.dot_dimension_numbers<[1], [0], [0], [1], [0, 0, 1, 1], [], []>} : vector<8x32xbf16>, vector<32x128xbf16>, vector<8x128xf32> -> vector<8x128xf32>
    %c0_64 = arith.constant 0 : index
    %c0_65 = arith.constant 0 : index
    %136 = vector.load %arg17[%c0_64, %c0_65] : memref<1x128xf32, #tpu.memory_space<vmem>>, vector<1x128xf32>
    %137 = vector.broadcast %136 : vector<1x128xf32> to vector<8x128xf32>
    %138 = arith.addf %135, %137 : vector<8x128xf32>
    %c0_66 = arith.constant 0 : index
    %c0_67 = arith.constant 0 : index
    %c0_68 = arith.constant 0 : index
    %139 = vector.load %arg18[%c0_66, %c0_67, %c0_68] : memref<1x8x128xf32, #tpu.memory_space<vmem>>, vector<1x8x128xf32>
    %140 = vector.shape_cast %139 : vector<1x8x128xf32> to vector<8x128xf32>
    %141 = vector.shape_cast %138 : vector<8x128xf32> to vector<1x8x128xf32>
    tpu.vector_store %arg18[%c0_66, %c0_67, %c0_68], %141 {strides = array<i32>} : memref<1x8x128xf32, #tpu.memory_space<vmem>>, vector<1x8x128xf32>,
    return
  }
  func.func @transform_0(%arg0: i32) -> (i32, i32, i32) {
    %c0_i32 = arith.constant 0 : i32
    %c0_i32_0 = arith.constant 0 : i32
    %c0_i32_1 = arith.constant 0 : i32
    return %arg0, %c0_i32, %c0_i32_0 : i32, i32, i32
  }
  func.func @transform_1(%arg0: i32) -> (i32, i32) {
    %c0_i32 = arith.constant 0 : i32
    %c0_i32_0 = arith.constant 0 : i32
    %c0_i32_1 = arith.constant 0 : i32
    return %c0_i32, %c0_i32_0 : i32, i32
  }
  func.func @transform_2(%arg0: i32) -> (i32, i32) {
    %c0_i32 = arith.constant 0 : i32
    %c0_i32_0 = arith.constant 0 : i32
    %c0_i32_1 = arith.constant 0 : i32
    return %c0_i32, %c0_i32_0 : i32, i32
  }
  func.func @transform_3(%arg0: i32) -> (i32, i32) {
    %c0_i32 = arith.constant 0 : i32
    %c0_i32_0 = arith.constant 0 : i32
    %c0_i32_1 = arith.constant 0 : i32
    return %c0_i32, %c0_i32_0 : i32, i32
  }
  func.func @transform_4(%arg0: i32) -> (i32, i32) {
    %c0_i32 = arith.constant 0 : i32
    %c0_i32_0 = arith.constant 0 : i32
    %c0_i32_1 = arith.constant 0 : i32
    return %c0_i32, %c0_i32_0 : i32, i32
  }
  func.func @transform_5(%arg0: i32) -> (i32, i32) {
    %c0_i32 = arith.constant 0 : i32
    %c0_i32_0 = arith.constant 0 : i32
    %c0_i32_1 = arith.constant 0 : i32
    return %c0_i32, %c0_i32_0 : i32, i32
  }
  func.func @transform_6(%arg0: i32) -> (i32, i32) {
    %c0_i32 = arith.constant 0 : i32
    %c0_i32_0 = arith.constant 0 : i32
    %c0_i32_1 = arith.constant 0 : i32
    return %c0_i32, %c0_i32_0 : i32, i32
  }
  func.func @transform_7(%arg0: i32) -> (i32, i32) {
    %c0_i32 = arith.constant 0 : i32
    %c0_i32_0 = arith.constant 0 : i32
    %c0_i32_1 = arith.constant 0 : i32
    return %c0_i32, %c0_i32_0 : i32, i32
  }
  func.func @transform_8(%arg0: i32) -> (i32, i32) {
    %c0_i32 = arith.constant 0 : i32
    %c0_i32_0 = arith.constant 0 : i32
    %c0_i32_1 = arith.constant 0 : i32
    return %c0_i32, %c0_i32_0 : i32, i32
  }
  func.func @transform_9(%arg0: i32) -> (i32, i32) {
    %c0_i32 = arith.constant 0 : i32
    %c0_i32_0 = arith.constant 0 : i32
    %c0_i32_1 = arith.constant 0 : i32
    return %c0_i32, %c0_i32_0 : i32, i32
  }
  func.func @transform_10(%arg0: i32) -> (i32, i32) {
    %c0_i32 = arith.constant 0 : i32
    %c0_i32_0 = arith.constant 0 : i32
    %c0_i32_1 = arith.constant 0 : i32
    return %c0_i32, %c0_i32_0 : i32, i32
  }
  func.func @transform_11(%arg0: i32) -> (i32, i32) {
    %c0_i32 = arith.constant 0 : i32
    %c0_i32_0 = arith.constant 0 : i32
    %c0_i32_1 = arith.constant 0 : i32
    return %c0_i32, %c0_i32_0 : i32, i32
  }
  func.func @transform_12(%arg0: i32) -> (i32, i32) {
    %c0_i32 = arith.constant 0 : i32
    %c0_i32_0 = arith.constant 0 : i32
    %c0_i32_1 = arith.constant 0 : i32
    return %c0_i32, %c0_i32_0 : i32, i32
  }
  func.func @transform_13(%arg0: i32) -> (i32, i32) {
    %c0_i32 = arith.constant 0 : i32
    %c0_i32_0 = arith.constant 0 : i32
    %c0_i32_1 = arith.constant 0 : i32
    return %c0_i32, %c0_i32_0 : i32, i32
  }
  func.func @transform_14(%arg0: i32) -> (i32, i32) {
    %c0_i32 = arith.constant 0 : i32
    %c0_i32_0 = arith.constant 0 : i32
    %c0_i32_1 = arith.constant 0 : i32
    return %c0_i32, %c0_i32_0 : i32, i32
  }
  func.func @transform_15(%arg0: i32) -> (i32, i32) {
    %c0_i32 = arith.constant 0 : i32
    %c0_i32_0 = arith.constant 0 : i32
    %c0_i32_1 = arith.constant 0 : i32
    return %c0_i32, %c0_i32_0 : i32, i32
  }
  func.func @transform_16(%arg0: i32) -> (i32, i32) {
    %c0_i32 = arith.constant 0 : i32
    %c0_i32_0 = arith.constant 0 : i32
    %c0_i32_1 = arith.constant 0 : i32
    return %c0_i32, %c0_i32_0 : i32, i32
  }
  func.func @transform_17(%arg0: i32) -> (i32, i32, i32) {
    %c0_i32 = arith.constant 0 : i32
    %c0_i32_0 = arith.constant 0 : i32
    %c0_i32_1 = arith.constant 0 : i32
    return %arg0, %c0_i32, %c0_i32_0 : i32, i32, i32
  }
}

</mosaic_0001>

<llo_original>
// kernel: tpu_custom_call.1
$region0: #{tpu_custom_call.1}
  #allocation0 [shape = 'u32[]', space=smem, size = 0x4, offset = 0x4, fixed_abs, tag = 'smem constant byte address 0x4 - core index']
  #allocation1 [shape = 'u32[144,128]{1,0:T(1,128)}', space=vmem, size = 0x12000, scoped, tag = 'internal scratch']
  #allocation2 [shape = 'f32[8,32]{1,0:T(8,128)}', space=vmem, size = 0x1000, scoped, tag = 'scratch operand']
  %s0 = inlined_call_operand.vmem [shape: f32[2,24,16], index: 0, kind: input, shape index: {}]
  %s1 = inlined_call_operand.vmem [shape: bf16[16,32], index: 1, kind: input, shape index: {}]
  %s2 = inlined_call_operand.vmem [shape: f32[24,32], index: 2, kind: input, shape index: {}]
  %s3 = inlined_call_operand.vmem [shape: bf16[32,32], index: 3, kind: input, shape index: {}]
  %s4 = inlined_call_operand.vmem [shape: f32[1,32], index: 4, kind: input, shape index: {}]
  %s5 = inlined_call_operand.vmem [shape: bf16[32,32], index: 5, kind: input, shape index: {}]
  %s6 = inlined_call_operand.vmem [shape: f32[1,32], index: 6, kind: input, shape index: {}]
  %s7 = inlined_call_operand.vmem [shape: bf16[32,32], index: 7, kind: input, shape index: {}]
  %s8 = inlined_call_operand.vmem [shape: f32[1,32], index: 8, kind: input, shape index: {}]
  %s9 = inlined_call_operand.vmem [shape: bf16[32,32], index: 9, kind: input, shape index: {}]
  %s10 = inlined_call_operand.vmem [shape: f32[1,32], index: 10, kind: input, shape index: {}]
  %s11 = inlined_call_operand.vmem [shape: bf16[32,128], index: 11, kind: input, shape index: {}]
  %s12 = inlined_call_operand.vmem [shape: f32[1,128], index: 12, kind: input, shape index: {}]
  %s13 = inlined_call_operand.vmem [shape: bf16[128,32], index: 13, kind: input, shape index: {}]
  %s14 = inlined_call_operand.vmem [shape: f32[1,32], index: 14, kind: input, shape index: {}]
  %s15 = inlined_call_operand.vmem [shape: bf16[32,128], index: 15, kind: input, shape index: {}]
  %s16 = inlined_call_operand.vmem [shape: f32[1,128], index: 16, kind: input, shape index: {}]
  %s17 = inlined_call_operand.hbm [shape: f32[2,8,128], index: 17, kind: output, shape index: {}]
  %s18 = sld [smem:[#allocation0]]
  $region101: #{tpu_custom_call.1} parent=0
    _
  %s20 = ssub.s32 1, %s18
  %s21 = scalar_select 0, %s20, %s18
  $region1: #{tpu_custom_call.1} parent=0
    #allocation3 [shape = 'u8[8192]{0}', space=vmem, size = 0x2000, scoped, tag = 'output window, operand 0']
    #allocation4 [shape = 's32[2]{0}', space=sflag, size = 0x8, scoped, tag = 'scoped memory for tpu_custom_call.1']
    %22 = vsyncpa [#allocation4], 0
    %s23 = scalar_lea.sflag [#allocation4], 1
    %24 = vsyncpa %s23, 0
    loop: start=0, step=1, limit=4
    $region2: #{tpu_custom_call.1} parent=1 // loop_pre_header
      _
    $region3: #{tpu_custom_call.1} parent=1 // loop_header
      %s26 = sphi 0, %s30
      %p27 = scmp.ge.s32.totalorder %s26, 4
      %s36 = sphi 0, %s38
      %s39 = sphi 0, %s36
      %s40 = sphi 0, %s39
      %s56 = sphi 0, %s40
      %s60 = sphi 0, %s60
      %s62 = sphi 0, %s60
      %s63 = sphi 0, %s62
      %s77 = sphi 0, %s63
      %s81 = sphi 0, %s81
      %s83 = sphi 0, %s81
      %s84 = sphi 0, %s83
      %s98 = sphi 0, %s84
      %s102 = sphi 0, %s102
      %s104 = sphi 0, %s102
      %s105 = sphi 0, %s104
      %s119 = sphi 0, %s105
      %s123 = sphi 0, %s123
      %s125 = sphi 0, %s123
      %s126 = sphi 0, %s125
      %s140 = sphi 0, %s126
      %s144 = sphi 0, %s144
      %s146 = sphi 0, %s144
      %s147 = sphi 0, %s146
      %s161 = sphi 0, %s147
      %s165 = sphi 0, %s165
      %s167 = sphi 0, %s165
      %s168 = sphi 0, %s167
      %s182 = sphi 0, %s168
      %s186 = sphi 0, %s186
      %s188 = sphi 0, %s186
      %s189 = sphi 0, %s188
      %s203 = sphi 0, %s189
      %s207 = sphi 0, %s207
      %s209 = sphi 0, %s207
      %s210 = sphi 0, %s209
      %s224 = sphi 0, %s210
      %s228 = sphi 0, %s228
      %s230 = sphi 0, %s228
      %s231 = sphi 0, %s230
      %s245 = sphi 0, %s231
      %s249 = sphi 0, %s249
      %s251 = sphi 0, %s249
      %s252 = sphi 0, %s251
      %s266 = sphi 0, %s252
      %s270 = sphi 0, %s270
      %s272 = sphi 0, %s270
      %s273 = sphi 0, %s272
      %s287 = sphi 0, %s273
      %s291 = sphi 0, %s291
      %s293 = sphi 0, %s291
      %s294 = sphi 0, %s293
      %s308 = sphi 0, %s294
      %s312 = sphi 0, %s312
      %s314 = sphi 0, %s312
      %s315 = sphi 0, %s314
      %s329 = sphi 0, %s315
      %s333 = sphi 0, %s333
      %s335 = sphi 0, %s333
      %s336 = sphi 0, %s335
      %s350 = sphi 0, %s336
      %s354 = sphi 0, %s354
      %s356 = sphi 0, %s354
      %s357 = sphi 0, %s356
      %s371 = sphi 0, %s357
      %s375 = sphi 0, %s375
      %s377 = sphi 0, %s375
      %s378 = sphi 0, %s377
      %s392 = sphi 0, %s378
      %s398 = sphi 0, %s400
      %s401 = sphi 0, %s398
      %s402 = sphi 0, %s401
      %s418 = sphi 0, %s402
    $region4: #{tpu_custom_call.1} parent=1 // loop_header_branch
      %29 = sbr.rel (%p27) target = $region8
    $region5: #{tpu_custom_call.1} parent=1 // loop_body
      %s31 = ssub.s32 %s26, 1
      %s32 = ssub.s32 %s26, 2
      %s33 = sadd.s32 %s26, 1
      %s34 = ssub.s32 %s26, %s33
      %p35 = scmp.eq.s32.totalorder %s34, 0
      %s37 = sadd.s32 %s36, 1
      %s38 = scalar_select %p35, %s36, %s37
      %p41 = pneg %p35
      %p42 = scmp.eq.s32.totalorder %s26, 1
      %p43 = por %p41, %p42
      %p44 = scmp.ne.s32.totalorder %s36, %s39
      %p45 = scmp.eq.s32.totalorder %s26, 0
      %p46 = por %p44, %p45
      %p47 = scmp.ne.s32.totalorder %s36, %s39
      %p48 = scmp.eq.s32.totalorder %s31, 1
      %p49 = por %p47, %p48
      %p50 = scmp.ne.s32.totalorder %s39, %s40
      %p51 = scmp.eq.s32.totalorder %s31, 0
      %p52 = por %p50, %p51
      %p53 = scmp.ne.s32.totalorder %s39, %s40
      %p54 = scmp.eq.s32.totalorder %s32, 1
      %p55 = por %p53, %p54
      %p57 = scmp.ne.s32.totalorder %s40, %s56
      %p58 = scmp.eq.s32.totalorder %s32, 0
      %p59 = por %p57, %p58
      %s61 = sadd.s32 %s60, 1
      %p64 = scmp.eq.s32.totalorder %s26, 1
      %p65 = scmp.ne.s32.totalorder %s60, %s62
      %p66 = scmp.eq.s32.totalorder %s26, 0
      %p67 = por %p65, %p66
      %p68 = scmp.ne.s32.totalorder %s60, %s62
      %p69 = scmp.eq.s32.totalorder %s31, 1
      %p70 = por %p68, %p69
      %p71 = scmp.ne.s32.totalorder %s62, %s63
      %p72 = scmp.eq.s32.totalorder %s31, 0
      %p73 = por %p71, %p72
      %p74 = scmp.ne.s32.totalorder %s62, %s63
      %p75 = scmp.eq.s32.totalorder %s32, 1
      %p76 = por %p74, %p75
      %p78 = scmp.ne.s32.totalorder %s63, %s77
      %p79 = scmp.eq.s32.totalorder %s32, 0
      %p80 = por %p78, %p79
      %s82 = sadd.s32 %s81, 1
      %p85 = scmp.eq.s32.totalorder %s26, 1
      %p86 = scmp.ne.s32.totalorder %s81, %s83
      %p87 = scmp.eq.s32.totalorder %s26, 0
      %p88 = por %p86, %p87
      %p89 = scmp.ne.s32.totalorder %s81, %s83
      %p90 = scmp.eq.s32.totalorder %s31, 1
      %p91 = por %p89, %p90
      %p92 = scmp.ne.s32.totalorder %s83, %s84
      %p93 = scmp.eq.s32.totalorder %s31, 0
      %p94 = por %p92, %p93
      %p95 = scmp.ne.s32.totalorder %s83, %s84
      %p96 = scmp.eq.s32.totalorder %s32, 1
      %p97 = por %p95, %p96
      %p99 = scmp.ne.s32.totalorder %s84, %s98
      %p100 = scmp.eq.s32.totalorder %s32, 0
      %p101 = por %p99, %p100
      %s103 = sadd.s32 %s102, 1
      %p106 = scmp.eq.s32.totalorder %s26, 1
      %p107 = scmp.ne.s32.totalorder %s102, %s104
      %p108 = scmp.eq.s32.totalorder %s26, 0
      %p109 = por %p107, %p108
      %p110 = scmp.ne.s32.totalorder %s102, %s104
      %p111 = scmp.eq.s32.totalorder %s31, 1
      %p112 = por %p110, %p111
      %p113 = scmp.ne.s32.totalorder %s104, %s105
      %p114 = scmp.eq.s32.totalorder %s31, 0
      %p115 = por %p113, %p114
      %p116 = scmp.ne.s32.totalorder %s104, %s105
      %p117 = scmp.eq.s32.totalorder %s32, 1
      %p118 = por %p116, %p117
      %p120 = scmp.ne.s32.totalorder %s105, %s119
      %p121 = scmp.eq.s32.totalorder %s32, 0
      %p122 = por %p120, %p121
      %s124 = sadd.s32 %s123, 1
      %p127 = scmp.eq.s32.totalorder %s26, 1
      %p128 = scmp.ne.s32.totalorder %s123, %s125
      %p129 = scmp.eq.s32.totalorder %s26, 0
      %p130 = por %p128, %p129
      %p131 = scmp.ne.s32.totalorder %s123, %s125
      %p132 = scmp.eq.s32.totalorder %s31, 1
      %p133 = por %p131, %p132
      %p134 = scmp.ne.s32.totalorder %s125, %s126
      %p135 = scmp.eq.s32.totalorder %s31, 0
      %p136 = por %p134, %p135
      %p137 = scmp.ne.s32.totalorder %s125, %s126
      %p138 = scmp.eq.s32.totalorder %s32, 1
      %p139 = por %p137, %p138
      %p141 = scmp.ne.s32.totalorder %s126, %s140
      %p142 = scmp.eq.s32.totalorder %s32, 0
      %p143 = por %p141, %p142
      %s145 = sadd.s32 %s144, 1
      %p148 = scmp.eq.s32.totalorder %s26, 1
      %p149 = scmp.ne.s32.totalorder %s144, %s146
      %p150 = scmp.eq.s32.totalorder %s26, 0
      %p151 = por %p149, %p150
      %p152 = scmp.ne.s32.totalorder %s144, %s146
      %p153 = scmp.eq.s32.totalorder %s31, 1
      %p154 = por %p152, %p153
      %p155 = scmp.ne.s32.totalorder %s146, %s147
      %p156 = scmp.eq.s32.totalorder %s31, 0
      %p157 = por %p155, %p156
      %p158 = scmp.ne.s32.totalorder %s146, %s147
      %p159 = scmp.eq.s32.totalorder %s32, 1
      %p160 = por %p158, %p159
      %p162 = scmp.ne.s32.totalorder %s147, %s161
      %p163 = scmp.eq.s32.totalorder %s32, 0
      %p164 = por %p162, %p163
      %s166 = sadd.s32 %s165, 1
      %p169 = scmp.eq.s32.totalorder %s26, 1
      %p170 = scmp.ne.s32.totalorder %s165, %s167
      %p171 = scmp.eq.s32.totalorder %s26, 0
      %p172 = por %p170, %p171
      %p173 = scmp.ne.s32.totalorder %s165, %s167
      %p174 = scmp.eq.s32.totalorder %s31, 1
      %p175 = por %p173, %p174
      %p176 = scmp.ne.s32.totalorder %s167, %s168
      %p177 = scmp.eq.s32.totalorder %s31, 0
      %p178 = por %p176, %p177
      %p179 = scmp.ne.s32.totalorder %s167, %s168
      %p180 = scmp.eq.s32.totalorder %s32, 1
      %p181 = por %p179, %p180
      %p183 = scmp.ne.s32.totalorder %s168, %s182
      %p184 = scmp.eq.s32.totalorder %s32, 0
      %p185 = por %p183, %p184
      %s187 = sadd.s32 %s186, 1
      %p190 = scmp.eq.s32.totalorder %s26, 1
      %p191 = scmp.ne.s32.totalorder %s186, %s188
      %p192 = scmp.eq.s32.totalorder %s26, 0
      %p193 = por %p191, %p192
      %p194 = scmp.ne.s32.totalorder %s186, %s188
      %p195 = scmp.eq.s32.totalorder %s31, 1
      %p196 = por %p194, %p195
      %p197 = scmp.ne.s32.totalorder %s188, %s189
      %p198 = scmp.eq.s32.totalorder %s31, 0
      %p199 = por %p197, %p198
      %p200 = scmp.ne.s32.totalorder %s188, %s189
      %p201 = scmp.eq.s32.totalorder %s32, 1
      %p202 = por %p200, %p201
      %p204 = scmp.ne.s32.totalorder %s189, %s203
      %p205 = scmp.eq.s32.totalorder %s32, 0
      %p206 = por %p204, %p205
      %s208 = sadd.s32 %s207, 1
      %p211 = scmp.eq.s32.totalorder %s26, 1
      %p212 = scmp.ne.s32.totalorder %s207, %s209
      %p213 = scmp.eq.s32.totalorder %s26, 0
      %p214 = por %p212, %p213
      %p215 = scmp.ne.s32.totalorder %s207, %s209
      %p216 = scmp.eq.s32.totalorder %s31, 1
      %p217 = por %p215, %p216
      %p218 = scmp.ne.s32.totalorder %s209, %s210
      %p219 = scmp.eq.s32.totalorder %s31, 0
      %p220 = por %p218, %p219
      %p221 = scmp.ne.s32.totalorder %s209, %s210
      %p222 = scmp.eq.s32.totalorder %s32, 1
      %p223 = por %p221, %p222
      %p225 = scmp.ne.s32.totalorder %s210, %s224
      %p226 = scmp.eq.s32.totalorder %s32, 0
      %p227 = por %p225, %p226
      %s229 = sadd.s32 %s228, 1
      %p232 = scmp.eq.s32.totalorder %s26, 1
      %p233 = scmp.ne.s32.totalorder %s228, %s230
      %p234 = scmp.eq.s32.totalorder %s26, 0
      %p235 = por %p233, %p234
      %p236 = scmp.ne.s32.totalorder %s228, %s230
      %p237 = scmp.eq.s32.totalorder %s31, 1
      %p238 = por %p236, %p237
      %p239 = scmp.ne.s32.totalorder %s230, %s231
      %p240 = scmp.eq.s32.totalorder %s31, 0
      %p241 = por %p239, %p240
      %p242 = scmp.ne.s32.totalorder %s230, %s231
      %p243 = scmp.eq.s32.totalorder %s32, 1
      %p244 = por %p242, %p243
      %p246 = scmp.ne.s32.totalorder %s231, %s245
      %p247 = scmp.eq.s32.totalorder %s32, 0
      %p248 = por %p246, %p247
      %s250 = sadd.s32 %s249, 1
      %p253 = scmp.eq.s32.totalorder %s26, 1
      %p254 = scmp.ne.s32.totalorder %s249, %s251
      %p255 = scmp.eq.s32.totalorder %s26, 0
      %p256 = por %p254, %p255
      %p257 = scmp.ne.s32.totalorder %s249, %s251
      %p258 = scmp.eq.s32.totalorder %s31, 1
      %p259 = por %p257, %p258
      %p260 = scmp.ne.s32.totalorder %s251, %s252
      %p261 = scmp.eq.s32.totalorder %s31, 0
      %p262 = por %p260, %p261
      %p263 = scmp.ne.s32.totalorder %s251, %s252
      %p264 = scmp.eq.s32.totalorder %s32, 1
      %p265 = por %p263, %p264
      %p267 = scmp.ne.s32.totalorder %s252, %s266
      %p268 = scmp.eq.s32.totalorder %s32, 0
      %p269 = por %p267, %p268
      %s271 = sadd.s32 %s270, 1
      %p274 = scmp.eq.s32.totalorder %s26, 1
      %p275 = scmp.ne.s32.totalorder %s270, %s272
      %p276 = scmp.eq.s32.totalorder %s26, 0
      %p277 = por %p275, %p276
      %p278 = scmp.ne.s32.totalorder %s270, %s272
      %p279 = scmp.eq.s32.totalorder %s31, 1
      %p280 = por %p278, %p279
      %p281 = scmp.ne.s32.totalorder %s272, %s273
      %p282 = scmp.eq.s32.totalorder %s31, 0
      %p283 = por %p281, %p282
      %p284 = scmp.ne.s32.totalorder %s272, %s273
      %p285 = scmp.eq.s32.totalorder %s32, 1
      %p286 = por %p284, %p285
      %p288 = scmp.ne.s32.totalorder %s273, %s287
      %p289 = scmp.eq.s32.totalorder %s32, 0
      %p290 = por %p288, %p289
      %s292 = sadd.s32 %s291, 1
      %p295 = scmp.eq.s32.totalorder %s26, 1
      %p296 = scmp.ne.s32.totalorder %s291, %s293
      %p297 = scmp.eq.s32.totalorder %s26, 0
      %p298 = por %p296, %p297
      %p299 = scmp.ne.s32.totalorder %s291, %s293
      %p300 = scmp.eq.s32.totalorder %s31, 1
      %p301 = por %p299, %p300
      %p302 = scmp.ne.s32.totalorder %s293, %s294
      %p303 = scmp.eq.s32.totalorder %s31, 0
      %p304 = por %p302, %p303
      %p305 = scmp.ne.s32.totalorder %s293, %s294
      %p306 = scmp.eq.s32.totalorder %s32, 1
      %p307 = por %p305, %p306
      %p309 = scmp.ne.s32.totalorder %s294, %s308
      %p310 = scmp.eq.s32.totalorder %s32, 0
      %p311 = por %p309, %p310
      %s313 = sadd.s32 %s312, 1
      %p316 = scmp.eq.s32.totalorder %s26, 1
      %p317 = scmp.ne.s32.totalorder %s312, %s314
      %p318 = scmp.eq.s32.totalorder %s26, 0
      %p319 = por %p317, %p318
      %p320 = scmp.ne.s32.totalorder %s312, %s314
      %p321 = scmp.eq.s32.totalorder %s31, 1
      %p322 = por %p320, %p321
      %p323 = scmp.ne.s32.totalorder %s314, %s315
      %p324 = scmp.eq.s32.totalorder %s31, 0
      %p325 = por %p323, %p324
      %p326 = scmp.ne.s32.totalorder %s314, %s315
      %p327 = scmp.eq.s32.totalorder %s32, 1
      %p328 = por %p326, %p327
      %p330 = scmp.ne.s32.totalorder %s315, %s329
      %p331 = scmp.eq.s32.totalorder %s32, 0
      %p332 = por %p330, %p331
      %s334 = sadd.s32 %s333, 1
      %p337 = scmp.eq.s32.totalorder %s26, 1
      %p338 = scmp.ne.s32.totalorder %s333, %s335
      %p339 = scmp.eq.s32.totalorder %s26, 0
      %p340 = por %p338, %p339
      %p341 = scmp.ne.s32.totalorder %s333, %s335
      %p342 = scmp.eq.s32.totalorder %s31, 1
      %p343 = por %p341, %p342
      %p344 = scmp.ne.s32.totalorder %s335, %s336
      %p345 = scmp.eq.s32.totalorder %s31, 0
      %p346 = por %p344, %p345
      %p347 = scmp.ne.s32.totalorder %s335, %s336
      %p348 = scmp.eq.s32.totalorder %s32, 1
      %p349 = por %p347, %p348
      %p351 = scmp.ne.s32.totalorder %s336, %s350
      %p352 = scmp.eq.s32.totalorder %s32, 0
      %p353 = por %p351, %p352
      %s355 = sadd.s32 %s354, 1
      %p358 = scmp.eq.s32.totalorder %s26, 1
      %p359 = scmp.ne.s32.totalorder %s354, %s356
      %p360 = scmp.eq.s32.totalorder %s26, 0
      %p361 = por %p359, %p360
      %p362 = scmp.ne.s32.totalorder %s354, %s356
      %p363 = scmp.eq.s32.totalorder %s31, 1
      %p364 = por %p362, %p363
      %p365 = scmp.ne.s32.totalorder %s356, %s357
      %p366 = scmp.eq.s32.totalorder %s31, 0
      %p367 = por %p365, %p366
      %p368 = scmp.ne.s32.totalorder %s356, %s357
      %p369 = scmp.eq.s32.totalorder %s32, 1
      %p370 = por %p368, %p369
      %p372 = scmp.ne.s32.totalorder %s357, %s371
      %p373 = scmp.eq.s32.totalorder %s32, 0
      %p374 = por %p372, %p373
      %s376 = sadd.s32 %s375, 1
      %p379 = scmp.eq.s32.totalorder %s26, 1
      %p380 = scmp.ne.s32.totalorder %s375, %s377
      %p381 = scmp.eq.s32.totalorder %s26, 0
      %p382 = por %p380, %p381
      %p383 = scmp.ne.s32.totalorder %s375, %s377
      %p384 = scmp.eq.s32.totalorder %s31, 1
      %p385 = por %p383, %p384
      %p386 = scmp.ne.s32.totalorder %s377, %s378
      %p387 = scmp.eq.s32.totalorder %s31, 0
      %p388 = por %p386, %p387
      %p389 = scmp.ne.s32.totalorder %s377, %s378
      %p390 = scmp.eq.s32.totalorder %s32, 1
      %p391 = por %p389, %p390
      %p393 = scmp.ne.s32.totalorder %s378, %s392
      %p394 = scmp.eq.s32.totalorder %s32, 0
      %p395 = por %p393, %p394
      %s396 = ssub.s32 %s26, %s33
      %p397 = scmp.eq.s32.totalorder %s396, 0
      %s399 = sadd.s32 %s398, 1
      %s400 = scalar_select %p397, %s398, %s399
      %p403 = pneg %p397
      %p404 = scmp.eq.s32.totalorder %s26, 1
      %p405 = por %p403, %p404
      %p406 = scmp.ne.s32.totalorder %s398, %s401
      %p407 = scmp.eq.s32.totalorder %s26, 0
      %p408 = por %p406, %p407
      %p409 = scmp.ne.s32.totalorder %s398, %s401
      %p410 = scmp.eq.s32.totalorder %s31, 1
      %p411 = por %p409, %p410
      %p412 = scmp.ne.s32.totalorder %s401, %s402
      %p413 = scmp.eq.s32.totalorder %s31, 0
      %p414 = por %p412, %p413
      %p415 = scmp.ne.s32.totalorder %s401, %s402
      %p416 = scmp.eq.s32.totalorder %s32, 1
      %p417 = por %p415, %p416
      %p419 = scmp.ne.s32.totalorder %s402, %s418
      %p420 = scmp.eq.s32.totalorder %s32, 0
      %p421 = por %p419, %p420
      %p422 = scmp.le.s32.totalorder 1, %s26
      %p423 = scmp.lt.s32.totalorder %s26, 3
      %p424 = pnand %p422, %p423
      %p425 = pneg %p424
      // Predicated region
      $region9: #{tpu_custom_call.1} parent=5 // pred_check
        _
      $region10: #{tpu_custom_call.1} parent=5 // pred_check_branch
        %427 = sbr.rel (%p424) target = $region12
      $region11: #{tpu_custom_call.1} parent=5 // pred_region
        %s428 = ssub.s32 %s26, 1
        // Predicated region
        $region13: #{tpu_custom_call.1} parent=11 // pred_check
          %p429 = pneg %p73
        $region14: #{tpu_custom_call.1} parent=11 // pred_check_branch
          %431 = sbr.rel (%p429) target = $region16
        $region15: #{tpu_custom_call.1} parent=11 // pred_region
          _
        $region16: #{tpu_custom_call.1} parent=11 // pred_fallthru
          _
        // Predicated region
        $region17: #{tpu_custom_call.1} parent=11 // pred_check
          %p432 = pneg %p94
        $region18: #{tpu_custom_call.1} parent=11 // pred_check_branch
          %434 = sbr.rel (%p432) target = $region20
        $region19: #{tpu_custom_call.1} parent=11 // pred_region
          _
        $region20: #{tpu_custom_call.1} parent=11 // pred_fallthru
          _
        // Predicated region
        $region21: #{tpu_custom_call.1} parent=11 // pred_check
          %p435 = pneg %p115
        $region22: #{tpu_custom_call.1} parent=11 // pred_check_branch
          %437 = sbr.rel (%p435) target = $region24
        $region23: #{tpu_custom_call.1} parent=11 // pred_region
          _
        $region24: #{tpu_custom_call.1} parent=11 // pred_fallthru
          _
        // Predicated region
        $region25: #{tpu_custom_call.1} parent=11 // pred_check
          %p438 = pneg %p136
        $region26: #{tpu_custom_call.1} parent=11 // pred_check_branch
          %440 = sbr.rel (%p438) target = $region28
        $region27: #{tpu_custom_call.1} parent=11 // pred_region
          _
        $region28: #{tpu_custom_call.1} parent=11 // pred_fallthru
          _
        // Predicated region
        $region29: #{tpu_custom_call.1} parent=11 // pred_check
          %p441 = pneg %p157
        $region30: #{tpu_custom_call.1} parent=11 // pred_check_branch
          %443 = sbr.rel (%p441) target = $region32
        $region31: #{tpu_custom_call.1} parent=11 // pred_region
          _
        $region32: #{tpu_custom_call.1} parent=11 // pred_fallthru
          _
        // Predicated region
        $region33: #{tpu_custom_call.1} parent=11 // pred_check
          %p444 = pneg %p178
        $region34: #{tpu_custom_call.1} parent=11 // pred_check_branch
          %446 = sbr.rel (%p444) target = $region36
        $region35: #{tpu_custom_call.1} parent=11 // pred_region
          _
        $region36: #{tpu_custom_call.1} parent=11 // pred_fallthru
          _
        // Predicated region
        $region37: #{tpu_custom_call.1} parent=11 // pred_check
          %p447 = pneg %p199
        $region38: #{tpu_custom_call.1} parent=11 // pred_check_branch
          %449 = sbr.rel (%p447) target = $region40
        $region39: #{tpu_custom_call.1} parent=11 // pred_region
          _
        $region40: #{tpu_custom_call.1} parent=11 // pred_fallthru
          _
        // Predicated region
        $region41: #{tpu_custom_call.1} parent=11 // pred_check
          %p450 = pneg %p220
        $region42: #{tpu_custom_call.1} parent=11 // pred_check_branch
          %452 = sbr.rel (%p450) target = $region44
        $region43: #{tpu_custom_call.1} parent=11 // pred_region
          _
        $region44: #{tpu_custom_call.1} parent=11 // pred_fallthru
          _
        // Predicated region
        $region45: #{tpu_custom_call.1} parent=11 // pred_check
          %p453 = pneg %p241
        $region46: #{tpu_custom_call.1} parent=11 // pred_check_branch
          %455 = sbr.rel (%p453) target = $region48
        $region47: #{tpu_custom_call.1} parent=11 // pred_region
          _
        $region48: #{tpu_custom_call.1} parent=11 // pred_fallthru
          _
        // Predicated region
        $region49: #{tpu_custom_call.1} parent=11 // pred_check
          %p456 = pneg %p262
        $region50: #{tpu_custom_call.1} parent=11 // pred_check_branch
          %458 = sbr.rel (%p456) target = $region52
        $region51: #{tpu_custom_call.1} parent=11 // pred_region
          _
        $region52: #{tpu_custom_call.1} parent=11 // pred_fallthru
          _
        // Predicated region
        $region53: #{tpu_custom_call.1} parent=11 // pred_check
          %p459 = pneg %p283
        $region54: #{tpu_custom_call.1} parent=11 // pred_check_branch
          %461 = sbr.rel (%p459) target = $region56
        $region55: #{tpu_custom_call.1} parent=11 // pred_region
          _
        $region56: #{tpu_custom_call.1} parent=11 // pred_fallthru
          _
        // Predicated region
        $region57: #{tpu_custom_call.1} parent=11 // pred_check
          %p462 = pneg %p304
        $region58: #{tpu_custom_call.1} parent=11 // pred_check_branch
          %464 = sbr.rel (%p462) target = $region60
        $region59: #{tpu_custom_call.1} parent=11 // pred_region
          _
        $region60: #{tpu_custom_call.1} parent=11 // pred_fallthru
          _
        // Predicated region
        $region61: #{tpu_custom_call.1} parent=11 // pred_check
          %p465 = pneg %p325
        $region62: #{tpu_custom_call.1} parent=11 // pred_check_branch
          %467 = sbr.rel (%p465) target = $region64
        $region63: #{tpu_custom_call.1} parent=11 // pred_region
          _
        $region64: #{tpu_custom_call.1} parent=11 // pred_fallthru
          _
        // Predicated region
        $region65: #{tpu_custom_call.1} parent=11 // pred_check
          %p468 = pneg %p346
        $region66: #{tpu_custom_call.1} parent=11 // pred_check_branch
          %470 = sbr.rel (%p468) target = $region68
        $region67: #{tpu_custom_call.1} parent=11 // pred_region
          _
        $region68: #{tpu_custom_call.1} parent=11 // pred_fallthru
          _
        // Predicated region
        $region69: #{tpu_custom_call.1} parent=11 // pred_check
          %p471 = pneg %p367
        $region70: #{tpu_custom_call.1} parent=11 // pred_check_branch
          %473 = sbr.rel (%p471) target = $region72
        $region71: #{tpu_custom_call.1} parent=11 // pred_region
          _
        $region72: #{tpu_custom_call.1} parent=11 // pred_fallthru
          _
        // Predicated region
        $region73: #{tpu_custom_call.1} parent=11 // pred_check
          %p474 = pneg %p388
        $region74: #{tpu_custom_call.1} parent=11 // pred_check_branch
          %476 = sbr.rel (%p474) target = $region76
        $region75: #{tpu_custom_call.1} parent=11 // pred_region
          _
        $region76: #{tpu_custom_call.1} parent=11 // pred_fallthru
          _
      $region12: #{tpu_custom_call.1} parent=5 // pred_fallthru
        _
      %p477 = scmp.lt.s32.totalorder %s26, 2
      // Predicated region
      $region77: #{tpu_custom_call.1} parent=5 // pred_check
        %p478 = pneg %p477
      $region78: #{tpu_custom_call.1} parent=5 // pred_check_branch
        %480 = sbr.rel (%p478) target = $region80
      $region79: #{tpu_custom_call.1} parent=5 // pred_region
        // Predicated region
        $region81: #{tpu_custom_call.1} parent=79 // pred_check
          %p481 = pneg %p46
        $region82: #{tpu_custom_call.1} parent=79 // pred_check_branch
          %483 = sbr.rel (%p481) target = $region84
        $region83: #{tpu_custom_call.1} parent=79 // pred_region
          %p484 = scmp.lt.s32.totalorder %s26, 1
          %s485 = scalar_select %p484, %s26, 1
          %s486 = smul.addr %s485, 3
          %s487 = smul.addr %s486, 8
          %s488 = scalar_lea.vmem %s0, %s487
        $region84: #{tpu_custom_call.1} parent=79 // pred_fallthru
          _
      $region80: #{tpu_custom_call.1} parent=5 // pred_fallthru
        _
      %p489 = scmp.le.s32.totalorder 1, %s26
      %p490 = scmp.lt.s32.totalorder %s26, 3
      %p491 = pnand %p489, %p490
      %p492 = pneg %p491
      // Predicated region
      $region85: #{tpu_custom_call.1} parent=5 // pred_check
        _
      $region86: #{tpu_custom_call.1} parent=5 // pred_check_branch
        %494 = sbr.rel (%p491) target = $region88
      $region87: #{tpu_custom_call.1} parent=5 // pred_region
        %s495 = ssub.s32 %s26, 1
        %p496 = scmp.lt.s32.totalorder %s31, 1
        %s497 = scalar_select %p496, %s31, 1
        %s498 = smul.addr %s497, 3
        %s499 = smul.addr %s498, 8
        %s500 = scalar_lea.vmem %s0, %s499
        %p501 = pneg %p52
        %p502 = pneg %p49
        %p503 = pneg %p73
        %p504 = pneg %p70
        %p505 = pneg %p94
        %p506 = pneg %p91
        %p507 = pneg %p115
        %p508 = pneg %p112
        %p509 = pneg %p136
        %p510 = pneg %p133
        %p511 = pneg %p157
        %p512 = pneg %p154
        %p513 = pneg %p178
        %p514 = pneg %p175
        %p515 = pneg %p199
        %p516 = pneg %p196
        %p517 = pneg %p220
        %p518 = pneg %p217
        %p519 = pneg %p241
        %p520 = pneg %p238
        %p521 = pneg %p262
        %p522 = pneg %p259
        %p523 = pneg %p283
        %p524 = pneg %p280
        %p525 = pneg %p304
        %p526 = pneg %p301
        %p527 = pneg %p325
        %p528 = pneg %p322
        %p529 = pneg %p346
        %p530 = pneg %p343
        %p531 = pneg %p367
        %p532 = pneg %p364
        %p533 = pneg %p388
        %p534 = pneg %p385
        %p535 = pneg %p414
        %p536 = pneg %p411
        %s537 = sand.u32 %s401, 1
        %s538 = scalar_lea.sflag [#allocation4], %s537
        %s539 = sand.u32 %s401, 1
        %s540 = smul.addr %s539, 8
        %s541 = scalar_lea.vmem [#allocation3], %s540
        %p542 = scmp.lt.s32.totalorder %s31, 1
        %s543 = scalar_select %p542, %s31, 1
        %s544 = smul.addr %s543, 3
        %s545 = smul.addr %s544, 8
        %s546 = scalar_lea.vmem %s0, %s545
        %v548 = vld [vmem:[%s546] sm:$0xff]
        %v549 = vld [vmem:[%s546 + $0x8] sm:$0xff]
        %v550 = vld [vmem:[%s546 + $0x10] sm:$0xff]
        %v551 = vpack.c.bf16 %v549, %v548
        %v552 = vpack.c.bf16 %v550, %v550
        %v553 = vld [vmem:[%s1] sm:$0xf]
        %v554 = vld [vmem:[%s1 + $0x4] sm:$0xf]
        %v555 = vld [vmem:[%s2] sm:$0xff]
        %v556 = vld [vmem:[%s2 + $0x8] sm:$0xff]
        %v557 = vld [vmem:[%s2 + $0x10] sm:$0xff]
        %v560 = vunpack.c.l.b16 %v553
        %v561 = vunpack.c.l.b16 %v554
        %v562 = vpack.c.b16 %v561, %v560
        %vm564 = vcmask 130048
        %v566 = vsel %vm564, %v551, 0
        %v569 = vsel %vm564, %v552, 0
        %571 = vmatprep.subr.bf16.mxu0 0
        %572 = vmatpush1.bf16.msra.mxu0 %v562
        %573 = vmatprep.subr.bf16.mxu0 0
        %574 = vmatpush1.bf16.msra.mxu0 0
        %575 = vmatprep.subr.bf16.mxu0 0
        %576 = vmatpush1.bf16.msra.mxu0 0
        %577 = vmatprep.subr.bf16.mxu0 0
        %578 = vmatpush1.bf16.msra.mxu0 0
        %579 = vmatprep.subr.bf16.mxu0 0
        %580 = vmatpush1.bf16.msra.mxu0 0
        %581 = vmatprep.subr.bf16.mxu0 0
        %582 = vmatpush1.bf16.msra.mxu0 0
        %583 = vmatprep.subr.bf16.mxu0 0
        %584 = vmatpush1.bf16.msra.mxu0 0
        %585 = vmatprep.subr.bf16.mxu0 0
        %586 = vmatpush1.bf16.msra.mxu0 0
        %587 = vmatprep.subr.bf16.mxu0 0
        %588 = vmatpush1.bf16.msra.mxu0 0
        %589 = vmatprep.subr.bf16.mxu0 0
        %590 = vmatpush1.bf16.msra.mxu0 0
        %591 = vmatprep.subr.bf16.mxu0 0
        %592 = vmatpush1.bf16.msra.mxu0 0
        %593 = vmatprep.subr.bf16.mxu0 0
        %594 = vmatpush1.bf16.msra.mxu0 0
        %595 = vmatprep.subr.bf16.mxu0 0
        %596 = vmatpush1.bf16.msra.mxu0 0
        %597 = vmatprep.subr.bf16.mxu0 0
        %598 = vmatpush1.bf16.msra.mxu0 0
        %599 = vmatprep.subr.bf16.mxu0 0
        %600 = vmatpush1.bf16.msra.mxu0 0
        %601 = vmatprep.subr.bf16.mxu0 0
        %602 = vmatpush1.bf16.msra.mxu0 0
        %603 = vmatprep.mubr.bf16.mxu0 0
        %604 = vmatmul.mubr.bf16.gmra.mrb[0].mxu0 %v566
        %v605 = vpop.f32.mrb[0].mxu0
        %v606 = vadd.f32 %v555, %v605
        %v607 = vpop.f32.mrb[0].mxu0
        %v608 = vpop.f32.mrb[0].mxu0
        %v609 = vadd.f32 %v556, %v608
        %v610 = vpop.f32.mrb[0].mxu0
        %611 = vmatprep.mubr.bf16.mxu0 0
        %612 = vmatmul.mubr.bf16.gmra.mrb[0].mxu0 %v569
        %v613 = vpop.f32.mrb[0].mxu0
        %v614 = vadd.f32 %v557, %v613
        %v615 = vpop.f32.mrb[0].mxu0
        %v616 = vpop.f32.mrb[0].mxu0
        %v617 = vpop.f32.mrb[0].mxu0
        %618 = vdwg.mxu0
        %v619 = vpack.c.bf16 %v606, %v606
        %v620 = vld [vmem:[%s3] sm:$0xf]
        %v621 = vld [vmem:[%s3 + $0x4] sm:$0xf]
        %v622 = vld [vmem:[%s3 + $0x8] sm:$0xf]
        %v623 = vld [vmem:[%s3 + $0xc] sm:$0xf]
        %v624 = vld [vmem:[%s4] sm:$0x1]
        %v626 = vlaneseq
        %v627 = vshrl.u32 %v626, 7
        %v628 = vsub.s32 0, %v627
        %v629 = vrot.slane %v624, %v628
        %v635 = vunpack.c.l.b16 %v620
        %v636 = vunpack.c.l.b16 %v621
        %v637 = vunpack.c.l.b16 %v622
        %v638 = vunpack.c.l.b16 %v623
        %v639 = vpack.c.b16 %v636, %v635
        %v640 = vpack.c.b16 %v638, %v637
        %vm643 = vcmask 261120
        %v645 = vsel %vm643, %v619, 0
        %647 = vmatprep.subr.bf16.mxu0 0
        %648 = vmatpush1.bf16.msra.mxu0 %v639
        %649 = vmatprep.subr.bf16.mxu0 0
        %650 = vmatpush1.bf16.msra.mxu0 %v640
        %651 = vmatprep.subr.bf16.mxu0 0
        %652 = vmatpush1.bf16.msra.mxu0 0
        %653 = vmatprep.subr.bf16.mxu0 0
        %654 = vmatpush1.bf16.msra.mxu0 0
        %655 = vmatprep.subr.bf16.mxu0 0
        %656 = vmatpush1.bf16.msra.mxu0 0
        %657 = vmatprep.subr.bf16.mxu0 0
        %658 = vmatpush1.bf16.msra.mxu0 0
        %659 = vmatprep.subr.bf16.mxu0 0
        %660 = vmatpush1.bf16.msra.mxu0 0
        %661 = vmatprep.subr.bf16.mxu0 0
        %662 = vmatpush1.bf16.msra.mxu0 0
        %663 = vmatprep.subr.bf16.mxu0 0
        %664 = vmatpush1.bf16.msra.mxu0 0
        %665 = vmatprep.subr.bf16.mxu0 0
        %666 = vmatpush1.bf16.msra.mxu0 0
        %667 = vmatprep.subr.bf16.mxu0 0
        %668 = vmatpush1.bf16.msra.mxu0 0
        %669 = vmatprep.subr.bf16.mxu0 0
        %670 = vmatpush1.bf16.msra.mxu0 0
        %671 = vmatprep.subr.bf16.mxu0 0
        %672 = vmatpush1.bf16.msra.mxu0 0
        %673 = vmatprep.subr.bf16.mxu0 0
        %674 = vmatpush1.bf16.msra.mxu0 0
        %675 = vmatprep.subr.bf16.mxu0 0
        %676 = vmatpush1.bf16.msra.mxu0 0
        %677 = vmatprep.subr.bf16.mxu0 0
        %678 = vmatpush1.bf16.msra.mxu0 0
        %679 = vmatprep.mubr.bf16.mxu0 0
        %680 = vmatmul.mubr.bf16.gmra.mrb[0].mxu0 %v645
        %v681 = vpop.f32.mrb[0].mxu0
        %v682 = vadd.f32 %v629, %v681
        %v683 = vpop.f32.mrb[0].mxu0
        %v684 = vpop.f32.mrb[0].mxu0
        %v685 = vpop.f32.mrb[0].mxu0
        %686 = vdwg.mxu0
        %v687 = vmul.f32 %v682, 0.35355338
        %v688 = vpack.c.bf16 %v609, %v609
        %v689 = vld [vmem:[%s5] sm:$0xf]
        %v690 = vld [vmem:[%s5 + $0x4] sm:$0xf]
        %v691 = vld [vmem:[%s5 + $0x8] sm:$0xf]
        %v692 = vld [vmem:[%s5 + $0xc] sm:$0xf]
        %v693 = vld [vmem:[%s6] sm:$0x1]
        %v695 = vlaneseq
        %v696 = vshrl.u32 %v695, 7
        %v697 = vsub.s32 0, %v696
        %v698 = vrot.slane %v693, %v697
        %v704 = vunpack.c.l.b16 %v689
        %v705 = vunpack.c.l.b16 %v690
        %v706 = vunpack.c.l.b16 %v691
        %v707 = vunpack.c.l.b16 %v692
        %v708 = vpack.c.b16 %v705, %v704
        %v709 = vpack.c.b16 %v707, %v706
        %v713 = vsel %vm643, %v688, 0
        %715 = vmatprep.subr.bf16.mxu0 0
        %716 = vmatpush1.bf16.msra.mxu0 %v708
        %717 = vmatprep.subr.bf16.mxu0 0
        %718 = vmatpush1.bf16.msra.mxu0 %v709
        %719 = vmatprep.subr.bf16.mxu0 0
        %720 = vmatpush1.bf16.msra.mxu0 0
        %721 = vmatprep.subr.bf16.mxu0 0
        %722 = vmatpush1.bf16.msra.mxu0 0
        %723 = vmatprep.subr.bf16.mxu0 0
        %724 = vmatpush1.bf16.msra.mxu0 0
        %725 = vmatprep.subr.bf16.mxu0 0
        %726 = vmatpush1.bf16.msra.mxu0 0
        %727 = vmatprep.subr.bf16.mxu0 0
        %728 = vmatpush1.bf16.msra.mxu0 0
        %729 = vmatprep.subr.bf16.mxu0 0
        %730 = vmatpush1.bf16.msra.mxu0 0
        %731 = vmatprep.subr.bf16.mxu0 0
        %732 = vmatpush1.bf16.msra.mxu0 0
        %733 = vmatprep.subr.bf16.mxu0 0
        %734 = vmatpush1.bf16.msra.mxu0 0
        %735 = vmatprep.subr.bf16.mxu0 0
        %736 = vmatpush1.bf16.msra.mxu0 0
        %737 = vmatprep.subr.bf16.mxu0 0
        %738 = vmatpush1.bf16.msra.mxu0 0
        %739 = vmatprep.subr.bf16.mxu0 0
        %740 = vmatpush1.bf16.msra.mxu0 0
        %741 = vmatprep.subr.bf16.mxu0 0
        %742 = vmatpush1.bf16.msra.mxu0 0
        %743 = vmatprep.subr.bf16.mxu0 0
        %744 = vmatpush1.bf16.msra.mxu0 0
        %745 = vmatprep.subr.bf16.mxu0 0
        %746 = vmatpush1.bf16.msra.mxu0 0
        %747 = vmatprep.mubr.bf16.mxu0 0
        %748 = vmatmul.mubr.bf16.gmra.mrb[0].mxu0 %v713
        %v749 = vpop.f32.mrb[0].mxu0
        %v750 = vadd.f32 %v698, %v749
        %v751 = vpop.f32.mrb[0].mxu0
        %v752 = vpop.f32.mrb[0].mxu0
        %v753 = vpop.f32.mrb[0].mxu0
        %754 = vdwg.mxu0
        %v755 = vpack.c.bf16 %v614, %v614
        %v756 = vld [vmem:[%s7] sm:$0xf]
        %v757 = vld [vmem:[%s7 + $0x4] sm:$0xf]
        %v758 = vld [vmem:[%s7 + $0x8] sm:$0xf]
        %v759 = vld [vmem:[%s7 + $0xc] sm:$0xf]
        %v760 = vld [vmem:[%s8] sm:$0x1]
        %v762 = vlaneseq
        %v763 = vshrl.u32 %v762, 7
        %v764 = vsub.s32 0, %v763
        %v765 = vrot.slane %v760, %v764
        %v771 = vunpack.c.l.b16 %v756
        %v772 = vunpack.c.l.b16 %v757
        %v773 = vunpack.c.l.b16 %v758
        %v774 = vunpack.c.l.b16 %v759
        %v775 = vpack.c.b16 %v772, %v771
        %v776 = vpack.c.b16 %v774, %v773
        %v780 = vsel %vm643, %v755, 0
        %782 = vmatprep.subr.bf16.mxu0 0
        %783 = vmatpush1.bf16.msra.mxu0 %v775
        %784 = vmatprep.subr.bf16.mxu0 0
        %785 = vmatpush1.bf16.msra.mxu0 %v776
        %786 = vmatprep.subr.bf16.mxu0 0
        %787 = vmatpush1.bf16.msra.mxu0 0
        %788 = vmatprep.subr.bf16.mxu0 0
        %789 = vmatpush1.bf16.msra.mxu0 0
        %790 = vmatprep.subr.bf16.mxu0 0
        %791 = vmatpush1.bf16.msra.mxu0 0
        %792 = vmatprep.subr.bf16.mxu0 0
        %793 = vmatpush1.bf16.msra.mxu0 0
        %794 = vmatprep.subr.bf16.mxu0 0
        %795 = vmatpush1.bf16.msra.mxu0 0
        %796 = vmatprep.subr.bf16.mxu0 0
        %797 = vmatpush1.bf16.msra.mxu0 0
        %798 = vmatprep.subr.bf16.mxu0 0
        %799 = vmatpush1.bf16.msra.mxu0 0
        %800 = vmatprep.subr.bf16.mxu0 0
        %801 = vmatpush1.bf16.msra.mxu0 0
        %802 = vmatprep.subr.bf16.mxu0 0
        %803 = vmatpush1.bf16.msra.mxu0 0
        %804 = vmatprep.subr.bf16.mxu0 0
        %805 = vmatpush1.bf16.msra.mxu0 0
        %806 = vmatprep.subr.bf16.mxu0 0
        %807 = vmatpush1.bf16.msra.mxu0 0
        %808 = vmatprep.subr.bf16.mxu0 0
        %809 = vmatpush1.bf16.msra.mxu0 0
        %810 = vmatprep.subr.bf16.mxu0 0
        %811 = vmatpush1.bf16.msra.mxu0 0
        %812 = vmatprep.subr.bf16.mxu0 0
        %813 = vmatpush1.bf16.msra.mxu0 0
        %814 = vmatprep.mubr.bf16.mxu0 0
        %815 = vmatmul.mubr.bf16.gmra.mrb[0].mxu0 %v780
        %v816 = vpop.f32.mrb[0].mxu0
        %v817 = vadd.f32 %v765, %v816
        %v818 = vpop.f32.mrb[0].mxu0
        %v819 = vpop.f32.mrb[0].mxu0
        %v820 = vpop.f32.mrb[0].mxu0
        %821 = vdwg.mxu0
        %v822 = vpack.c.bf16 %v687, %v687
        %v823 = vpack.c.bf16 %v750, %v750
        %v824 = vpack.c.bf16 %v817, %v817
        %vm825 = vcmask 64512
        %v827 = vsel %vm825, %v822, 0
        %v830 = vsel %vm825, %v823, 0
        %832 = vmatprep.subr.bf16.mxu0 0
        %833 = vmatpush1.bf16.xpose.msra.mxu0 %v830
        %834 = vmatprep.subr.bf16.mxu0 0
        %835 = vmatpush1.bf16.xpose.msra.mxu0 0
        %836 = vmatprep.subr.bf16.mxu0 0
        %837 = vmatpush1.bf16.xpose.msra.mxu0 0
        %838 = vmatprep.subr.bf16.mxu0 0
        %839 = vmatpush1.bf16.xpose.msra.mxu0 0
        %840 = vmatprep.subr.bf16.mxu0 0
        %841 = vmatpush1.bf16.xpose.msra.mxu0 0
        %842 = vmatprep.subr.bf16.mxu0 0
        %843 = vmatpush1.bf16.xpose.msra.mxu0 0
        %844 = vmatprep.subr.bf16.mxu0 0
        %845 = vmatpush1.bf16.xpose.msra.mxu0 0
        %846 = vmatprep.subr.bf16.mxu0 0
        %847 = vmatpush1.bf16.xpose.msra.mxu0 0
        %848 = vmatprep.subr.bf16.mxu0 0
        %849 = vmatpush1.bf16.xpose.msra.mxu0 0
        %850 = vmatprep.subr.bf16.mxu0 0
        %851 = vmatpush1.bf16.xpose.msra.mxu0 0
        %852 = vmatprep.subr.bf16.mxu0 0
        %853 = vmatpush1.bf16.xpose.msra.mxu0 0
        %854 = vmatprep.subr.bf16.mxu0 0
        %855 = vmatpush1.bf16.xpose.msra.mxu0 0
        %856 = vmatprep.subr.bf16.mxu0 0
        %857 = vmatpush1.bf16.xpose.msra.mxu0 0
        %858 = vmatprep.subr.bf16.mxu0 0
        %859 = vmatpush1.bf16.xpose.msra.mxu0 0
        %860 = vmatprep.subr.bf16.mxu0 0
        %861 = vmatpush1.bf16.xpose.msra.mxu0 0
        %862 = vmatprep.subr.bf16.mxu0 0
        %863 = vmatpush1.bf16.xpose.msra.mxu0 0
        %864 = vmatprep.mubr.bf16.mxu0 0
        %865 = vmatmul.mubr.bf16.gmra.mrb[0].mxu0 %v827
        %v866 = vpop.f32.mrb[0].mxu0
        %v867 = vadd.f32 0.0, %v866
        %v868 = vpop.f32.mrb[0].mxu0
        %v869 = vpop.f32.mrb[0].mxu0
        %v870 = vpop.f32.mrb[0].mxu0
        %871 = vdwg.mxu0
        %v872 = vsel %vm825, %v867, -inf
        %873 = vmax.xlane.f32.xlu0 %v872
        %v874 = vpop.xlane.xlu0 %873
        %v875 = vsub.f32 %v867, %v874
        %v876 = vmul.f32 %v875, 1.442695
        %v877 = vpow.pop %v876
        %v878 = vsel %vm825, %v877, 0.0
        %879 = vadd.xlane.f32.xlu0 %v878
        %v880 = vpop.xlane.xlu0 %879
        %v881 = vrcp.pop %v880
        %v882 = vmul.f32 %v877, %v881
        %v883 = vpack.c.bf16 %v882, %v882
        %v885 = vsel %vm825, %v883, 0
        %vm887 = vcmask 1043456
        %v889 = vsel %vm887, %v824, 0
        %891 = vmatprep.subr.bf16.mxu0 0
        %892 = vmatpush1.bf16.msra.mxu0 %v889
        %893 = vmatprep.subr.bf16.mxu0 0
        %894 = vmatpush1.bf16.msra.mxu0 0
        %895 = vmatprep.subr.bf16.mxu0 0
        %896 = vmatpush1.bf16.msra.mxu0 0
        %897 = vmatprep.subr.bf16.mxu0 0
        %898 = vmatpush1.bf16.msra.mxu0 0
        %899 = vmatprep.subr.bf16.mxu0 0
        %900 = vmatpush1.bf16.msra.mxu0 0
        %901 = vmatprep.subr.bf16.mxu0 0
        %902 = vmatpush1.bf16.msra.mxu0 0
        %903 = vmatprep.subr.bf16.mxu0 0
        %904 = vmatpush1.bf16.msra.mxu0 0
        %905 = vmatprep.subr.bf16.mxu0 0
        %906 = vmatpush1.bf16.msra.mxu0 0
        %907 = vmatprep.subr.bf16.mxu0 0
        %908 = vmatpush1.bf16.msra.mxu0 0
        %909 = vmatprep.subr.bf16.mxu0 0
        %910 = vmatpush1.bf16.msra.mxu0 0
        %911 = vmatprep.subr.bf16.mxu0 0
        %912 = vmatpush1.bf16.msra.mxu0 0
        %913 = vmatprep.subr.bf16.mxu0 0
        %914 = vmatpush1.bf16.msra.mxu0 0
        %915 = vmatprep.subr.bf16.mxu0 0
        %916 = vmatpush1.bf16.msra.mxu0 0
        %917 = vmatprep.subr.bf16.mxu0 0
        %918 = vmatpush1.bf16.msra.mxu0 0
        %919 = vmatprep.subr.bf16.mxu0 0
        %920 = vmatpush1.bf16.msra.mxu0 0
        %921 = vmatprep.subr.bf16.mxu0 0
        %922 = vmatpush1.bf16.msra.mxu0 0
        %923 = vmatprep.mubr.bf16.mxu0 0
        %924 = vmatmul.mubr.bf16.gmra.mrb[0].mxu0 %v885
        %v925 = vpop.f32.mrb[0].mxu0
        %v926 = vadd.f32 0.0, %v925
        %v927 = vpop.f32.mrb[0].mxu0
        %v928 = vpop.f32.mrb[0].mxu0
        %v929 = vpop.f32.mrb[0].mxu0
        %930 = vdwg.mxu0
        %931 = vst.msk [vmem:[#allocation2] sm:$0xff] %vm825, %v926
        %933 = vrot.lane.b32.xlu0 %v822, 120
        %v934 = vpop.permute.xlu0 %933
        %936 = vrot.lane.b32.xlu0 %v823, 120
        %v937 = vpop.permute.xlu0 %936
        %v939 = vsel %vm825, %v934, 0
        %v942 = vsel %vm825, %v937, 0
        %944 = vmatprep.subr.bf16.mxu0 0
        %945 = vmatpush1.bf16.xpose.msra.mxu0 %v942
        %946 = vmatprep.subr.bf16.mxu0 0
        %947 = vmatpush1.bf16.xpose.msra.mxu0 0
        %948 = vmatprep.subr.bf16.mxu0 0
        %949 = vmatpush1.bf16.xpose.msra.mxu0 0
        %950 = vmatprep.subr.bf16.mxu0 0
        %951 = vmatpush1.bf16.xpose.msra.mxu0 0
        %952 = vmatprep.subr.bf16.mxu0 0
        %953 = vmatpush1.bf16.xpose.msra.mxu0 0
        %954 = vmatprep.subr.bf16.mxu0 0
        %955 = vmatpush1.bf16.xpose.msra.mxu0 0
        %956 = vmatprep.subr.bf16.mxu0 0
        %957 = vmatpush1.bf16.xpose.msra.mxu0 0
        %958 = vmatprep.subr.bf16.mxu0 0
        %959 = vmatpush1.bf16.xpose.msra.mxu0 0
        %960 = vmatprep.subr.bf16.mxu0 0
        %961 = vmatpush1.bf16.xpose.msra.mxu0 0
        %962 = vmatprep.subr.bf16.mxu0 0
        %963 = vmatpush1.bf16.xpose.msra.mxu0 0
        %964 = vmatprep.subr.bf16.mxu0 0
        %965 = vmatpush1.bf16.xpose.msra.mxu0 0
        %966 = vmatprep.subr.bf16.mxu0 0
        %967 = vmatpush1.bf16.xpose.msra.mxu0 0
        %968 = vmatprep.subr.bf16.mxu0 0
        %969 = vmatpush1.bf16.xpose.msra.mxu0 0
        %970 = vmatprep.subr.bf16.mxu0 0
        %971 = vmatpush1.bf16.xpose.msra.mxu0 0
        %972 = vmatprep.subr.bf16.mxu0 0
        %973 = vmatpush1.bf16.xpose.msra.mxu0 0
        %974 = vmatprep.subr.bf16.mxu0 0
        %975 = vmatpush1.bf16.xpose.msra.mxu0 0
        %976 = vmatprep.mubr.bf16.mxu0 0
        %977 = vmatmul.mubr.bf16.gmra.mrb[0].mxu0 %v939
        %v978 = vpop.f32.mrb[0].mxu0
        %v979 = vadd.f32 0.0, %v978
        %v980 = vpop.f32.mrb[0].mxu0
        %v981 = vpop.f32.mrb[0].mxu0
        %v982 = vpop.f32.mrb[0].mxu0
        %983 = vdwg.mxu0
        %v984 = vsel %vm825, %v979, -inf
        %985 = vmax.xlane.f32.xlu0 %v984
        %v986 = vpop.xlane.xlu0 %985
        %v987 = vsub.f32 %v979, %v986
        %v988 = vmul.f32 %v987, 1.442695
        %v989 = vpow.pop %v988
        %v990 = vsel %vm825, %v989, 0.0
        %991 = vadd.xlane.f32.xlu0 %v990
        %v992 = vpop.xlane.xlu0 %991
        %v993 = vrcp.pop %v992
        %v994 = vmul.f32 %v989, %v993
        %v995 = vpack.c.bf16 %v994, %v994
        %997 = vrot.lane.b32.xlu0 %v824, 120
        %v998 = vpop.permute.xlu0 %997
        %v1000 = vsel %vm825, %v995, 0
        %v1003 = vsel %vm887, %v998, 0
        %1005 = vmatprep.subr.bf16.mxu0 0
        %1006 = vmatpush1.bf16.msra.mxu0 %v1003
        %1007 = vmatprep.subr.bf16.mxu0 0
        %1008 = vmatpush1.bf16.msra.mxu0 0
        %1009 = vmatprep.subr.bf16.mxu0 0
        %1010 = vmatpush1.bf16.msra.mxu0 0
        %1011 = vmatprep.subr.bf16.mxu0 0
        %1012 = vmatpush1.bf16.msra.mxu0 0
        %1013 = vmatprep.subr.bf16.mxu0 0
        %1014 = vmatpush1.bf16.msra.mxu0 0
        %1015 = vmatprep.subr.bf16.mxu0 0
        %1016 = vmatpush1.bf16.msra.mxu0 0
        %1017 = vmatprep.subr.bf16.mxu0 0
        %1018 = vmatpush1.bf16.msra.mxu0 0
        %1019 = vmatprep.subr.bf16.mxu0 0
        %1020 = vmatpush1.bf16.msra.mxu0 0
        %1021 = vmatprep.subr.bf16.mxu0 0
        %1022 = vmatpush1.bf16.msra.mxu0 0
        %1023 = vmatprep.subr.bf16.mxu0 0
        %1024 = vmatpush1.bf16.msra.mxu0 0
        %1025 = vmatprep.subr.bf16.mxu0 0
        %1026 = vmatpush1.bf16.msra.mxu0 0
        %1027 = vmatprep.subr.bf16.mxu0 0
        %1028 = vmatpush1.bf16.msra.mxu0 0
        %1029 = vmatprep.subr.bf16.mxu0 0
        %1030 = vmatpush1.bf16.msra.mxu0 0
        %1031 = vmatprep.subr.bf16.mxu0 0
        %1032 = vmatpush1.bf16.msra.mxu0 0
        %1033 = vmatprep.subr.bf16.mxu0 0
        %1034 = vmatpush1.bf16.msra.mxu0 0
        %1035 = vmatprep.subr.bf16.mxu0 0
        %1036 = vmatpush1.bf16.msra.mxu0 0
        %1037 = vmatprep.mubr.bf16.mxu0 0
        %1038 = vmatmul.mubr.bf16.gmra.mrb[0].mxu0 %v1000
        %v1039 = vpop.f32.mrb[0].mxu0
        %v1040 = vadd.f32 0.0, %v1039
        %v1041 = vpop.f32.mrb[0].mxu0
        %v1042 = vpop.f32.mrb[0].mxu0
        %v1043 = vpop.f32.mrb[0].mxu0
        %1044 = vdwg.mxu0
        %1046 = vrot.lane.b32.xlu0 %v1040, 8
        %v1047 = vpop.permute.xlu0 %1046
        %vm1049 = vcmask 130112
        %1050 = vst.msk [vmem:[#allocation2] sm:$0xff] %vm1049, %v1047
        %1051 = vrot.lane.b32.xlu0 %v822, 112
        %v1052 = vpop.permute.xlu0 %1051
        %1053 = vrot.lane.b32.xlu0 %v823, 112
        %v1054 = vpop.permute.xlu0 %1053
        %v1056 = vsel %vm825, %v1052, 0
        %v1059 = vsel %vm825, %v1054, 0
        %1061 = vmatprep.subr.bf16.mxu0 0
        %1062 = vmatpush1.bf16.xpose.msra.mxu0 %v1059
        %1063 = vmatprep.subr.bf16.mxu0 0
        %1064 = vmatpush1.bf16.xpose.msra.mxu0 0
        %1065 = vmatprep.subr.bf16.mxu0 0
        %1066 = vmatpush1.bf16.xpose.msra.mxu0 0
        %1067 = vmatprep.subr.bf16.mxu0 0
        %1068 = vmatpush1.bf16.xpose.msra.mxu0 0
        %1069 = vmatprep.subr.bf16.mxu0 0
        %1070 = vmatpush1.bf16.xpose.msra.mxu0 0
        %1071 = vmatprep.subr.bf16.mxu0 0
        %1072 = vmatpush1.bf16.xpose.msra.mxu0 0
        %1073 = vmatprep.subr.bf16.mxu0 0
        %1074 = vmatpush1.bf16.xpose.msra.mxu0 0
        %1075 = vmatprep.subr.bf16.mxu0 0
        %1076 = vmatpush1.bf16.xpose.msra.mxu0 0
        %1077 = vmatprep.subr.bf16.mxu0 0
        %1078 = vmatpush1.bf16.xpose.msra.mxu0 0
        %1079 = vmatprep.subr.bf16.mxu0 0
        %1080 = vmatpush1.bf16.xpose.msra.mxu0 0
        %1081 = vmatprep.subr.bf16.mxu0 0
        %1082 = vmatpush1.bf16.xpose.msra.mxu0 0
        %1083 = vmatprep.subr.bf16.mxu0 0
        %1084 = vmatpush1.bf16.xpose.msra.mxu0 0
        %1085 = vmatprep.subr.bf16.mxu0 0
        %1086 = vmatpush1.bf16.xpose.msra.mxu0 0
        %1087 = vmatprep.subr.bf16.mxu0 0
        %1088 = vmatpush1.bf16.xpose.msra.mxu0 0
        %1089 = vmatprep.subr.bf16.mxu0 0
        %1090 = vmatpush1.bf16.xpose.msra.mxu0 0
        %1091 = vmatprep.subr.bf16.mxu0 0
        %1092 = vmatpush1.bf16.xpose.msra.mxu0 0
        %1093 = vmatprep.mubr.bf16.mxu0 0
        %1094 = vmatmul.mubr.bf16.gmra.mrb[0].mxu0 %v1056
        %v1095 = vpop.f32.mrb[0].mxu0
        %v1096 = vadd.f32 0.0, %v1095
        %v1097 = vpop.f32.mrb[0].mxu0
        %v1098 = vpop.f32.mrb[0].mxu0
        %v1099 = vpop.f32.mrb[0].mxu0
        %1100 = vdwg.mxu0
        %v1101 = vsel %vm825, %v1096, -inf
        %1102 = vmax.xlane.f32.xlu0 %v1101
        %v1103 = vpop.xlane.xlu0 %1102
        %v1104 = vsub.f32 %v1096, %v1103
        %v1105 = vmul.f32 %v1104, 1.442695
        %v1106 = vpow.pop %v1105
        %v1107 = vsel %vm825, %v1106, 0.0
        %1108 = vadd.xlane.f32.xlu0 %v1107
        %v1109 = vpop.xlane.xlu0 %1108
        %v1110 = vrcp.pop %v1109
        %v1111 = vmul.f32 %v1106, %v1110
        %v1112 = vpack.c.bf16 %v1111, %v1111
        %1113 = vrot.lane.b32.xlu0 %v824, 112
        %v1114 = vpop.permute.xlu0 %1113
        %v1116 = vsel %vm825, %v1112, 0
        %v1119 = vsel %vm887, %v1114, 0
        %1121 = vmatprep.subr.bf16.mxu0 0
        %1122 = vmatpush1.bf16.msra.mxu0 %v1119
        %1123 = vmatprep.subr.bf16.mxu0 0
        %1124 = vmatpush1.bf16.msra.mxu0 0
        %1125 = vmatprep.subr.bf16.mxu0 0
        %1126 = vmatpush1.bf16.msra.mxu0 0
        %1127 = vmatprep.subr.bf16.mxu0 0
        %1128 = vmatpush1.bf16.msra.mxu0 0
        %1129 = vmatprep.subr.bf16.mxu0 0
        %1130 = vmatpush1.bf16.msra.mxu0 0
        %1131 = vmatprep.subr.bf16.mxu0 0
        %1132 = vmatpush1.bf16.msra.mxu0 0
        %1133 = vmatprep.subr.bf16.mxu0 0
        %1134 = vmatpush1.bf16.msra.mxu0 0
        %1135 = vmatprep.subr.bf16.mxu0 0
        %1136 = vmatpush1.bf16.msra.mxu0 0
        %1137 = vmatprep.subr.bf16.mxu0 0
        %1138 = vmatpush1.bf16.msra.mxu0 0
        %1139 = vmatprep.subr.bf16.mxu0 0
        %1140 = vmatpush1.bf16.msra.mxu0 0
        %1141 = vmatprep.subr.bf16.mxu0 0
        %1142 = vmatpush1.bf16.msra.mxu0 0
        %1143 = vmatprep.subr.bf16.mxu0 0
        %1144 = vmatpush1.bf16.msra.mxu0 0
        %1145 = vmatprep.subr.bf16.mxu0 0
        %1146 = vmatpush1.bf16.msra.mxu0 0
        %1147 = vmatprep.subr.bf16.mxu0 0
        %1148 = vmatpush1.bf16.msra.mxu0 0
        %1149 = vmatprep.subr.bf16.mxu0 0
        %1150 = vmatpush1.bf16.msra.mxu0 0
        %1151 = vmatprep.subr.bf16.mxu0 0
        %1152 = vmatpush1.bf16.msra.mxu0 0
        %1153 = vmatprep.mubr.bf16.mxu0 0
        %1154 = vmatmul.mubr.bf16.gmra.mrb[0].mxu0 %v1116
        %v1155 = vpop.f32.mrb[0].mxu0
        %v1156 = vadd.f32 0.0, %v1155
        %v1157 = vpop.f32.mrb[0].mxu0
        %v1158 = vpop.f32.mrb[0].mxu0
        %v1159 = vpop.f32.mrb[0].mxu0
        %1160 = vdwg.mxu0
        %1162 = vrot.lane.b32.xlu0 %v1156, 16
        %v1163 = vpop.permute.xlu0 %1162
        %vm1165 = vcmask 195712
        %1166 = vst.msk [vmem:[#allocation2] sm:$0xff] %vm1165, %v1163
        %1167 = vrot.lane.b32.xlu0 %v822, 104
        %v1168 = vpop.permute.xlu0 %1167
        %1169 = vrot.lane.b32.xlu0 %v823, 104
        %v1170 = vpop.permute.xlu0 %1169
        %v1172 = vsel %vm825, %v1168, 0
        %v1175 = vsel %vm825, %v1170, 0
        %1177 = vmatprep.subr.bf16.mxu0 0
        %1178 = vmatpush1.bf16.xpose.msra.mxu0 %v1175
        %1179 = vmatprep.subr.bf16.mxu0 0
        %1180 = vmatpush1.bf16.xpose.msra.mxu0 0
        %1181 = vmatprep.subr.bf16.mxu0 0
        %1182 = vmatpush1.bf16.xpose.msra.mxu0 0
        %1183 = vmatprep.subr.bf16.mxu0 0
        %1184 = vmatpush1.bf16.xpose.msra.mxu0 0
        %1185 = vmatprep.subr.bf16.mxu0 0
        %1186 = vmatpush1.bf16.xpose.msra.mxu0 0
        %1187 = vmatprep.subr.bf16.mxu0 0
        %1188 = vmatpush1.bf16.xpose.msra.mxu0 0
        %1189 = vmatprep.subr.bf16.mxu0 0
        %1190 = vmatpush1.bf16.xpose.msra.mxu0 0
        %1191 = vmatprep.subr.bf16.mxu0 0
        %1192 = vmatpush1.bf16.xpose.msra.mxu0 0
        %1193 = vmatprep.subr.bf16.mxu0 0
        %1194 = vmatpush1.bf16.xpose.msra.mxu0 0
        %1195 = vmatprep.subr.bf16.mxu0 0
        %1196 = vmatpush1.bf16.xpose.msra.mxu0 0
        %1197 = vmatprep.subr.bf16.mxu0 0
        %1198 = vmatpush1.bf16.xpose.msra.mxu0 0
        %1199 = vmatprep.subr.bf16.mxu0 0
        %1200 = vmatpush1.bf16.xpose.msra.mxu0 0
        %1201 = vmatprep.subr.bf16.mxu0 0
        %1202 = vmatpush1.bf16.xpose.msra.mxu0 0
        %1203 = vmatprep.subr.bf16.mxu0 0
        %1204 = vmatpush1.bf16.xpose.msra.mxu0 0
        %1205 = vmatprep.subr.bf16.mxu0 0
        %1206 = vmatpush1.bf16.xpose.msra.mxu0 0
        %1207 = vmatprep.subr.bf16.mxu0 0
        %1208 = vmatpush1.bf16.xpose.msra.mxu0 0
        %1209 = vmatprep.mubr.bf16.mxu0 0
        %1210 = vmatmul.mubr.bf16.gmra.mrb[0].mxu0 %v1172
        %v1211 = vpop.f32.mrb[0].mxu0
        %v1212 = vadd.f32 0.0, %v1211
        %v1213 = vpop.f32.mrb[0].mxu0
        %v1214 = vpop.f32.mrb[0].mxu0
        %v1215 = vpop.f32.mrb[0].mxu0
        %1216 = vdwg.mxu0
        %v1217 = vsel %vm825, %v1212, -inf
        %1218 = vmax.xlane.f32.xlu0 %v1217
        %v1219 = vpop.xlane.xlu0 %1218
        %v1220 = vsub.f32 %v1212, %v1219
        %v1221 = vmul.f32 %v1220, 1.442695
        %v1222 = vpow.pop %v1221
        %v1223 = vsel %vm825, %v1222, 0.0
        %1224 = vadd.xlane.f32.xlu0 %v1223
        %v1225 = vpop.xlane.xlu0 %1224
        %v1226 = vrcp.pop %v1225
        %v1227 = vmul.f32 %v1222, %v1226
        %v1228 = vpack.c.bf16 %v1227, %v1227
        %1229 = vrot.lane.b32.xlu0 %v824, 104
        %v1230 = vpop.permute.xlu0 %1229
        %v1232 = vsel %vm825, %v1228, 0
        %v1235 = vsel %vm887, %v1230, 0
        %1237 = vmatprep.subr.bf16.mxu0 0
        %1238 = vmatpush1.bf16.msra.mxu0 %v1235
        %1239 = vmatprep.subr.bf16.mxu0 0
        %1240 = vmatpush1.bf16.msra.mxu0 0
        %1241 = vmatprep.subr.bf16.mxu0 0
        %1242 = vmatpush1.bf16.msra.mxu0 0
        %1243 = vmatprep.subr.bf16.mxu0 0
        %1244 = vmatpush1.bf16.msra.mxu0 0
        %1245 = vmatprep.subr.bf16.mxu0 0
        %1246 = vmatpush1.bf16.msra.mxu0 0
        %1247 = vmatprep.subr.bf16.mxu0 0
        %1248 = vmatpush1.bf16.msra.mxu0 0
        %1249 = vmatprep.subr.bf16.mxu0 0
        %1250 = vmatpush1.bf16.msra.mxu0 0
        %1251 = vmatprep.subr.bf16.mxu0 0
        %1252 = vmatpush1.bf16.msra.mxu0 0
        %1253 = vmatprep.subr.bf16.mxu0 0
        %1254 = vmatpush1.bf16.msra.mxu0 0
        %1255 = vmatprep.subr.bf16.mxu0 0
        %1256 = vmatpush1.bf16.msra.mxu0 0
        %1257 = vmatprep.subr.bf16.mxu0 0
        %1258 = vmatpush1.bf16.msra.mxu0 0
        %1259 = vmatprep.subr.bf16.mxu0 0
        %1260 = vmatpush1.bf16.msra.mxu0 0
        %1261 = vmatprep.subr.bf16.mxu0 0
        %1262 = vmatpush1.bf16.msra.mxu0 0
        %1263 = vmatprep.subr.bf16.mxu0 0
        %1264 = vmatpush1.bf16.msra.mxu0 0
        %1265 = vmatprep.subr.bf16.mxu0 0
        %1266 = vmatpush1.bf16.msra.mxu0 0
        %1267 = vmatprep.subr.bf16.mxu0 0
        %1268 = vmatpush1.bf16.msra.mxu0 0
        %1269 = vmatprep.mubr.bf16.mxu0 0
        %1270 = vmatmul.mubr.bf16.gmra.mrb[0].mxu0 %v1232
        %v1271 = vpop.f32.mrb[0].mxu0
        %v1272 = vadd.f32 0.0, %v1271
        %v1273 = vpop.f32.mrb[0].mxu0
        %v1274 = vpop.f32.mrb[0].mxu0
        %v1275 = vpop.f32.mrb[0].mxu0
        %1276 = vdwg.mxu0
        %1278 = vrot.lane.b32.xlu0 %v1272, 24
        %v1279 = vpop.permute.xlu0 %1278
        %vm1281 = vcmask 261312
        %1282 = vst.msk [vmem:[#allocation2] sm:$0xff] %vm1281, %v1279
        %v1283 = vld [vmem:[#allocation2] sm:$0xff]
        %v1284 = vpack.c.bf16 %v1283, %v1283
        %v1285 = vld [vmem:[%s9] sm:$0xf]
        %v1286 = vld [vmem:[%s9 + $0x4] sm:$0xf]
        %v1287 = vld [vmem:[%s9 + $0x8] sm:$0xf]
        %v1288 = vld [vmem:[%s9 + $0xc] sm:$0xf]
        %v1289 = vld [vmem:[%s10] sm:$0x1]
        %v1291 = vlaneseq
        %v1292 = vshrl.u32 %v1291, 7
        %v1293 = vsub.s32 0, %v1292
        %v1294 = vrot.slane %v1289, %v1293
        %v1300 = vunpack.c.l.b16 %v1285
        %v1301 = vunpack.c.l.b16 %v1286
        %v1302 = vunpack.c.l.b16 %v1287
        %v1303 = vunpack.c.l.b16 %v1288
        %v1304 = vpack.c.b16 %v1301, %v1300
        %v1305 = vpack.c.b16 %v1303, %v1302
        %v1309 = vsel %vm643, %v1284, 0
        %1311 = vmatprep.subr.bf16.mxu0 0
        %1312 = vmatpush1.bf16.msra.mxu0 %v1304
        %1313 = vmatprep.subr.bf16.mxu0 0
        %1314 = vmatpush1.bf16.msra.mxu0 %v1305
        %1315 = vmatprep.subr.bf16.mxu0 0
        %1316 = vmatpush1.bf16.msra.mxu0 0
        %1317 = vmatprep.subr.bf16.mxu0 0
        %1318 = vmatpush1.bf16.msra.mxu0 0
        %1319 = vmatprep.subr.bf16.mxu0 0
        %1320 = vmatpush1.bf16.msra.mxu0 0
        %1321 = vmatprep.subr.bf16.mxu0 0
        %1322 = vmatpush1.bf16.msra.mxu0 0
        %1323 = vmatprep.subr.bf16.mxu0 0
        %1324 = vmatpush1.bf16.msra.mxu0 0
        %1325 = vmatprep.subr.bf16.mxu0 0
        %1326 = vmatpush1.bf16.msra.mxu0 0
        %1327 = vmatprep.subr.bf16.mxu0 0
        %1328 = vmatpush1.bf16.msra.mxu0 0
        %1329 = vmatprep.subr.bf16.mxu0 0
        %1330 = vmatpush1.bf16.msra.mxu0 0
        %1331 = vmatprep.subr.bf16.mxu0 0
        %1332 = vmatpush1.bf16.msra.mxu0 0
        %1333 = vmatprep.subr.bf16.mxu0 0
        %1334 = vmatpush1.bf16.msra.mxu0 0
        %1335 = vmatprep.subr.bf16.mxu0 0
        %1336 = vmatpush1.bf16.msra.mxu0 0
        %1337 = vmatprep.subr.bf16.mxu0 0
        %1338 = vmatpush1.bf16.msra.mxu0 0
        %1339 = vmatprep.subr.bf16.mxu0 0
        %1340 = vmatpush1.bf16.msra.mxu0 0
        %1341 = vmatprep.subr.bf16.mxu0 0
        %1342 = vmatpush1.bf16.msra.mxu0 0
        %1343 = vmatprep.mubr.bf16.mxu0 0
        %1344 = vmatmul.mubr.bf16.gmra.mrb[0].mxu0 %v1309
        %v1345 = vpop.f32.mrb[0].mxu0
        %v1346 = vadd.f32 %v1294, %v1345
        %v1347 = vpop.f32.mrb[0].mxu0
        %v1348 = vpop.f32.mrb[0].mxu0
        %v1349 = vpop.f32.mrb[0].mxu0
        %1350 = vdwg.mxu0
        %v1351 = vadd.f32 %v606, %v1346
        %v1352 = vpack.c.bf16 %v1351, %v1351
        %v1353 = vld [vmem:[%s11] sm:$0xf]
        %v1354 = vld [vmem:[%s11 + $0x4] sm:$0xf]
        %v1355 = vld [vmem:[%s11 + $0x8] sm:$0xf]
        %v1356 = vld [vmem:[%s11 + $0xc] sm:$0xf]
        %v1357 = vld [vmem:[%s12] sm:$0x1]
        %v1359 = vlaneseq
        %v1360 = vshrl.u32 %v1359, 7
        %v1361 = vsub.s32 0, %v1360
        %v1362 = vrot.slane %v1357, %v1361
        %v1368 = vunpack.c.l.b16 %v1353
        %v1369 = vunpack.c.l.b16 %v1354
        %v1370 = vunpack.c.l.b16 %v1355
        %v1371 = vunpack.c.l.b16 %v1356
        %v1372 = vpack.c.b16 %v1369, %v1368
        %v1373 = vpack.c.b16 %v1371, %v1370
        %v1377 = vsel %vm643, %v1352, 0
        %1379 = vmatprep.subr.bf16.mxu0 0
        %1380 = vmatpush1.bf16.msra.mxu0 %v1372
        %1381 = vmatprep.subr.bf16.mxu0 0
        %1382 = vmatpush1.bf16.msra.mxu0 %v1373
        %1383 = vmatprep.subr.bf16.mxu0 0
        %1384 = vmatpush1.bf16.msra.mxu0 0
        %1385 = vmatprep.subr.bf16.mxu0 0
        %1386 = vmatpush1.bf16.msra.mxu0 0
        %1387 = vmatprep.subr.bf16.mxu0 0
        %1388 = vmatpush1.bf16.msra.mxu0 0
        %1389 = vmatprep.subr.bf16.mxu0 0
        %1390 = vmatpush1.bf16.msra.mxu0 0
        %1391 = vmatprep.subr.bf16.mxu0 0
        %1392 = vmatpush1.bf16.msra.mxu0 0
        %1393 = vmatprep.subr.bf16.mxu0 0
        %1394 = vmatpush1.bf16.msra.mxu0 0
        %1395 = vmatprep.subr.bf16.mxu0 0
        %1396 = vmatpush1.bf16.msra.mxu0 0
        %1397 = vmatprep.subr.bf16.mxu0 0
        %1398 = vmatpush1.bf16.msra.mxu0 0
        %1399 = vmatprep.subr.bf16.mxu0 0
        %1400 = vmatpush1.bf16.msra.mxu0 0
        %1401 = vmatprep.subr.bf16.mxu0 0
        %1402 = vmatpush1.bf16.msra.mxu0 0
        %1403 = vmatprep.subr.bf16.mxu0 0
        %1404 = vmatpush1.bf16.msra.mxu0 0
        %1405 = vmatprep.subr.bf16.mxu0 0
        %1406 = vmatpush1.bf16.msra.mxu0 0
        %1407 = vmatprep.subr.bf16.mxu0 0
        %1408 = vmatpush1.bf16.msra.mxu0 0
        %1409 = vmatprep.subr.bf16.mxu0 0
        %1410 = vmatpush1.bf16.msra.mxu0 0
        %1411 = vmatprep.mubr.bf16.mxu0 0
        %1412 = vmatmul.mubr.bf16.gmra.mrb[0].mxu0 %v1377
        %v1413 = vpop.f32.mrb[0].mxu0
        %v1414 = vadd.f32 %v1362, %v1413
        %v1415 = vpop.f32.mrb[0].mxu0
        %v1416 = vpop.f32.mrb[0].mxu0
        %v1417 = vpop.f32.mrb[0].mxu0
        %1418 = vdwg.mxu0
        %v1419 = vmax.f32 %v1414, 0.0
        %v1420 = vpack.c.bf16 %v1419, %v1419
        %v1421 = vld [vmem:[%s13] sm:$0xf]
        %v1422 = vld [vmem:[%s13 + $0x4] sm:$0xf]
        %v1423 = vld [vmem:[%s13 + $0x8] sm:$0xf]
        %v1424 = vld [vmem:[%s13 + $0xc] sm:$0xf]
        %v1425 = vld [vmem:[%s13 + $0x10] sm:$0xf]
        %v1426 = vld [vmem:[%s13 + $0x14] sm:$0xf]
        %v1427 = vld [vmem:[%s13 + $0x18] sm:$0xf]
        %v1428 = vld [vmem:[%s13 + $0x1c] sm:$0xf]
        %v1429 = vld [vmem:[%s13 + $0x20] sm:$0xf]
        %v1430 = vld [vmem:[%s13 + $0x24] sm:$0xf]
        %v1431 = vld [vmem:[%s13 + $0x28] sm:$0xf]
        %v1432 = vld [vmem:[%s13 + $0x2c] sm:$0xf]
        %v1433 = vld [vmem:[%s13 + $0x30] sm:$0xf]
        %v1434 = vld [vmem:[%s13 + $0x34] sm:$0xf]
        %v1435 = vld [vmem:[%s13 + $0x38] sm:$0xf]
        %v1436 = vld [vmem:[%s13 + $0x3c] sm:$0xf]
        %v1437 = vld [vmem:[%s14] sm:$0x1]
        %v1439 = vlaneseq
        %v1440 = vshrl.u32 %v1439, 7
        %v1441 = vsub.s32 0, %v1440
        %v1442 = vrot.slane %v1437, %v1441
        %v1460 = vunpack.c.l.b16 %v1421
        %v1461 = vunpack.c.l.b16 %v1422
        %v1462 = vunpack.c.l.b16 %v1423
        %v1463 = vunpack.c.l.b16 %v1424
        %v1464 = vunpack.c.l.b16 %v1425
        %v1465 = vunpack.c.l.b16 %v1426
        %v1466 = vunpack.c.l.b16 %v1427
        %v1467 = vunpack.c.l.b16 %v1428
        %v1468 = vunpack.c.l.b16 %v1429
        %v1469 = vunpack.c.l.b16 %v1430
        %v1470 = vunpack.c.l.b16 %v1431
        %v1471 = vunpack.c.l.b16 %v1432
        %v1472 = vunpack.c.l.b16 %v1433
        %v1473 = vunpack.c.l.b16 %v1434
        %v1474 = vunpack.c.l.b16 %v1435
        %v1475 = vunpack.c.l.b16 %v1436
        %v1476 = vpack.c.b16 %v1461, %v1460
        %v1477 = vpack.c.b16 %v1463, %v1462
        %v1478 = vpack.c.b16 %v1465, %v1464
        %v1479 = vpack.c.b16 %v1467, %v1466
        %v1480 = vpack.c.b16 %v1469, %v1468
        %v1481 = vpack.c.b16 %v1471, %v1470
        %v1482 = vpack.c.b16 %v1473, %v1472
        %v1483 = vpack.c.b16 %v1475, %v1474
        %1492 = vmatprep.subr.bf16.mxu0 0
        %1493 = vmatpush1.bf16.msra.mxu0 %v1476
        %1494 = vmatprep.subr.bf16.mxu0 0
        %1495 = vmatpush1.bf16.msra.mxu0 %v1477
        %1496 = vmatprep.subr.bf16.mxu0 0
        %1497 = vmatpush1.bf16.msra.mxu0 %v1478
        %1498 = vmatprep.subr.bf16.mxu0 0
        %1499 = vmatpush1.bf16.msra.mxu0 %v1479
        %1500 = vmatprep.subr.bf16.mxu0 0
        %1501 = vmatpush1.bf16.msra.mxu0 %v1480
        %1502 = vmatprep.subr.bf16.mxu0 0
        %1503 = vmatpush1.bf16.msra.mxu0 %v1481
        %1504 = vmatprep.subr.bf16.mxu0 0
        %1505 = vmatpush1.bf16.msra.mxu0 %v1482
        %1506 = vmatprep.subr.bf16.mxu0 0
        %1507 = vmatpush1.bf16.msra.mxu0 %v1483
        %1508 = vmatprep.subr.bf16.mxu0 0
        %1509 = vmatpush1.bf16.msra.mxu0 0
        %1510 = vmatprep.subr.bf16.mxu0 0
        %1511 = vmatpush1.bf16.msra.mxu0 0
        %1512 = vmatprep.subr.bf16.mxu0 0
        %1513 = vmatpush1.bf16.msra.mxu0 0
        %1514 = vmatprep.subr.bf16.mxu0 0
        %1515 = vmatpush1.bf16.msra.mxu0 0
        %1516 = vmatprep.subr.bf16.mxu0 0
        %1517 = vmatpush1.bf16.msra.mxu0 0
        %1518 = vmatprep.subr.bf16.mxu0 0
        %1519 = vmatpush1.bf16.msra.mxu0 0
        %1520 = vmatprep.subr.bf16.mxu0 0
        %1521 = vmatpush1.bf16.msra.mxu0 0
        %1522 = vmatprep.subr.bf16.mxu0 0
        %1523 = vmatpush1.bf16.msra.mxu0 0
        %1524 = vmatprep.mubr.bf16.mxu0 0
        %1525 = vmatmul.mubr.bf16.gmra.mrb[0].mxu0 %v1420
        %v1526 = vpop.f32.mrb[0].mxu0
        %v1527 = vadd.f32 %v1442, %v1526
        %v1528 = vpop.f32.mrb[0].mxu0
        %v1529 = vpop.f32.mrb[0].mxu0
        %v1530 = vpop.f32.mrb[0].mxu0
        %1531 = vdwg.mxu0
        %v1532 = vadd.f32 %v1351, %v1527
        %v1533 = vpack.c.bf16 %v1532, %v1532
        %v1534 = vld [vmem:[%s15] sm:$0xf]
        %v1535 = vld [vmem:[%s15 + $0x4] sm:$0xf]
        %v1536 = vld [vmem:[%s15 + $0x8] sm:$0xf]
        %v1537 = vld [vmem:[%s15 + $0xc] sm:$0xf]
        %v1538 = vld [vmem:[%s16] sm:$0x1]
        %v1540 = vlaneseq
        %v1541 = vshrl.u32 %v1540, 7
        %v1542 = vsub.s32 0, %v1541
        %v1543 = vrot.slane %v1538, %v1542
        %v1549 = vunpack.c.l.b16 %v1534
        %v1550 = vunpack.c.l.b16 %v1535
        %v1551 = vunpack.c.l.b16 %v1536
        %v1552 = vunpack.c.l.b16 %v1537
        %v1553 = vpack.c.b16 %v1550, %v1549
        %v1554 = vpack.c.b16 %v1552, %v1551
        %v1558 = vsel %vm643, %v1533, 0
        %1560 = vmatprep.subr.bf16.mxu0 0
        %1561 = vmatpush1.bf16.msra.mxu0 %v1553
        %1562 = vmatprep.subr.bf16.mxu0 0
        %1563 = vmatpush1.bf16.msra.mxu0 %v1554
        %1564 = vmatprep.subr.bf16.mxu0 0
        %1565 = vmatpush1.bf16.msra.mxu0 0
        %1566 = vmatprep.subr.bf16.mxu0 0
        %1567 = vmatpush1.bf16.msra.mxu0 0
        %1568 = vmatprep.subr.bf16.mxu0 0
        %1569 = vmatpush1.bf16.msra.mxu0 0
        %1570 = vmatprep.subr.bf16.mxu0 0
        %1571 = vmatpush1.bf16.msra.mxu0 0
        %1572 = vmatprep.subr.bf16.mxu0 0
        %1573 = vmatpush1.bf16.msra.mxu0 0
        %1574 = vmatprep.subr.bf16.mxu0 0
        %1575 = vmatpush1.bf16.msra.mxu0 0
        %1576 = vmatprep.subr.bf16.mxu0 0
        %1577 = vmatpush1.bf16.msra.mxu0 0
        %1578 = vmatprep.subr.bf16.mxu0 0
        %1579 = vmatpush1.bf16.msra.mxu0 0
        %1580 = vmatprep.subr.bf16.mxu0 0
        %1581 = vmatpush1.bf16.msra.mxu0 0
        %1582 = vmatprep.subr.bf16.mxu0 0
        %1583 = vmatpush1.bf16.msra.mxu0 0
        %1584 = vmatprep.subr.bf16.mxu0 0
        %1585 = vmatpush1.bf16.msra.mxu0 0
        %1586 = vmatprep.subr.bf16.mxu0 0
        %1587 = vmatpush1.bf16.msra.mxu0 0
        %1588 = vmatprep.subr.bf16.mxu0 0
        %1589 = vmatpush1.bf16.msra.mxu0 0
        %1590 = vmatprep.subr.bf16.mxu0 0
        %1591 = vmatpush1.bf16.msra.mxu0 0
        %1592 = vmatprep.mubr.bf16.mxu0 0
        %1593 = vmatmul.mubr.bf16.gmra.mrb[0].mxu0 %v1558
        %v1594 = vpop.f32.mrb[0].mxu0
        %v1595 = vadd.f32 %v1543, %v1594
        %v1596 = vpop.f32.mrb[0].mxu0
        %v1597 = vpop.f32.mrb[0].mxu0
        %v1598 = vpop.f32.mrb[0].mxu0
        %1599 = vdwg.mxu0
        %1600 = vst [vmem:[%s541] sm:$0xff] %v1595
        %s1601 = sand.u32 %s401, 1
        %s1602 = scalar_lea.sflag [#allocation4], %s1601
        %s1603 = sand.u32 %s401, 1
        %s1604 = smul.addr %s1603, 8
        %s1605 = scalar_lea.vmem [#allocation3], %s1604
        // Predicated region
        $region89: #{tpu_custom_call.1} parent=87 // pred_check
          %p1606 = pneg %p411
        $region90: #{tpu_custom_call.1} parent=87 // pred_check_branch
          %1608 = sbr.rel (%p1606) target = $region92
        $region91: #{tpu_custom_call.1} parent=87 // pred_region
          %s1610 = ssub.s32 128, 128
          %1611 = vsyncadd %s1602, %s1610
          %s1612 = smul.addr %s31, 128
          %s1613 = scalar_lea.hbm %s17, %s1612
          %s1615 = sshll.u32 %s1605, 4
          %s1616 = int_to_ptr.vmem [resolvable:$true] %s1615
          %1618 = dma.vmem_to_hbm [thread:$0]  %s1616, 128, %s1613, %s1602
        $region92: #{tpu_custom_call.1} parent=87 // pred_fallthru
          _
      $region88: #{tpu_custom_call.1} parent=5 // pred_fallthru
        _
      %p1619 = scmp.le.s32.totalorder 2, %s26
      // Predicated region
      $region93: #{tpu_custom_call.1} parent=5 // pred_check
        %p1620 = pneg %p1619
      $region94: #{tpu_custom_call.1} parent=5 // pred_check_branch
        %1622 = sbr.rel (%p1620) target = $region96
      $region95: #{tpu_custom_call.1} parent=5 // pred_region
        %s1623 = ssub.s32 %s26, 2
        // Predicated region
        $region97: #{tpu_custom_call.1} parent=95 // pred_check
          %p1624 = pneg %p417
        $region98: #{tpu_custom_call.1} parent=95 // pred_check_branch
          %1626 = sbr.rel (%p1624) target = $region100
        $region99: #{tpu_custom_call.1} parent=95 // pred_region
          %s1627 = sand.u32 %s402, 1
          %s1628 = scalar_lea.sflag [#allocation4], %s1627
          %s1629 = sand.u32 %s402, 1
          %s1630 = smul.addr %s1629, 8
          %s1631 = scalar_lea.vmem [#allocation3], %s1630
          %1632 = dma.done %s1628, 128
        $region100: #{tpu_custom_call.1} parent=95 // pred_fallthru
          _
      $region96: #{tpu_custom_call.1} parent=5 // pred_fallthru
        _
    $region6: #{tpu_custom_call.1} parent=1 // loop_footer
      %s30 = sadd.s32 1, %s26
    $region7: #{tpu_custom_call.1} parent=1 // loop_footer_branch
      %25 = sbr.rel target = $region3
    $region8: #{tpu_custom_call.1} parent=1 // loop_exit
      _
    %1633 = vsyncpa [#allocation4], 1
    %s1634 = scalar_lea.sflag [#allocation4], 1
    %1635 = vsyncpa %s1634, 1

// kernel: tpu_custom_call.1
$region0: #{tpu_custom_call.1}
  #allocation0 [shape = 'u32[]', space=smem, size = 0x4, offset = 0x4, fixed_abs, tag = 'smem constant byte address 0x4 - core index']
  #allocation1 [shape = 'u32[144,128]{1,0:T(1,128)}', space=vmem, size = 0x12000, scoped, tag = 'internal scratch']
  #allocation2 [shape = 'f32[8,32]{1,0:T(8,128)}', space=vmem, size = 0x1000, scoped, tag = 'scratch operand']
  %s0 = inlined_call_operand.vmem [shape: f32[2,24,16], index: 0, kind: input, shape index: {}]
  %s1 = inlined_call_operand.vmem [shape: bf16[16,32], index: 1, kind: input, shape index: {}]
  %s2 = inlined_call_operand.vmem [shape: f32[24,32], index: 2, kind: input, shape index: {}]
  %s3 = inlined_call_operand.vmem [shape: bf16[32,32], index: 3, kind: input, shape index: {}]
  %s4 = inlined_call_operand.vmem [shape: f32[1,32], index: 4, kind: input, shape index: {}]
  %s5 = inlined_call_operand.vmem [shape: bf16[32,32], index: 5, kind: input, shape index: {}]
  %s6 = inlined_call_operand.vmem [shape: f32[1,32], index: 6, kind: input, shape index: {}]
  %s7 = inlined_call_operand.vmem [shape: bf16[32,32], index: 7, kind: input, shape index: {}]
  %s8 = inlined_call_operand.vmem [shape: f32[1,32], index: 8, kind: input, shape index: {}]
  %s9 = inlined_call_operand.vmem [shape: bf16[32,32], index: 9, kind: input, shape index: {}]
  %s10 = inlined_call_operand.vmem [shape: f32[1,32], index: 10, kind: input, shape index: {}]
  %s11 = inlined_call_operand.vmem [shape: bf16[32,128], index: 11, kind: input, shape index: {}]
  %s12 = inlined_call_operand.vmem [shape: f32[1,128], index: 12, kind: input, shape index: {}]
  %s13 = inlined_call_operand.vmem [shape: bf16[128,32], index: 13, kind: input, shape index: {}]
  %s14 = inlined_call_operand.vmem [shape: f32[1,32], index: 14, kind: input, shape index: {}]
  %s15 = inlined_call_operand.vmem [shape: bf16[32,128], index: 15, kind: input, shape index: {}]
  %s16 = inlined_call_operand.vmem [shape: f32[1,128], index: 16, kind: input, shape index: {}]
  %s17 = inlined_call_operand.hbm [shape: f32[2,8,128], index: 17, kind: output, shape index: {}]
  %s18 = sld [smem:[#allocation0]]
  $region101: #{tpu_custom_call.1} parent=0
    _
  %s20 = ssub.s32 1, %s18
  %s21 = scalar_select 0, %s20, %s18
  $region1: #{tpu_custom_call.1} parent=0
    #allocation3 [shape = 'u8[8192]{0}', space=vmem, size = 0x2000, scoped, tag = 'output window, operand 0']
    #allocation4 [shape = 's32[2]{0}', space=sflag, size = 0x8, scoped, tag = 'scoped memory for tpu_custom_call.1']
    %22 = vsyncpa [#allocation4], 0
    %s23 = scalar_lea.sflag [#allocation4], 1
    %24 = vsyncpa %s23, 0
    loop: start=0, step=1, limit=4
    $region2: #{tpu_custom_call.1} parent=1 // loop_pre_header
      _
    $region3: #{tpu_custom_call.1} parent=1 // loop_header
      %s26 = sphi 0, %s30
      %p27 = scmp.ge.s32.totalorder %s26, 4
      %s36 = sphi 0, %s38
      %s39 = sphi 0, %s36
      %s40 = sphi 0, %s39
      %s56 = sphi 0, %s40
      %s60 = sphi 0, %s60
      %s62 = sphi 0, %s60
      %s63 = sphi 0, %s62
      %s77 = sphi 0, %s63
      %s81 = sphi 0, %s81
      %s83 = sphi 0, %s81
      %s84 = sphi 0, %s83
      %s98 = sphi 0, %s84
      %s102 = sphi 0, %s102
      %s104 = sphi 0, %s102
      %s105 = sphi 0, %s104
      %s119 = sphi 0, %s105
      %s123 = sphi 0, %s123
      %s125 = sphi 0, %s123
      %s126 = sphi 0, %s125
      %s140 = sphi 0, %s126
      %s144 = sphi 0, %s144
      %s146 = sphi 0, %s144
      %s147 = sphi 0, %s146
      %s161 = sphi 0, %s147
      %s165 = sphi 0, %s165
      %s167 = sphi 0, %s165
      %s168 = sphi 0, %s167
      %s182 = sphi 0, %s168
      %s186 = sphi 0, %s186
      %s188 = sphi 0, %s186
      %s189 = sphi 0, %s188
      %s203 = sphi 0, %s189
      %s207 = sphi 0, %s207
      %s209 = sphi 0, %s207
      %s210 = sphi 0, %s209
      %s224 = sphi 0, %s210
      %s228 = sphi 0, %s228
      %s230 = sphi 0, %s228
      %s231 = sphi 0, %s230
      %s245 = sphi 0, %s231
      %s249 = sphi 0, %s249
      %s251 = sphi 0, %s249
      %s252 = sphi 0, %s251
      %s266 = sphi 0, %s252
      %s270 = sphi 0, %s270
      %s272 = sphi 0, %s270
      %s273 = sphi 0, %s272
      %s287 = sphi 0, %s273
      %s291 = sphi 0, %s291
      %s293 = sphi 0, %s291
      %s294 = sphi 0, %s293
      %s308 = sphi 0, %s294
      %s312 = sphi 0, %s312
      %s314 = sphi 0, %s312
      %s315 = sphi 0, %s314
      %s329 = sphi 0, %s315
      %s333 = sphi 0, %s333
      %s335 = sphi 0, %s333
      %s336 = sphi 0, %s335
      %s350 = sphi 0, %s336
      %s354 = sphi 0, %s354
      %s356 = sphi 0, %s354
      %s357 = sphi 0, %s356
      %s371 = sphi 0, %s357
      %s375 = sphi 0, %s375
      %s377 = sphi 0, %s375
      %s378 = sphi 0, %s377
      %s392 = sphi 0, %s378
      %s398 = sphi 0, %s400
      %s401 = sphi 0, %s398
      %s402 = sphi 0, %s401
      %s418 = sphi 0, %s402
    $region4: #{tpu_custom_call.1} parent=1 // loop_header_branch
      %29 = sbr.rel (%p27) target = $region8
    $region5: #{tpu_custom_call.1} parent=1 // loop_body
      %s31 = ssub.s32 %s26, 1
      %s32 = ssub.s32 %s26, 2
      %s33 = sadd.s32 %s26, 1
      %s34 = ssub.s32 %s26, %s33
      %p35 = scmp.eq.s32.totalorder %s34, 0
      %s37 = sadd.s32 %s36, 1
      %s38 = scalar_select %p35, %s36, %s37
      %p41 = pneg %p35
      %p42 = scmp.eq.s32.totalorder %s26, 1
      %p43 = por %p41, %p42
      %p44 = scmp.ne.s32.totalorder %s36, %s39
      %p45 = scmp.eq.s32.totalorder %s26, 0
      %p46 = por %p44, %p45
      %p47 = scmp.ne.s32.totalorder %s36, %s39
      %p48 = scmp.eq.s32.totalorder %s31, 1
      %p49 = por %p47, %p48
      %p50 = scmp.ne.s32.totalorder %s39, %s40
      %p51 = scmp.eq.s32.totalorder %s31, 0
      %p52 = por %p50, %p51
      %p53 = scmp.ne.s32.totalorder %s39, %s40
      %p54 = scmp.eq.s32.totalorder %s32, 1
      %p55 = por %p53, %p54
      %p57 = scmp.ne.s32.totalorder %s40, %s56
      %p58 = scmp.eq.s32.totalorder %s32, 0
      %p59 = por %p57, %p58
      %s61 = sadd.s32 %s60, 1
      %p64 = scmp.eq.s32.totalorder %s26, 1
      %p65 = scmp.ne.s32.totalorder %s60, %s62
      %p66 = scmp.eq.s32.totalorder %s26, 0
      %p67 = por %p65, %p66
      %p68 = scmp.ne.s32.totalorder %s60, %s62
      %p69 = scmp.eq.s32.totalorder %s31, 1
      %p70 = por %p68, %p69
      %p71 = scmp.ne.s32.totalorder %s62, %s63
      %p72 = scmp.eq.s32.totalorder %s31, 0
      %p73 = por %p71, %p72
      %p74 = scmp.ne.s32.totalorder %s62, %s63
      %p75 = scmp.eq.s32.totalorder %s32, 1
      %p76 = por %p74, %p75
      %p78 = scmp.ne.s32.totalorder %s63, %s77
      %p79 = scmp.eq.s32.totalorder %s32, 0
      %p80 = por %p78, %p79
      %s82 = sadd.s32 %s81, 1
      %p85 = scmp.eq.s32.totalorder %s26, 1
      %p86 = scmp.ne.s32.totalorder %s81, %s83
      %p87 = scmp.eq.s32.totalorder %s26, 0
      %p88 = por %p86, %p87
      %p89 = scmp.ne.s32.totalorder %s81, %s83
      %p90 = scmp.eq.s32.totalorder %s31, 1
      %p91 = por %p89, %p90
      %p92 = scmp.ne.s32.totalorder %s83, %s84
      %p93 = scmp.eq.s32.totalorder %s31, 0
      %p94 = por %p92, %p93
      %p95 = scmp.ne.s32.totalorder %s83, %s84
      %p96 = scmp.eq.s32.totalorder %s32, 1
      %p97 = por %p95, %p96
      %p99 = scmp.ne.s32.totalorder %s84, %s98
      %p100 = scmp.eq.s32.totalorder %s32, 0
      %p101 = por %p99, %p100
      %s103 = sadd.s32 %s102, 1
      %p106 = scmp.eq.s32.totalorder %s26, 1
      %p107 = scmp.ne.s32.totalorder %s102, %s104
      %p108 = scmp.eq.s32.totalorder %s26, 0
      %p109 = por %p107, %p108
      %p110 = scmp.ne.s32.totalorder %s102, %s104
      %p111 = scmp.eq.s32.totalorder %s31, 1
      %p112 = por %p110, %p111
      %p113 = scmp.ne.s32.totalorder %s104, %s105
      %p114 = scmp.eq.s32.totalorder %s31, 0
      %p115 = por %p113, %p114
      %p116 = scmp.ne.s32.totalorder %s104, %s105
      %p117 = scmp.eq.s32.totalorder %s32, 1
      %p118 = por %p116, %p117
      %p120 = scmp.ne.s32.totalorder %s105, %s119
      %p121 = scmp.eq.s32.totalorder %s32, 0
      %p122 = por %p120, %p121
      %s124 = sadd.s32 %s123, 1
      %p127 = scmp.eq.s32.totalorder %s26, 1
      %p128 = scmp.ne.s32.totalorder %s123, %s125
      %p129 = scmp.eq.s32.totalorder %s26, 0
      %p130 = por %p128, %p129
      %p131 = scmp.ne.s32.totalorder %s123, %s125
      %p132 = scmp.eq.s32.totalorder %s31, 1
      %p133 = por %p131, %p132
      %p134 = scmp.ne.s32.totalorder %s125, %s126
      %p135 = scmp.eq.s32.totalorder %s31, 0
      %p136 = por %p134, %p135
      %p137 = scmp.ne.s32.totalorder %s125, %s126
      %p138 = scmp.eq.s32.totalorder %s32, 1
      %p139 = por %p137, %p138
      %p141 = scmp.ne.s32.totalorder %s126, %s140
      %p142 = scmp.eq.s32.totalorder %s32, 0
      %p143 = por %p141, %p142
      %s145 = sadd.s32 %s144, 1
      %p148 = scmp.eq.s32.totalorder %s26, 1
      %p149 = scmp.ne.s32.totalorder %s144, %s146
      %p150 = scmp.eq.s32.totalorder %s26, 0
      %p151 = por %p149, %p150
      %p152 = scmp.ne.s32.totalorder %s144, %s146
      %p153 = scmp.eq.s32.totalorder %s31, 1
      %p154 = por %p152, %p153
      %p155 = scmp.ne.s32.totalorder %s146, %s147
      %p156 = scmp.eq.s32.totalorder %s31, 0
      %p157 = por %p155, %p156
      %p158 = scmp.ne.s32.totalorder %s146, %s147
      %p159 = scmp.eq.s32.totalorder %s32, 1
      %p160 = por %p158, %p159
      %p162 = scmp.ne.s32.totalorder %s147, %s161
      %p163 = scmp.eq.s32.totalorder %s32, 0
      %p164 = por %p162, %p163
      %s166 = sadd.s32 %s165, 1
      %p169 = scmp.eq.s32.totalorder %s26, 1
      %p170 = scmp.ne.s32.totalorder %s165, %s167
      %p171 = scmp.eq.s32.totalorder %s26, 0
      %p172 = por %p170, %p171
      %p173 = scmp.ne.s32.totalorder %s165, %s167
      %p174 = scmp.eq.s32.totalorder %s31, 1
      %p175 = por %p173, %p174
      %p176 = scmp.ne.s32.totalorder %s167, %s168
      %p177 = scmp.eq.s32.totalorder %s31, 0
      %p178 = por %p176, %p177
      %p179 = scmp.ne.s32.totalorder %s167, %s168
      %p180 = scmp.eq.s32.totalorder %s32, 1
      %p181 = por %p179, %p180
      %p183 = scmp.ne.s32.totalorder %s168, %s182
      %p184 = scmp.eq.s32.totalorder %s32, 0
      %p185 = por %p183, %p184
      %s187 = sadd.s32 %s186, 1
      %p190 = scmp.eq.s32.totalorder %s26, 1
      %p191 = scmp.ne.s32.totalorder %s186, %s188
      %p192 = scmp.eq.s32.totalorder %s26, 0
      %p193 = por %p191, %p192
      %p194 = scmp.ne.s32.totalorder %s186, %s188
      %p195 = scmp.eq.s32.totalorder %s31, 1
      %p196 = por %p194, %p195
      %p197 = scmp.ne.s32.totalorder %s188, %s189
      %p198 = scmp.eq.s32.totalorder %s31, 0
      %p199 = por %p197, %p198
      %p200 = scmp.ne.s32.totalorder %s188, %s189
      %p201 = scmp.eq.s32.totalorder %s32, 1
      %p202 = por %p200, %p201
      %p204 = scmp.ne.s32.totalorder %s189, %s203
      %p205 = scmp.eq.s32.totalorder %s32, 0
      %p206 = por %p204, %p205
      %s208 = sadd.s32 %s207, 1
      %p211 = scmp.eq.s32.totalorder %s26, 1
      %p212 = scmp.ne.s32.totalorder %s207, %s209
      %p213 = scmp.eq.s32.totalorder %s26, 0
      %p214 = por %p212, %p213
      %p215 = scmp.ne.s32.totalorder %s207, %s209
      %p216 = scmp.eq.s32.totalorder %s31, 1
      %p217 = por %p215, %p216
      %p218 = scmp.ne.s32.totalorder %s209, %s210
      %p219 = scmp.eq.s32.totalorder %s31, 0
      %p220 = por %p218, %p219
      %p221 = scmp.ne.s32.totalorder %s209, %s210
      %p222 = scmp.eq.s32.totalorder %s32, 1
      %p223 = por %p221, %p222
      %p225 = scmp.ne.s32.totalorder %s210, %s224
      %p226 = scmp.eq.s32.totalorder %s32, 0
      %p227 = por %p225, %p226
      %s229 = sadd.s32 %s228, 1
      %p232 = scmp.eq.s32.totalorder %s26, 1
      %p233 = scmp.ne.s32.totalorder %s228, %s230
      %p234 = scmp.eq.s32.totalorder %s26, 0
      %p235 = por %p233, %p234
      %p236 = scmp.ne.s32.totalorder %s228, %s230
      %p237 = scmp.eq.s32.totalorder %s31, 1
      %p238 = por %p236, %p237
      %p239 = scmp.ne.s32.totalorder %s230, %s231
      %p240 = scmp.eq.s32.totalorder %s31, 0
      %p241 = por %p239, %p240
      %p242 = scmp.ne.s32.totalorder %s230, %s231
      %p243 = scmp.eq.s32.totalorder %s32, 1
      %p244 = por %p242, %p243
      %p246 = scmp.ne.s32.totalorder %s231, %s245
      %p247 = scmp.eq.s32.totalorder %s32, 0
      %p248 = por %p246, %p247
      %s250 = sadd.s32 %s249, 1
      %p253 = scmp.eq.s32.totalorder %s26, 1
      %p254 = scmp.ne.s32.totalorder %s249, %s251
      %p255 = scmp.eq.s32.totalorder %s26, 0
      %p256 = por %p254, %p255
      %p257 = scmp.ne.s32.totalorder %s249, %s251
      %p258 = scmp.eq.s32.totalorder %s31, 1
      %p259 = por %p257, %p258
      %p260 = scmp.ne.s32.totalorder %s251, %s252
      %p261 = scmp.eq.s32.totalorder %s31, 0
      %p262 = por %p260, %p261
      %p263 = scmp.ne.s32.totalorder %s251, %s252
      %p264 = scmp.eq.s32.totalorder %s32, 1
      %p265 = por %p263, %p264
      %p267 = scmp.ne.s32.totalorder %s252, %s266
      %p268 = scmp.eq.s32.totalorder %s32, 0
      %p269 = por %p267, %p268
      %s271 = sadd.s32 %s270, 1
      %p274 = scmp.eq.s32.totalorder %s26, 1
      %p275 = scmp.ne.s32.totalorder %s270, %s272
      %p276 = scmp.eq.s32.totalorder %s26, 0
      %p277 = por %p275, %p276
      %p278 = scmp.ne.s32.totalorder %s270, %s272
      %p279 = scmp.eq.s32.totalorder %s31, 1
      %p280 = por %p278, %p279
      %p281 = scmp.ne.s32.totalorder %s272, %s273
      %p282 = scmp.eq.s32.totalorder %s31, 0
      %p283 = por %p281, %p282
      %p284 = scmp.ne.s32.totalorder %s272, %s273
      %p285 = scmp.eq.s32.totalorder %s32, 1
      %p286 = por %p284, %p285
      %p288 = scmp.ne.s32.totalorder %s273, %s287
      %p289 = scmp.eq.s32.totalorder %s32, 0
      %p290 = por %p288, %p289
      %s292 = sadd.s32 %s291, 1
      %p295 = scmp.eq.s32.totalorder %s26, 1
      %p296 = scmp.ne.s32.totalorder %s291, %s293
      %p297 = scmp.eq.s32.totalorder %s26, 0
      %p298 = por %p296, %p297
      %p299 = scmp.ne.s32.totalorder %s291, %s293
      %p300 = scmp.eq.s32.totalorder %s31, 1
      %p301 = por %p299, %p300
      %p302 = scmp.ne.s32.totalorder %s293, %s294
      %p303 = scmp.eq.s32.totalorder %s31, 0
      %p304 = por %p302, %p303
      %p305 = scmp.ne.s32.totalorder %s293, %s294
      %p306 = scmp.eq.s32.totalorder %s32, 1
      %p307 = por %p305, %p306
      %p309 = scmp.ne.s32.totalorder %s294, %s308
      %p310 = scmp.eq.s32.totalorder %s32, 0
      %p311 = por %p309, %p310
      %s313 = sadd.s32 %s312, 1
      %p316 = scmp.eq.s32.totalorder %s26, 1
      %p317 = scmp.ne.s32.totalorder %s312, %s314
      %p318 = scmp.eq.s32.totalorder %s26, 0
      %p319 = por %p317, %p318
      %p320 = scmp.ne.s32.totalorder %s312, %s314
      %p321 = scmp.eq.s32.totalorder %s31, 1
      %p322 = por %p320, %p321
      %p323 = scmp.ne.s32.totalorder %s314, %s315
      %p324 = scmp.eq.s32.totalorder %s31, 0
      %p325 = por %p323, %p324
      %p326 = scmp.ne.s32.totalorder %s314, %s315
      %p327 = scmp.eq.s32.totalorder %s32, 1
      %p328 = por %p326, %p327
      %p330 = scmp.ne.s32.totalorder %s315, %s329
      %p331 = scmp.eq.s32.totalorder %s32, 0
      %p332 = por %p330, %p331
      %s334 = sadd.s32 %s333, 1
      %p337 = scmp.eq.s32.totalorder %s26, 1
      %p338 = scmp.ne.s32.totalorder %s333, %s335
      %p339 = scmp.eq.s32.totalorder %s26, 0
      %p340 = por %p338, %p339
      %p341 = scmp.ne.s32.totalorder %s333, %s335
      %p342 = scmp.eq.s32.totalorder %s31, 1
      %p343 = por %p341, %p342
      %p344 = scmp.ne.s32.totalorder %s335, %s336
      %p345 = scmp.eq.s32.totalorder %s31, 0
      %p346 = por %p344, %p345
      %p347 = scmp.ne.s32.totalorder %s335, %s336
      %p348 = scmp.eq.s32.totalorder %s32, 1
      %p349 = por %p347, %p348
      %p351 = scmp.ne.s32.totalorder %s336, %s350
      %p352 = scmp.eq.s32.totalorder %s32, 0
      %p353 = por %p351, %p352
      %s355 = sadd.s32 %s354, 1
      %p358 = scmp.eq.s32.totalorder %s26, 1
      %p359 = scmp.ne.s32.totalorder %s354, %s356
      %p360 = scmp.eq.s32.totalorder %s26, 0
      %p361 = por %p359, %p360
      %p362 = scmp.ne.s32.totalorder %s354, %s356
      %p363 = scmp.eq.s32.totalorder %s31, 1
      %p364 = por %p362, %p363
      %p365 = scmp.ne.s32.totalorder %s356, %s357
      %p366 = scmp.eq.s32.totalorder %s31, 0
      %p367 = por %p365, %p366
      %p368 = scmp.ne.s32.totalorder %s356, %s357
      %p369 = scmp.eq.s32.totalorder %s32, 1
      %p370 = por %p368, %p369
      %p372 = scmp.ne.s32.totalorder %s357, %s371
      %p373 = scmp.eq.s32.totalorder %s32, 0
      %p374 = por %p372, %p373
      %s376 = sadd.s32 %s375, 1
      %p379 = scmp.eq.s32.totalorder %s26, 1
      %p380 = scmp.ne.s32.totalorder %s375, %s377
      %p381 = scmp.eq.s32.totalorder %s26, 0
      %p382 = por %p380, %p381
      %p383 = scmp.ne.s32.totalorder %s375, %s377
      %p384 = scmp.eq.s32.totalorder %s31, 1
      %p385 = por %p383, %p384
      %p386 = scmp.ne.s32.totalorder %s377, %s378
      %p387 = scmp.eq.s32.totalorder %s31, 0
      %p388 = por %p386, %p387
      %p389 = scmp.ne.s32.totalorder %s377, %s378
      %p390 = scmp.eq.s32.totalorder %s32, 1
      %p391 = por %p389, %p390
      %p393 = scmp.ne.s32.totalorder %s378, %s392
      %p394 = scmp.eq.s32.totalorder %s32, 0
      %p395 = por %p393, %p394
      %s396 = ssub.s32 %s26, %s33
      %p397 = scmp.eq.s32.totalorder %s396, 0
      %s399 = sadd.s32 %s398, 1
      %s400 = scalar_select %p397, %s398, %s399
      %p403 = pneg %p397
      %p404 = scmp.eq.s32.totalorder %s26, 1
      %p405 = por %p403, %p404
      %p406 = scmp.ne.s32.totalorder %s398, %s401
      %p407 = scmp.eq.s32.totalorder %s26, 0
      %p408 = por %p406, %p407
      %p409 = scmp.ne.s32.totalorder %s398, %s401
      %p410 = scmp.eq.s32.totalorder %s31, 1
      %p411 = por %p409, %p410
      %p412 = scmp.ne.s32.totalorder %s401, %s402
      %p413 = scmp.eq.s32.totalorder %s31, 0
      %p414 = por %p412, %p413
      %p415 = scmp.ne.s32.totalorder %s401, %s402
      %p416 = scmp.eq.s32.totalorder %s32, 1
      %p417 = por %p415, %p416
      %p419 = scmp.ne.s32.totalorder %s402, %s418
      %p420 = scmp.eq.s32.totalorder %s32, 0
      %p421 = por %p419, %p420
      %p422 = scmp.le.s32.totalorder 1, %s26
      %p423 = scmp.lt.s32.totalorder %s26, 3
      %p424 = pnand %p422, %p423
      %p425 = pneg %p424
      // Predicated region
      $region9: #{tpu_custom_call.1} parent=5 // pred_check
        _
      $region10: #{tpu_custom_call.1} parent=5 // pred_check_branch
        %427 = sbr.rel (%p424) target = $region12
      $region11: #{tpu_custom_call.1} parent=5 // pred_region
        %s428 = ssub.s32 %s26, 1
        // Predicated region
        $region13: #{tpu_custom_call.1} parent=11 // pred_check
          %p429 = pneg %p73
        $region14: #{tpu_custom_call.1} parent=11 // pred_check_branch
          %431 = sbr.rel (%p429) target = $region16
        $region15: #{tpu_custom_call.1} parent=11 // pred_region
          _
        $region16: #{tpu_custom_call.1} parent=11 // pred_fallthru
          _
        // Predicated region
        $region17: #{tpu_custom_call.1} parent=11 // pred_check
          %p432 = pneg %p94
        $region18: #{tpu_custom_call.1} parent=11 // pred_check_branch
          %434 = sbr.rel (%p432) target = $region20
        $region19: #{tpu_custom_call.1} parent=11 // pred_region
          _
        $region20: #{tpu_custom_call.1} parent=11 // pred_fallthru
          _
        // Predicated region
        $region21: #{tpu_custom_call.1} parent=11 // pred_check
          %p435 = pneg %p115
        $region22: #{tpu_custom_call.1} parent=11 // pred_check_branch
          %437 = sbr.rel (%p435) target = $region24
        $region23: #{tpu_custom_call.1} parent=11 // pred_region
          _
        $region24: #{tpu_custom_call.1} parent=11 // pred_fallthru
          _
        // Predicated region
        $region25: #{tpu_custom_call.1} parent=11 // pred_check
          %p438 = pneg %p136
        $region26: #{tpu_custom_call.1} parent=11 // pred_check_branch
          %440 = sbr.rel (%p438) target = $region28
        $region27: #{tpu_custom_call.1} parent=11 // pred_region
          _
        $region28: #{tpu_custom_call.1} parent=11 // pred_fallthru
          _
        // Predicated region
        $region29: #{tpu_custom_call.1} parent=11 // pred_check
          %p441 = pneg %p157
        $region30: #{tpu_custom_call.1} parent=11 // pred_check_branch
          %443 = sbr.rel (%p441) target = $region32
        $region31: #{tpu_custom_call.1} parent=11 // pred_region
          _
        $region32: #{tpu_custom_call.1} parent=11 // pred_fallthru
          _
        // Predicated region
        $region33: #{tpu_custom_call.1} parent=11 // pred_check
          %p444 = pneg %p178
        $region34: #{tpu_custom_call.1} parent=11 // pred_check_branch
          %446 = sbr.rel (%p444) target = $region36
        $region35: #{tpu_custom_call.1} parent=11 // pred_region
          _
        $region36: #{tpu_custom_call.1} parent=11 // pred_fallthru
          _
        // Predicated region
        $region37: #{tpu_custom_call.1} parent=11 // pred_check
          %p447 = pneg %p199
        $region38: #{tpu_custom_call.1} parent=11 // pred_check_branch
          %449 = sbr.rel (%p447) target = $region40
        $region39: #{tpu_custom_call.1} parent=11 // pred_region
          _
        $region40: #{tpu_custom_call.1} parent=11 // pred_fallthru
          _
        // Predicated region
        $region41: #{tpu_custom_call.1} parent=11 // pred_check
          %p450 = pneg %p220
        $region42: #{tpu_custom_call.1} parent=11 // pred_check_branch
          %452 = sbr.rel (%p450) target = $region44
        $region43: #{tpu_custom_call.1} parent=11 // pred_region
          _
        $region44: #{tpu_custom_call.1} parent=11 // pred_fallthru
          _
        // Predicated region
        $region45: #{tpu_custom_call.1} parent=11 // pred_check
          %p453 = pneg %p241
        $region46: #{tpu_custom_call.1} parent=11 // pred_check_branch
          %455 = sbr.rel (%p453) target = $region48
        $region47: #{tpu_custom_call.1} parent=11 // pred_region
          _
        $region48: #{tpu_custom_call.1} parent=11 // pred_fallthru
          _
        // Predicated region
        $region49: #{tpu_custom_call.1} parent=11 // pred_check
          %p456 = pneg %p262
        $region50: #{tpu_custom_call.1} parent=11 // pred_check_branch
          %458 = sbr.rel (%p456) target = $region52
        $region51: #{tpu_custom_call.1} parent=11 // pred_region
          _
        $region52: #{tpu_custom_call.1} parent=11 // pred_fallthru
          _
        // Predicated region
        $region53: #{tpu_custom_call.1} parent=11 // pred_check
          %p459 = pneg %p283
        $region54: #{tpu_custom_call.1} parent=11 // pred_check_branch
          %461 = sbr.rel (%p459) target = $region56
        $region55: #{tpu_custom_call.1} parent=11 // pred_region
          _
        $region56: #{tpu_custom_call.1} parent=11 // pred_fallthru
          _
        // Predicated region
        $region57: #{tpu_custom_call.1} parent=11 // pred_check
          %p462 = pneg %p304
        $region58: #{tpu_custom_call.1} parent=11 // pred_check_branch
          %464 = sbr.rel (%p462) target = $region60
        $region59: #{tpu_custom_call.1} parent=11 // pred_region
          _
        $region60: #{tpu_custom_call.1} parent=11 // pred_fallthru
          _
        // Predicated region
        $region61: #{tpu_custom_call.1} parent=11 // pred_check
          %p465 = pneg %p325
        $region62: #{tpu_custom_call.1} parent=11 // pred_check_branch
          %467 = sbr.rel (%p465) target = $region64
        $region63: #{tpu_custom_call.1} parent=11 // pred_region
          _
        $region64: #{tpu_custom_call.1} parent=11 // pred_fallthru
          _
        // Predicated region
        $region65: #{tpu_custom_call.1} parent=11 // pred_check
          %p468 = pneg %p346
        $region66: #{tpu_custom_call.1} parent=11 // pred_check_branch
          %470 = sbr.rel (%p468) target = $region68
        $region67: #{tpu_custom_call.1} parent=11 // pred_region
          _
        $region68: #{tpu_custom_call.1} parent=11 // pred_fallthru
          _
        // Predicated region
        $region69: #{tpu_custom_call.1} parent=11 // pred_check
          %p471 = pneg %p367
        $region70: #{tpu_custom_call.1} parent=11 // pred_check_branch
          %473 = sbr.rel (%p471) target = $region72
        $region71: #{tpu_custom_call.1} parent=11 // pred_region
          _
        $region72: #{tpu_custom_call.1} parent=11 // pred_fallthru
          _
        // Predicated region
        $region73: #{tpu_custom_call.1} parent=11 // pred_check
          %p474 = pneg %p388
        $region74: #{tpu_custom_call.1} parent=11 // pred_check_branch
          %476 = sbr.rel (%p474) target = $region76
        $region75: #{tpu_custom_call.1} parent=11 // pred_region
          _
        $region76: #{tpu_custom_call.1} parent=11 // pred_fallthru
          _
      $region12: #{tpu_custom_call.1} parent=5 // pred_fallthru
        _
      %p477 = scmp.lt.s32.totalorder %s26, 2
      // Predicated region
      $region77: #{tpu_custom_call.1} parent=5 // pred_check
        %p478 = pneg %p477
      $region78: #{tpu_custom_call.1} parent=5 // pred_check_branch
        %480 = sbr.rel (%p478) target = $region80
      $region79: #{tpu_custom_call.1} parent=5 // pred_region
        // Predicated region
        $region81: #{tpu_custom_call.1} parent=79 // pred_check
          %p481 = pneg %p46
        $region82: #{tpu_custom_call.1} parent=79 // pred_check_branch
          %483 = sbr.rel (%p481) target = $region84
        $region83: #{tpu_custom_call.1} parent=79 // pred_region
          %p484 = scmp.lt.s32.totalorder %s26, 1
          %s485 = scalar_select %p484, %s26, 1
          %s486 = smul.addr %s485, 3
          %s487 = smul.addr %s486, 8
          %s488 = scalar_lea.vmem %s0, %s487
        $region84: #{tpu_custom_call.1} parent=79 // pred_fallthru
          _
      $region80: #{tpu_custom_call.1} parent=5 // pred_fallthru
        _
      %p489 = scmp.le.s32.totalorder 1, %s26
      %p490 = scmp.lt.s32.totalorder %s26, 3
      %p491 = pnand %p489, %p490
      %p492 = pneg %p491
      // Predicated region
      $region85: #{tpu_custom_call.1} parent=5 // pred_check
        _
      $region86: #{tpu_custom_call.1} parent=5 // pred_check_branch
        %494 = sbr.rel (%p491) target = $region88
      $region87: #{tpu_custom_call.1} parent=5 // pred_region
        %s495 = ssub.s32 %s26, 1
        %p496 = scmp.lt.s32.totalorder %s31, 1
        %s497 = scalar_select %p496, %s31, 1
        %s498 = smul.addr %s497, 3
        %s499 = smul.addr %s498, 8
        %s500 = scalar_lea.vmem %s0, %s499
        %p501 = pneg %p52
        %p502 = pneg %p49
        %p503 = pneg %p73
        %p504 = pneg %p70
        %p505 = pneg %p94
        %p506 = pneg %p91
        %p507 = pneg %p115
        %p508 = pneg %p112
        %p509 = pneg %p136
        %p510 = pneg %p133
        %p511 = pneg %p157
        %p512 = pneg %p154
        %p513 = pneg %p178
        %p514 = pneg %p175
        %p515 = pneg %p199
        %p516 = pneg %p196
        %p517 = pneg %p220
        %p518 = pneg %p217
        %p519 = pneg %p241
        %p520 = pneg %p238
        %p521 = pneg %p262
        %p522 = pneg %p259
        %p523 = pneg %p283
        %p524 = pneg %p280
        %p525 = pneg %p304
        %p526 = pneg %p301
        %p527 = pneg %p325
        %p528 = pneg %p322
        %p529 = pneg %p346
        %p530 = pneg %p343
        %p531 = pneg %p367
        %p532 = pneg %p364
        %p533 = pneg %p388
        %p534 = pneg %p385
        %p535 = pneg %p414
        %p536 = pneg %p411
        %s537 = sand.u32 %s401, 1
        %s538 = scalar_lea.sflag [#allocation4], %s537
        %s539 = sand.u32 %s401, 1
        %s540 = smul.addr %s539, 8
        %s541 = scalar_lea.vmem [#allocation3], %s540
        %p542 = scmp.lt.s32.totalorder %s31, 1
        %s543 = scalar_select %p542, %s31, 1
        %s544 = smul.addr %s543, 3
        %s545 = smul.addr %s544, 8
        %s546 = scalar_lea.vmem %s0, %s545
        %v548 = vld [vmem:[%s546] sm:$0xff]
        %v549 = vld [vmem:[%s546 + $0x8] sm:$0xff]
        %v550 = vld [vmem:[%s546 + $0x10] sm:$0xff]
        %v551 = vpack.c.bf16 %v549, %v548
        %v552 = vpack.c.bf16 %v550, %v550
        %v553 = vld [vmem:[%s1] sm:$0xf]
        %v554 = vld [vmem:[%s1 + $0x4] sm:$0xf]
        %v555 = vld [vmem:[%s2] sm:$0xff]
        %v556 = vld [vmem:[%s2 + $0x8] sm:$0xff]
        %v557 = vld [vmem:[%s2 + $0x10] sm:$0xff]
        %v560 = vunpack.c.l.b16 %v553
        %v561 = vunpack.c.l.b16 %v554
        %v562 = vpack.c.b16 %v561, %v560
        %vm564 = vcmask 130048
        %v566 = vsel %vm564, %v551, 0
        %v569 = vsel %vm564, %v552, 0
        %571 = vmatprep.subr.bf16.mxu0 0
        %572 = vmatpush1.bf16.msra.mxu0 %v562
        %573 = vmatprep.subr.bf16.mxu0 0
        %574 = vmatpush1.bf16.msra.mxu0 0
        %575 = vmatprep.subr.bf16.mxu0 0
        %576 = vmatpush1.bf16.msra.mxu0 0
        %577 = vmatprep.subr.bf16.mxu0 0
        %578 = vmatpush1.bf16.msra.mxu0 0
        %579 = vmatprep.subr.bf16.mxu0 0
        %580 = vmatpush1.bf16.msra.mxu0 0
        %581 = vmatprep.subr.bf16.mxu0 0
        %582 = vmatpush1.bf16.msra.mxu0 0
        %583 = vmatprep.subr.bf16.mxu0 0
        %584 = vmatpush1.bf16.msra.mxu0 0
        %585 = vmatprep.subr.bf16.mxu0 0
        %586 = vmatpush1.bf16.msra.mxu0 0
        %587 = vmatprep.subr.bf16.mxu0 0
        %588 = vmatpush1.bf16.msra.mxu0 0
        %589 = vmatprep.subr.bf16.mxu0 0
        %590 = vmatpush1.bf16.msra.mxu0 0
        %591 = vmatprep.subr.bf16.mxu0 0
        %592 = vmatpush1.bf16.msra.mxu0 0
        %593 = vmatprep.subr.bf16.mxu0 0
        %594 = vmatpush1.bf16.msra.mxu0 0
        %595 = vmatprep.subr.bf16.mxu0 0
        %596 = vmatpush1.bf16.msra.mxu0 0
        %597 = vmatprep.subr.bf16.mxu0 0
        %598 = vmatpush1.bf16.msra.mxu0 0
        %599 = vmatprep.subr.bf16.mxu0 0
        %600 = vmatpush1.bf16.msra.mxu0 0
        %601 = vmatprep.subr.bf16.mxu0 0
        %602 = vmatpush1.bf16.msra.mxu0 0
        %603 = vmatprep.mubr.bf16.mxu0 0
        %604 = vmatmul.mubr.bf16.gmra.mrb[0].mxu0 %v566
        %v605 = vpop.f32.mrb[0].mxu0
        %v606 = vadd.f32 %v555, %v605
        %v607 = vpop.f32.mrb[0].mxu0
        %v608 = vpop.f32.mrb[0].mxu0
        %v609 = vadd.f32 %v556, %v608
        %v610 = vpop.f32.mrb[0].mxu0
        %611 = vmatprep.mubr.bf16.mxu0 0
        %612 = vmatmul.mubr.bf16.gmra.mrb[0].mxu0 %v569
        %v613 = vpop.f32.mrb[0].mxu0
        %v614 = vadd.f32 %v557, %v613
        %v615 = vpop.f32.mrb[0].mxu0
        %v616 = vpop.f32.mrb[0].mxu0
        %v617 = vpop.f32.mrb[0].mxu0
        %618 = vdwg.mxu0
        %v619 = vpack.c.bf16 %v606, %v606
        %v620 = vld [vmem:[%s3] sm:$0xf]
        %v621 = vld [vmem:[%s3 + $0x4] sm:$0xf]
        %v622 = vld [vmem:[%s3 + $0x8] sm:$0xf]
        %v623 = vld [vmem:[%s3 + $0xc] sm:$0xf]
        %v624 = vld [vmem:[%s4] sm:$0x1]
        %v626 = vlaneseq
        %v627 = vshrl.u32 %v626, 7
        %v628 = vsub.s32 0, %v627
        %v629 = vrot.slane %v624, %v628
        %v635 = vunpack.c.l.b16 %v620
        %v636 = vunpack.c.l.b16 %v621
        %v637 = vunpack.c.l.b16 %v622
        %v638 = vunpack.c.l.b16 %v623
        %v639 = vpack.c.b16 %v636, %v635
        %v640 = vpack.c.b16 %v638, %v637
        %vm643 = vcmask 261120
        %v645 = vsel %vm643, %v619, 0
        %647 = vmatprep.subr.bf16.mxu0 0
        %648 = vmatpush1.bf16.msra.mxu0 %v639
        %649 = vmatprep.subr.bf16.mxu0 0
        %650 = vmatpush1.bf16.msra.mxu0 %v640
        %651 = vmatprep.subr.bf16.mxu0 0
        %652 = vmatpush1.bf16.msra.mxu0 0
        %653 = vmatprep.subr.bf16.mxu0 0
        %654 = vmatpush1.bf16.msra.mxu0 0
        %655 = vmatprep.subr.bf16.mxu0 0
        %656 = vmatpush1.bf16.msra.mxu0 0
        %657 = vmatprep.subr.bf16.mxu0 0
        %658 = vmatpush1.bf16.msra.mxu0 0
        %659 = vmatprep.subr.bf16.mxu0 0
        %660 = vmatpush1.bf16.msra.mxu0 0
        %661 = vmatprep.subr.bf16.mxu0 0
        %662 = vmatpush1.bf16.msra.mxu0 0
        %663 = vmatprep.subr.bf16.mxu0 0
        %664 = vmatpush1.bf16.msra.mxu0 0
        %665 = vmatprep.subr.bf16.mxu0 0
        %666 = vmatpush1.bf16.msra.mxu0 0
        %667 = vmatprep.subr.bf16.mxu0 0
        %668 = vmatpush1.bf16.msra.mxu0 0
        %669 = vmatprep.subr.bf16.mxu0 0
        %670 = vmatpush1.bf16.msra.mxu0 0
        %671 = vmatprep.subr.bf16.mxu0 0
        %672 = vmatpush1.bf16.msra.mxu0 0
        %673 = vmatprep.subr.bf16.mxu0 0
        %674 = vmatpush1.bf16.msra.mxu0 0
        %675 = vmatprep.subr.bf16.mxu0 0
        %676 = vmatpush1.bf16.msra.mxu0 0
        %677 = vmatprep.subr.bf16.mxu0 0
        %678 = vmatpush1.bf16.msra.mxu0 0
        %679 = vmatprep.mubr.bf16.mxu0 0
        %680 = vmatmul.mubr.bf16.gmra.mrb[0].mxu0 %v645
        %v681 = vpop.f32.mrb[0].mxu0
        %v682 = vadd.f32 %v629, %v681
        %v683 = vpop.f32.mrb[0].mxu0
        %v684 = vpop.f32.mrb[0].mxu0
        %v685 = vpop.f32.mrb[0].mxu0
        %686 = vdwg.mxu0
        %v687 = vmul.f32 %v682, 0.35355338
        %v688 = vpack.c.bf16 %v609, %v609
        %v689 = vld [vmem:[%s5] sm:$0xf]
        %v690 = vld [vmem:[%s5 + $0x4] sm:$0xf]
        %v691 = vld [vmem:[%s5 + $0x8] sm:$0xf]
        %v692 = vld [vmem:[%s5 + $0xc] sm:$0xf]
        %v693 = vld [vmem:[%s6] sm:$0x1]
        %v695 = vlaneseq
        %v696 = vshrl.u32 %v695, 7
        %v697 = vsub.s32 0, %v696
        %v698 = vrot.slane %v693, %v697
        %v704 = vunpack.c.l.b16 %v689
        %v705 = vunpack.c.l.b16 %v690
        %v706 = vunpack.c.l.b16 %v691
        %v707 = vunpack.c.l.b16 %v692
        %v708 = vpack.c.b16 %v705, %v704
        %v709 = vpack.c.b16 %v707, %v706
        %v713 = vsel %vm643, %v688, 0
        %715 = vmatprep.subr.bf16.mxu0 0
        %716 = vmatpush1.bf16.msra.mxu0 %v708
        %717 = vmatprep.subr.bf16.mxu0 0
        %718 = vmatpush1.bf16.msra.mxu0 %v709
        %719 = vmatprep.subr.bf16.mxu0 0
        %720 = vmatpush1.bf16.msra.mxu0 0
        %721 = vmatprep.subr.bf16.mxu0 0
        %722 = vmatpush1.bf16.msra.mxu0 0
        %723 = vmatprep.subr.bf16.mxu0 0
        %724 = vmatpush1.bf16.msra.mxu0 0
        %725 = vmatprep.subr.bf16.mxu0 0
        %726 = vmatpush1.bf16.msra.mxu0 0
        %727 = vmatprep.subr.bf16.mxu0 0
        %728 = vmatpush1.bf16.msra.mxu0 0
        %729 = vmatprep.subr.bf16.mxu0 0
        %730 = vmatpush1.bf16.msra.mxu0 0
        %731 = vmatprep.subr.bf16.mxu0 0
        %732 = vmatpush1.bf16.msra.mxu0 0
        %733 = vmatprep.subr.bf16.mxu0 0
        %734 = vmatpush1.bf16.msra.mxu0 0
        %735 = vmatprep.subr.bf16.mxu0 0
        %736 = vmatpush1.bf16.msra.mxu0 0
        %737 = vmatprep.subr.bf16.mxu0 0
        %738 = vmatpush1.bf16.msra.mxu0 0
        %739 = vmatprep.subr.bf16.mxu0 0
        %740 = vmatpush1.bf16.msra.mxu0 0
        %741 = vmatprep.subr.bf16.mxu0 0
        %742 = vmatpush1.bf16.msra.mxu0 0
        %743 = vmatprep.subr.bf16.mxu0 0
        %744 = vmatpush1.bf16.msra.mxu0 0
        %745 = vmatprep.subr.bf16.mxu0 0
        %746 = vmatpush1.bf16.msra.mxu0 0
        %747 = vmatprep.mubr.bf16.mxu0 0
        %748 = vmatmul.mubr.bf16.gmra.mrb[0].mxu0 %v713
        %v749 = vpop.f32.mrb[0].mxu0
        %v750 = vadd.f32 %v698, %v749
        %v751 = vpop.f32.mrb[0].mxu0
        %v752 = vpop.f32.mrb[0].mxu0
        %v753 = vpop.f32.mrb[0].mxu0
        %754 = vdwg.mxu0
        %v755 = vpack.c.bf16 %v614, %v614
        %v756 = vld [vmem:[%s7] sm:$0xf]
        %v757 = vld [vmem:[%s7 + $0x4] sm:$0xf]
        %v758 = vld [vmem:[%s7 + $0x8] sm:$0xf]
        %v759 = vld [vmem:[%s7 + $0xc] sm:$0xf]
        %v760 = vld [vmem:[%s8] sm:$0x1]
        %v762 = vlaneseq
        %v763 = vshrl.u32 %v762, 7
        %v764 = vsub.s32 0, %v763
        %v765 = vrot.slane %v760, %v764
        %v771 = vunpack.c.l.b16 %v756
        %v772 = vunpack.c.l.b16 %v757
        %v773 = vunpack.c.l.b16 %v758
        %v774 = vunpack.c.l.b16 %v759
        %v775 = vpack.c.b16 %v772, %v771
        %v776 = vpack.c.b16 %v774, %v773
        %v780 = vsel %vm643, %v755, 0
        %782 = vmatprep.subr.bf16.mxu0 0
        %783 = vmatpush1.bf16.msra.mxu0 %v775
        %784 = vmatprep.subr.bf16.mxu0 0
        %785 = vmatpush1.bf16.msra.mxu0 %v776
        %786 = vmatprep.subr.bf16.mxu0 0
        %787 = vmatpush1.bf16.msra.mxu0 0
        %788 = vmatprep.subr.bf16.mxu0 0
        %789 = vmatpush1.bf16.msra.mxu0 0
        %790 = vmatprep.subr.bf16.mxu0 0
        %791 = vmatpush1.bf16.msra.mxu0 0
        %792 = vmatprep.subr.bf16.mxu0 0
        %793 = vmatpush1.bf16.msra.mxu0 0
        %794 = vmatprep.subr.bf16.mxu0 0
        %795 = vmatpush1.bf16.msra.mxu0 0
        %796 = vmatprep.subr.bf16.mxu0 0
        %797 = vmatpush1.bf16.msra.mxu0 0
        %798 = vmatprep.subr.bf16.mxu0 0
        %799 = vmatpush1.bf16.msra.mxu0 0
        %800 = vmatprep.subr.bf16.mxu0 0
        %801 = vmatpush1.bf16.msra.mxu0 0
        %802 = vmatprep.subr.bf16.mxu0 0
        %803 = vmatpush1.bf16.msra.mxu0 0
        %804 = vmatprep.subr.bf16.mxu0 0
        %805 = vmatpush1.bf16.msra.mxu0 0
        %806 = vmatprep.subr.bf16.mxu0 0
        %807 = vmatpush1.bf16.msra.mxu0 0
        %808 = vmatprep.subr.bf16.mxu0 0
        %809 = vmatpush1.bf16.msra.mxu0 0
        %810 = vmatprep.subr.bf16.mxu0 0
        %811 = vmatpush1.bf16.msra.mxu0 0
        %812 = vmatprep.subr.bf16.mxu0 0
        %813 = vmatpush1.bf16.msra.mxu0 0
        %814 = vmatprep.mubr.bf16.mxu0 0
        %815 = vmatmul.mubr.bf16.gmra.mrb[0].mxu0 %v780
        %v816 = vpop.f32.mrb[0].mxu0
        %v817 = vadd.f32 %v765, %v816
        %v818 = vpop.f32.mrb[0].mxu0
        %v819 = vpop.f32.mrb[0].mxu0
        %v820 = vpop.f32.mrb[0].mxu0
        %821 = vdwg.mxu0
        %v822 = vpack.c.bf16 %v687, %v687
        %v823 = vpack.c.bf16 %v750, %v750
        %v824 = vpack.c.bf16 %v817, %v817
        %vm825 = vcmask 64512
        %v827 = vsel %vm825, %v822, 0
        %v830 = vsel %vm825, %v823, 0
        %832 = vmatprep.subr.bf16.mxu0 0
        %833 = vmatpush1.bf16.xpose.msra.mxu0 %v830
        %834 = vmatprep.subr.bf16.mxu0 0
        %835 = vmatpush1.bf16.xpose.msra.mxu0 0
        %836 = vmatprep.subr.bf16.mxu0 0
        %837 = vmatpush1.bf16.xpose.msra.mxu0 0
        %838 = vmatprep.subr.bf16.mxu0 0
        %839 = vmatpush1.bf16.xpose.msra.mxu0 0
        %840 = vmatprep.subr.bf16.mxu0 0
        %841 = vmatpush1.bf16.xpose.msra.mxu0 0
        %842 = vmatprep.subr.bf16.mxu0 0
        %843 = vmatpush1.bf16.xpose.msra.mxu0 0
        %844 = vmatprep.subr.bf16.mxu0 0
        %845 = vmatpush1.bf16.xpose.msra.mxu0 0
        %846 = vmatprep.subr.bf16.mxu0 0
        %847 = vmatpush1.bf16.xpose.msra.mxu0 0
        %848 = vmatprep.subr.bf16.mxu0 0
        %849 = vmatpush1.bf16.xpose.msra.mxu0 0
        %850 = vmatprep.subr.bf16.mxu0 0
        %851 = vmatpush1.bf16.xpose.msra.mxu0 0
        %852 = vmatprep.subr.bf16.mxu0 0
        %853 = vmatpush1.bf16.xpose.msra.mxu0 0
        %854 = vmatprep.subr.bf16.mxu0 0
        %855 = vmatpush1.bf16.xpose.msra.mxu0 0
        %856 = vmatprep.subr.bf16.mxu0 0
        %857 = vmatpush1.bf16.xpose.msra.mxu0 0
        %858 = vmatprep.subr.bf16.mxu0 0
        %859 = vmatpush1.bf16.xpose.msra.mxu0 0
        %860 = vmatprep.subr.bf16.mxu0 0
        %861 = vmatpush1.bf16.xpose.msra.mxu0 0
        %862 = vmatprep.subr.bf16.mxu0 0
        %863 = vmatpush1.bf16.xpose.msra.mxu0 0
        %864 = vmatprep.mubr.bf16.mxu0 0
        %865 = vmatmul.mubr.bf16.gmra.mrb[0].mxu0 %v827
        %v866 = vpop.f32.mrb[0].mxu0
        %v867 = vadd.f32 0.0, %v866
        %v868 = vpop.f32.mrb[0].mxu0
        %v869 = vpop.f32.mrb[0].mxu0
        %v870 = vpop.f32.mrb[0].mxu0
        %871 = vdwg.mxu0
        %v872 = vsel %vm825, %v867, -inf
        %873 = vmax.xlane.f32.xlu0 %v872
        %v874 = vpop.xlane.xlu0 %873
        %v875 = vsub.f32 %v867, %v874
        %v876 = vmul.f32 %v875, 1.442695
        %v877 = vpow.pop %v876
        %v878 = vsel %vm825, %v877, 0.0
        %879 = vadd.xlane.f32.xlu0 %v878
        %v880 = vpop.xlane.xlu0 %879
        %v881 = vrcp.pop %v880
        %v882 = vmul.f32 %v877, %v881
        %v883 = vpack.c.bf16 %v882, %v882
        %v885 = vsel %vm825, %v883, 0
        %vm887 = vcmask 1043456
        %v889 = vsel %vm887, %v824, 0
        %891 = vmatprep.subr.bf16.mxu0 0
        %892 = vmatpush1.bf16.msra.mxu0 %v889
        %893 = vmatprep.subr.bf16.mxu0 0
        %894 = vmatpush1.bf16.msra.mxu0 0
        %895 = vmatprep.subr.bf16.mxu0 0
        %896 = vmatpush1.bf16.msra.mxu0 0
        %897 = vmatprep.subr.bf16.mxu0 0
        %898 = vmatpush1.bf16.msra.mxu0 0
        %899 = vmatprep.subr.bf16.mxu0 0
        %900 = vmatpush1.bf16.msra.mxu0 0
        %901 = vmatprep.subr.bf16.mxu0 0
        %902 = vmatpush1.bf16.msra.mxu0 0
        %903 = vmatprep.subr.bf16.mxu0 0
        %904 = vmatpush1.bf16.msra.mxu0 0
        %905 = vmatprep.subr.bf16.mxu0 0
        %906 = vmatpush1.bf16.msra.mxu0 0
        %907 = vmatprep.subr.bf16.mxu0 0
        %908 = vmatpush1.bf16.msra.mxu0 0
        %909 = vmatprep.subr.bf16.mxu0 0
        %910 = vmatpush1.bf16.msra.mxu0 0
        %911 = vmatprep.subr.bf16.mxu0 0
        %912 = vmatpush1.bf16.msra.mxu0 0
        %913 = vmatprep.subr.bf16.mxu0 0
        %914 = vmatpush1.bf16.msra.mxu0 0
        %915 = vmatprep.subr.bf16.mxu0 0
        %916 = vmatpush1.bf16.msra.mxu0 0
        %917 = vmatprep.subr.bf16.mxu0 0
        %918 = vmatpush1.bf16.msra.mxu0 0
        %919 = vmatprep.subr.bf16.mxu0 0
        %920 = vmatpush1.bf16.msra.mxu0 0
        %921 = vmatprep.subr.bf16.mxu0 0
        %922 = vmatpush1.bf16.msra.mxu0 0
        %923 = vmatprep.mubr.bf16.mxu0 0
        %924 = vmatmul.mubr.bf16.gmra.mrb[0].mxu0 %v885
        %v925 = vpop.f32.mrb[0].mxu0
        %v926 = vadd.f32 0.0, %v925
        %v927 = vpop.f32.mrb[0].mxu0
        %v928 = vpop.f32.mrb[0].mxu0
        %v929 = vpop.f32.mrb[0].mxu0
        %930 = vdwg.mxu0
        %931 = vst.msk [vmem:[#allocation2] sm:$0xff] %vm825, %v926
        %933 = vrot.lane.b32.xlu0 %v822, 120
        %v934 = vpop.permute.xlu0 %933
        %936 = vrot.lane.b32.xlu0 %v823, 120
        %v937 = vpop.permute.xlu0 %936
        %v939 = vsel %vm825, %v934, 0
        %v942 = vsel %vm825, %v937, 0
        %944 = vmatprep.subr.bf16.mxu0 0
        %945 = vmatpush1.bf16.xpose.msra.mxu0 %v942
        %946 = vmatprep.subr.bf16.mxu0 0
        %947 = vmatpush1.bf16.xpose.msra.mxu0 0
        %948 = vmatprep.subr.bf16.mxu0 0
        %949 = vmatpush1.bf16.xpose.msra.mxu0 0
        %950 = vmatprep.subr.bf16.mxu0 0
        %951 = vmatpush1.bf16.xpose.msra.mxu0 0
        %952 = vmatprep.subr.bf16.mxu0 0
        %953 = vmatpush1.bf16.xpose.msra.mxu0 0
        %954 = vmatprep.subr.bf16.mxu0 0
        %955 = vmatpush1.bf16.xpose.msra.mxu0 0
        %956 = vmatprep.subr.bf16.mxu0 0
        %957 = vmatpush1.bf16.xpose.msra.mxu0 0
        %958 = vmatprep.subr.bf16.mxu0 0
        %959 = vmatpush1.bf16.xpose.msra.mxu0 0
        %960 = vmatprep.subr.bf16.mxu0 0
        %961 = vmatpush1.bf16.xpose.msra.mxu0 0
        %962 = vmatprep.subr.bf16.mxu0 0
        %963 = vmatpush1.bf16.xpose.msra.mxu0 0
        %964 = vmatprep.subr.bf16.mxu0 0
        %965 = vmatpush1.bf16.xpose.msra.mxu0 0
        %966 = vmatprep.subr.bf16.mxu0 0
        %967 = vmatpush1.bf16.xpose.msra.mxu0 0
        %968 = vmatprep.subr.bf16.mxu0 0
        %969 = vmatpush1.bf16.xpose.msra.mxu0 0
        %970 = vmatprep.subr.bf16.mxu0 0
        %971 = vmatpush1.bf16.xpose.msra.mxu0 0
        %972 = vmatprep.subr.bf16.mxu0 0
        %973 = vmatpush1.bf16.xpose.msra.mxu0 0
        %974 = vmatprep.subr.bf16.mxu0 0
        %975 = vmatpush1.bf16.xpose.msra.mxu0 0
        %976 = vmatprep.mubr.bf16.mxu0 0
        %977 = vmatmul.mubr.bf16.gmra.mrb[0].mxu0 %v939
        %v978 = vpop.f32.mrb[0].mxu0
        %v979 = vadd.f32 0.0, %v978
        %v980 = vpop.f32.mrb[0].mxu0
        %v981 = vpop.f32.mrb[0].mxu0
        %v982 = vpop.f32.mrb[0].mxu0
        %983 = vdwg.mxu0
        %v984 = vsel %vm825, %v979, -inf
        %985 = vmax.xlane.f32.xlu0 %v984
        %v986 = vpop.xlane.xlu0 %985
        %v987 = vsub.f32 %v979, %v986
        %v988 = vmul.f32 %v987, 1.442695
        %v989 = vpow.pop %v988
        %v990 = vsel %vm825, %v989, 0.0
        %991 = vadd.xlane.f32.xlu0 %v990
        %v992 = vpop.xlane.xlu0 %991
        %v993 = vrcp.pop %v992
        %v994 = vmul.f32 %v989, %v993
        %v995 = vpack.c.bf16 %v994, %v994
        %997 = vrot.lane.b32.xlu0 %v824, 120
        %v998 = vpop.permute.xlu0 %997
        %v1000 = vsel %vm825, %v995, 0
        %v1003 = vsel %vm887, %v998, 0
        %1005 = vmatprep.subr.bf16.mxu0 0
        %1006 = vmatpush1.bf16.msra.mxu0 %v1003
        %1007 = vmatprep.subr.bf16.mxu0 0
        %1008 = vmatpush1.bf16.msra.mxu0 0
        %1009 = vmatprep.subr.bf16.mxu0 0
        %1010 = vmatpush1.bf16.msra.mxu0 0
        %1011 = vmatprep.subr.bf16.mxu0 0
        %1012 = vmatpush1.bf16.msra.mxu0 0
        %1013 = vmatprep.subr.bf16.mxu0 0
        %1014 = vmatpush1.bf16.msra.mxu0 0
        %1015 = vmatprep.subr.bf16.mxu0 0
        %1016 = vmatpush1.bf16.msra.mxu0 0
        %1017 = vmatprep.subr.bf16.mxu0 0
        %1018 = vmatpush1.bf16.msra.mxu0 0
        %1019 = vmatprep.subr.bf16.mxu0 0
        %1020 = vmatpush1.bf16.msra.mxu0 0
        %1021 = vmatprep.subr.bf16.mxu0 0
        %1022 = vmatpush1.bf16.msra.mxu0 0
        %1023 = vmatprep.subr.bf16.mxu0 0
        %1024 = vmatpush1.bf16.msra.mxu0 0
        %1025 = vmatprep.subr.bf16.mxu0 0
        %1026 = vmatpush1.bf16.msra.mxu0 0
        %1027 = vmatprep.subr.bf16.mxu0 0
        %1028 = vmatpush1.bf16.msra.mxu0 0
        %1029 = vmatprep.subr.bf16.mxu0 0
        %1030 = vmatpush1.bf16.msra.mxu0 0
        %1031 = vmatprep.subr.bf16.mxu0 0
        %1032 = vmatpush1.bf16.msra.mxu0 0
        %1033 = vmatprep.subr.bf16.mxu0 0
        %1034 = vmatpush1.bf16.msra.mxu0 0
        %1035 = vmatprep.subr.bf16.mxu0 0
        %1036 = vmatpush1.bf16.msra.mxu0 0
        %1037 = vmatprep.mubr.bf16.mxu0 0
        %1038 = vmatmul.mubr.bf16.gmra.mrb[0].mxu0 %v1000
        %v1039 = vpop.f32.mrb[0].mxu0
        %v1040 = vadd.f32 0.0, %v1039
        %v1041 = vpop.f32.mrb[0].mxu0
        %v1042 = vpop.f32.mrb[0].mxu0
        %v1043 = vpop.f32.mrb[0].mxu0
        %1044 = vdwg.mxu0
        %1046 = vrot.lane.b32.xlu0 %v1040, 8
        %v1047 = vpop.permute.xlu0 %1046
        %vm1049 = vcmask 130112
        %1050 = vst.msk [vmem:[#allocation2] sm:$0xff] %vm1049, %v1047
        %1051 = vrot.lane.b32.xlu0 %v822, 112
        %v1052 = vpop.permute.xlu0 %1051
        %1053 = vrot.lane.b32.xlu0 %v823, 112
        %v1054 = vpop.permute.xlu0 %1053
        %v1056 = vsel %vm825, %v1052, 0
        %v1059 = vsel %vm825, %v1054, 0
        %1061 = vmatprep.subr.bf16.mxu0 0
        %1062 = vmatpush1.bf16.xpose.msra.mxu0 %v1059
        %1063 = vmatprep.subr.bf16.mxu0 0
        %1064 = vmatpush1.bf16.xpose.msra.mxu0 0
        %1065 = vmatprep.subr.bf16.mxu0 0
        %1066 = vmatpush1.bf16.xpose.msra.mxu0 0
        %1067 = vmatprep.subr.bf16.mxu0 0
        %1068 = vmatpush1.bf16.xpose.msra.mxu0 0
        %1069 = vmatprep.subr.bf16.mxu0 0
        %1070 = vmatpush1.bf16.xpose.msra.mxu0 0
        %1071 = vmatprep.subr.bf16.mxu0 0
        %1072 = vmatpush1.bf16.xpose.msra.mxu0 0
        %1073 = vmatprep.subr.bf16.mxu0 0
        %1074 = vmatpush1.bf16.xpose.msra.mxu0 0
        %1075 = vmatprep.subr.bf16.mxu0 0
        %1076 = vmatpush1.bf16.xpose.msra.mxu0 0
        %1077 = vmatprep.subr.bf16.mxu0 0
        %1078 = vmatpush1.bf16.xpose.msra.mxu0 0
        %1079 = vmatprep.subr.bf16.mxu0 0
        %1080 = vmatpush1.bf16.xpose.msra.mxu0 0
        %1081 = vmatprep.subr.bf16.mxu0 0
        %1082 = vmatpush1.bf16.xpose.msra.mxu0 0
        %1083 = vmatprep.subr.bf16.mxu0 0
        %1084 = vmatpush1.bf16.xpose.msra.mxu0 0
        %1085 = vmatprep.subr.bf16.mxu0 0
        %1086 = vmatpush1.bf16.xpose.msra.mxu0 0
        %1087 = vmatprep.subr.bf16.mxu0 0
        %1088 = vmatpush1.bf16.xpose.msra.mxu0 0
        %1089 = vmatprep.subr.bf16.mxu0 0
        %1090 = vmatpush1.bf16.xpose.msra.mxu0 0
        %1091 = vmatprep.subr.bf16.mxu0 0
        %1092 = vmatpush1.bf16.xpose.msra.mxu0 0
        %1093 = vmatprep.mubr.bf16.mxu0 0
        %1094 = vmatmul.mubr.bf16.gmra.mrb[0].mxu0 %v1056
        %v1095 = vpop.f32.mrb[0].mxu0
        %v1096 = vadd.f32 0.0, %v1095
        %v1097 = vpop.f32.mrb[0].mxu0
        %v1098 = vpop.f32.mrb[0].mxu0
        %v1099 = vpop.f32.mrb[0].mxu0
        %1100 = vdwg.mxu0
        %v1101 = vsel %vm825, %v1096, -inf
        %1102 = vmax.xlane.f32.xlu0 %v1101
        %v1103 = vpop.xlane.xlu0 %1102
        %v1104 = vsub.f32 %v1096, %v1103
        %v1105 = vmul.f32 %v1104, 1.442695
        %v1106 = vpow.pop %v1105
        %v1107 = vsel %vm825, %v1106, 0.0
        %1108 = vadd.xlane.f32.xlu0 %v1107
        %v1109 = vpop.xlane.xlu0 %1108
        %v1110 = vrcp.pop %v1109
        %v1111 = vmul.f32 %v1106, %v1110
        %v1112 = vpack.c.bf16 %v1111, %v1111
        %1113 = vrot.lane.b32.xlu0 %v824, 112
        %v1114 = vpop.permute.xlu0 %1113
        %v1116 = vsel %vm825, %v1112, 0
        %v1119 = vsel %vm887, %v1114, 0
        %1121 = vmatprep.subr.bf16.mxu0 0
        %1122 = vmatpush1.bf16.msra.mxu0 %v1119
        %1123 = vmatprep.subr.bf16.mxu0 0
        %1124 = vmatpush1.bf16.msra.mxu0 0
        %1125 = vmatprep.subr.bf16.mxu0 0
        %1126 = vmatpush1.bf16.msra.mxu0 0
        %1127 = vmatprep.subr.bf16.mxu0 0
        %1128 = vmatpush1.bf16.msra.mxu0 0
        %1129 = vmatprep.subr.bf16.mxu0 0
        %1130 = vmatpush1.bf16.msra.mxu0 0
        %1131 = vmatprep.subr.bf16.mxu0 0
        %1132 = vmatpush1.bf16.msra.mxu0 0
        %1133 = vmatprep.subr.bf16.mxu0 0
        %1134 = vmatpush1.bf16.msra.mxu0 0
        %1135 = vmatprep.subr.bf16.mxu0 0
        %1136 = vmatpush1.bf16.msra.mxu0 0
        %1137 = vmatprep.subr.bf16.mxu0 0
        %1138 = vmatpush1.bf16.msra.mxu0 0
        %1139 = vmatprep.subr.bf16.mxu0 0
        %1140 = vmatpush1.bf16.msra.mxu0 0
        %1141 = vmatprep.subr.bf16.mxu0 0
        %1142 = vmatpush1.bf16.msra.mxu0 0
        %1143 = vmatprep.subr.bf16.mxu0 0
        %1144 = vmatpush1.bf16.msra.mxu0 0
        %1145 = vmatprep.subr.bf16.mxu0 0
        %1146 = vmatpush1.bf16.msra.mxu0 0
        %1147 = vmatprep.subr.bf16.mxu0 0
        %1148 = vmatpush1.bf16.msra.mxu0 0
        %1149 = vmatprep.subr.bf16.mxu0 0
        %1150 = vmatpush1.bf16.msra.mxu0 0
        %1151 = vmatprep.subr.bf16.mxu0 0
        %1152 = vmatpush1.bf16.msra.mxu0 0
        %1153 = vmatprep.mubr.bf16.mxu0 0
        %1154 = vmatmul.mubr.bf16.gmra.mrb[0].mxu0 %v1116
        %v1155 = vpop.f32.mrb[0].mxu0
        %v1156 = vadd.f32 0.0, %v1155
        %v1157 = vpop.f32.mrb[0].mxu0
        %v1158 = vpop.f32.mrb[0].mxu0
        %v1159 = vpop.f32.mrb[0].mxu0
        %1160 = vdwg.mxu0
        %1162 = vrot.lane.b32.xlu0 %v1156, 16
        %v1163 = vpop.permute.xlu0 %1162
        %vm1165 = vcmask 195712
        %1166 = vst.msk [vmem:[#allocation2] sm:$0xff] %vm1165, %v1163
        %1167 = vrot.lane.b32.xlu0 %v822, 104
        %v1168 = vpop.permute.xlu0 %1167
        %1169 = vrot.lane.b32.xlu0 %v823, 104
        %v1170 = vpop.permute.xlu0 %1169
        %v1172 = vsel %vm825, %v1168, 0
        %v1175 = vsel %vm825, %v1170, 0
        %1177 = vmatprep.subr.bf16.mxu0 0
        %1178 = vmatpush1.bf16.xpose.msra.mxu0 %v1175
        %1179 = vmatprep.subr.bf16.mxu0 0
        %1180 = vmatpush1.bf16.xpose.msra.mxu0 0
        %1181 = vmatprep.subr.bf16.mxu0 0
        %1182 = vmatpush1.bf16.xpose.msra.mxu0 0
        %1183 = vmatprep.subr.bf16.mxu0 0
        %1184 = vmatpush1.bf16.xpose.msra.mxu0 0
        %1185 = vmatprep.subr.bf16.mxu0 0
        %1186 = vmatpush1.bf16.xpose.msra.mxu0 0
        %1187 = vmatprep.subr.bf16.mxu0 0
        %1188 = vmatpush1.bf16.xpose.msra.mxu0 0
        %1189 = vmatprep.subr.bf16.mxu0 0
        %1190 = vmatpush1.bf16.xpose.msra.mxu0 0
        %1191 = vmatprep.subr.bf16.mxu0 0
        %1192 = vmatpush1.bf16.xpose.msra.mxu0 0
        %1193 = vmatprep.subr.bf16.mxu0 0
        %1194 = vmatpush1.bf16.xpose.msra.mxu0 0
        %1195 = vmatprep.subr.bf16.mxu0 0
        %1196 = vmatpush1.bf16.xpose.msra.mxu0 0
        %1197 = vmatprep.subr.bf16.mxu0 0
        %1198 = vmatpush1.bf16.xpose.msra.mxu0 0
        %1199 = vmatprep.subr.bf16.mxu0 0
        %1200 = vmatpush1.bf16.xpose.msra.mxu0 0
        %1201 = vmatprep.subr.bf16.mxu0 0
        %1202 = vmatpush1.bf16.xpose.msra.mxu0 0
        %1203 = vmatprep.subr.bf16.mxu0 0
        %1204 = vmatpush1.bf16.xpose.msra.mxu0 0
        %1205 = vmatprep.subr.bf16.mxu0 0
        %1206 = vmatpush1.bf16.xpose.msra.mxu0 0
        %1207 = vmatprep.subr.bf16.mxu0 0
        %1208 = vmatpush1.bf16.xpose.msra.mxu0 0
        %1209 = vmatprep.mubr.bf16.mxu0 0
        %1210 = vmatmul.mubr.bf16.gmra.mrb[0].mxu0 %v1172
        %v1211 = vpop.f32.mrb[0].mxu0
        %v1212 = vadd.f32 0.0, %v1211
        %v1213 = vpop.f32.mrb[0].mxu0
        %v1214 = vpop.f32.mrb[0].mxu0
        %v1215 = vpop.f32.mrb[0].mxu0
        %1216 = vdwg.mxu0
        %v1217 = vsel %vm825, %v1212, -inf
        %1218 = vmax.xlane.f32.xlu0 %v1217
        %v1219 = vpop.xlane.xlu0 %1218
        %v1220 = vsub.f32 %v1212, %v1219
        %v1221 = vmul.f32 %v1220, 1.442695
        %v1222 = vpow.pop %v1221
        %v1223 = vsel %vm825, %v1222, 0.0
        %1224 = vadd.xlane.f32.xlu0 %v1223
        %v1225 = vpop.xlane.xlu0 %1224
        %v1226 = vrcp.pop %v1225
        %v1227 = vmul.f32 %v1222, %v1226
        %v1228 = vpack.c.bf16 %v1227, %v1227
        %1229 = vrot.lane.b32.xlu0 %v824, 104
        %v1230 = vpop.permute.xlu0 %1229
        %v1232 = vsel %vm825, %v1228, 0
        %v1235 = vsel %vm887, %v1230, 0
        %1237 = vmatprep.subr.bf16.mxu0 0
        %1238 = vmatpush1.bf16.msra.mxu0 %v1235
        %1239 = vmatprep.subr.bf16.mxu0 0
        %1240 = vmatpush1.bf16.msra.mxu0 0
        %1241 = vmatprep.subr.bf16.mxu0 0
        %1242 = vmatpush1.bf16.msra.mxu0 0
        %1243 = vmatprep.subr.bf16.mxu0 0
        %1244 = vmatpush1.bf16.msra.mxu0 0
        %1245 = vmatprep.subr.bf16.mxu0 0
        %1246 = vmatpush1.bf16.msra.mxu0 0
        %1247 = vmatprep.subr.bf16.mxu0 0
        %1248 = vmatpush1.bf16.msra.mxu0 0
        %1249 = vmatprep.subr.bf16.mxu0 0
        %1250 = vmatpush1.bf16.msra.mxu0 0
        %1251 = vmatprep.subr.bf16.mxu0 0
        %1252 = vmatpush1.bf16.msra.mxu0 0
        %1253 = vmatprep.subr.bf16.mxu0 0
        %1254 = vmatpush1.bf16.msra.mxu0 0
        %1255 = vmatprep.subr.bf16.mxu0 0
        %1256 = vmatpush1.bf16.msra.mxu0 0
        %1257 = vmatprep.subr.bf16.mxu0 0
        %1258 = vmatpush1.bf16.msra.mxu0 0
        %1259 = vmatprep.subr.bf16.mxu0 0
        %1260 = vmatpush1.bf16.msra.mxu0 0
        %1261 = vmatprep.subr.bf16.mxu0 0
        %1262 = vmatpush1.bf16.msra.mxu0 0
        %1263 = vmatprep.subr.bf16.mxu0 0
        %1264 = vmatpush1.bf16.msra.mxu0 0
        %1265 = vmatprep.subr.bf16.mxu0 0
        %1266 = vmatpush1.bf16.msra.mxu0 0
        %1267 = vmatprep.subr.bf16.mxu0 0
        %1268 = vmatpush1.bf16.msra.mxu0 0
        %1269 = vmatprep.mubr.bf16.mxu0 0
        %1270 = vmatmul.mubr.bf16.gmra.mrb[0].mxu0 %v1232
        %v1271 = vpop.f32.mrb[0].mxu0
        %v1272 = vadd.f32 0.0, %v1271
        %v1273 = vpop.f32.mrb[0].mxu0
        %v1274 = vpop.f32.mrb[0].mxu0
        %v1275 = vpop.f32.mrb[0].mxu0
        %1276 = vdwg.mxu0
        %1278 = vrot.lane.b32.xlu0 %v1272, 24
        %v1279 = vpop.permute.xlu0 %1278
        %vm1281 = vcmask 261312
        %1282 = vst.msk [vmem:[#allocation2] sm:$0xff] %vm1281, %v1279
        %v1283 = vld [vmem:[#allocation2] sm:$0xff]
        %v1284 = vpack.c.bf16 %v1283, %v1283
        %v1285 = vld [vmem:[%s9] sm:$0xf]
        %v1286 = vld [vmem:[%s9 + $0x4] sm:$0xf]
        %v1287 = vld [vmem:[%s9 + $0x8] sm:$0xf]
        %v1288 = vld [vmem:[%s9 + $0xc] sm:$0xf]
        %v1289 = vld [vmem:[%s10] sm:$0x1]
        %v1291 = vlaneseq
        %v1292 = vshrl.u32 %v1291, 7
        %v1293 = vsub.s32 0, %v1292
        %v1294 = vrot.slane %v1289, %v1293
        %v1300 = vunpack.c.l.b16 %v1285
        %v1301 = vunpack.c.l.b16 %v1286
        %v1302 = vunpack.c.l.b16 %v1287
        %v1303 = vunpack.c.l.b16 %v1288
        %v1304 = vpack.c.b16 %v1301, %v1300
        %v1305 = vpack.c.b16 %v1303, %v1302
        %v1309 = vsel %vm643, %v1284, 0
        %1311 = vmatprep.subr.bf16.mxu0 0
        %1312 = vmatpush1.bf16.msra.mxu0 %v1304
        %1313 = vmatprep.subr.bf16.mxu0 0
        %1314 = vmatpush1.bf16.msra.mxu0 %v1305
        %1315 = vmatprep.subr.bf16.mxu0 0
        %1316 = vmatpush1.bf16.msra.mxu0 0
        %1317 = vmatprep.subr.bf16.mxu0 0
        %1318 = vmatpush1.bf16.msra.mxu0 0
        %1319 = vmatprep.subr.bf16.mxu0 0
        %1320 = vmatpush1.bf16.msra.mxu0 0
        %1321 = vmatprep.subr.bf16.mxu0 0
        %1322 = vmatpush1.bf16.msra.mxu0 0
        %1323 = vmatprep.subr.bf16.mxu0 0
        %1324 = vmatpush1.bf16.msra.mxu0 0
        %1325 = vmatprep.subr.bf16.mxu0 0
        %1326 = vmatpush1.bf16.msra.mxu0 0
        %1327 = vmatprep.subr.bf16.mxu0 0
        %1328 = vmatpush1.bf16.msra.mxu0 0
        %1329 = vmatprep.subr.bf16.mxu0 0
        %1330 = vmatpush1.bf16.msra.mxu0 0
        %1331 = vmatprep.subr.bf16.mxu0 0
        %1332 = vmatpush1.bf16.msra.mxu0 0
        %1333 = vmatprep.subr.bf16.mxu0 0
        %1334 = vmatpush1.bf16.msra.mxu0 0
        %1335 = vmatprep.subr.bf16.mxu0 0
        %1336 = vmatpush1.bf16.msra.mxu0 0
        %1337 = vmatprep.subr.bf16.mxu0 0
        %1338 = vmatpush1.bf16.msra.mxu0 0
        %1339 = vmatprep.subr.bf16.mxu0 0
        %1340 = vmatpush1.bf16.msra.mxu0 0
        %1341 = vmatprep.subr.bf16.mxu0 0
        %1342 = vmatpush1.bf16.msra.mxu0 0
        %1343 = vmatprep.mubr.bf16.mxu0 0
        %1344 = vmatmul.mubr.bf16.gmra.mrb[0].mxu0 %v1309
        %v1345 = vpop.f32.mrb[0].mxu0
        %v1346 = vadd.f32 %v1294, %v1345
        %v1347 = vpop.f32.mrb[0].mxu0
        %v1348 = vpop.f32.mrb[0].mxu0
        %v1349 = vpop.f32.mrb[0].mxu0
        %1350 = vdwg.mxu0
        %v1351 = vadd.f32 %v606, %v1346
        %v1352 = vpack.c.bf16 %v1351, %v1351
        %v1353 = vld [vmem:[%s11] sm:$0xf]
        %v1354 = vld [vmem:[%s11 + $0x4] sm:$0xf]
        %v1355 = vld [vmem:[%s11 + $0x8] sm:$0xf]
        %v1356 = vld [vmem:[%s11 + $0xc] sm:$0xf]
        %v1357 = vld [vmem:[%s12] sm:$0x1]
        %v1359 = vlaneseq
        %v1360 = vshrl.u32 %v1359, 7
        %v1361 = vsub.s32 0, %v1360
        %v1362 = vrot.slane %v1357, %v1361
        %v1368 = vunpack.c.l.b16 %v1353
        %v1369 = vunpack.c.l.b16 %v1354
        %v1370 = vunpack.c.l.b16 %v1355
        %v1371 = vunpack.c.l.b16 %v1356
        %v1372 = vpack.c.b16 %v1369, %v1368
        %v1373 = vpack.c.b16 %v1371, %v1370
        %v1377 = vsel %vm643, %v1352, 0
        %1379 = vmatprep.subr.bf16.mxu0 0
        %1380 = vmatpush1.bf16.msra.mxu0 %v1372
        %1381 = vmatprep.subr.bf16.mxu0 0
        %1382 = vmatpush1.bf16.msra.mxu0 %v1373
        %1383 = vmatprep.subr.bf16.mxu0 0
        %1384 = vmatpush1.bf16.msra.mxu0 0
        %1385 = vmatprep.subr.bf16.mxu0 0
        %1386 = vmatpush1.bf16.msra.mxu0 0
        %1387 = vmatprep.subr.bf16.mxu0 0
        %1388 = vmatpush1.bf16.msra.mxu0 0
        %1389 = vmatprep.subr.bf16.mxu0 0
        %1390 = vmatpush1.bf16.msra.mxu0 0
        %1391 = vmatprep.subr.bf16.mxu0 0
        %1392 = vmatpush1.bf16.msra.mxu0 0
        %1393 = vmatprep.subr.bf16.mxu0 0
        %1394 = vmatpush1.bf16.msra.mxu0 0
        %1395 = vmatprep.subr.bf16.mxu0 0
        %1396 = vmatpush1.bf16.msra.mxu0 0
        %1397 = vmatprep.subr.bf16.mxu0 0
        %1398 = vmatpush1.bf16.msra.mxu0 0
        %1399 = vmatprep.subr.bf16.mxu0 0
        %1400 = vmatpush1.bf16.msra.mxu0 0
        %1401 = vmatprep.subr.bf16.mxu0 0
        %1402 = vmatpush1.bf16.msra.mxu0 0
        %1403 = vmatprep.subr.bf16.mxu0 0
        %1404 = vmatpush1.bf16.msra.mxu0 0
        %1405 = vmatprep.subr.bf16.mxu0 0
        %1406 = vmatpush1.bf16.msra.mxu0 0
        %1407 = vmatprep.subr.bf16.mxu0 0
        %1408 = vmatpush1.bf16.msra.mxu0 0
        %1409 = vmatprep.subr.bf16.mxu0 0
        %1410 = vmatpush1.bf16.msra.mxu0 0
        %1411 = vmatprep.mubr.bf16.mxu0 0
        %1412 = vmatmul.mubr.bf16.gmra.mrb[0].mxu0 %v1377
        %v1413 = vpop.f32.mrb[0].mxu0
        %v1414 = vadd.f32 %v1362, %v1413
        %v1415 = vpop.f32.mrb[0].mxu0
        %v1416 = vpop.f32.mrb[0].mxu0
        %v1417 = vpop.f32.mrb[0].mxu0
        %1418 = vdwg.mxu0
        %v1419 = vmax.f32 %v1414, 0.0
        %v1420 = vpack.c.bf16 %v1419, %v1419
        %v1421 = vld [vmem:[%s13] sm:$0xf]
        %v1422 = vld [vmem:[%s13 + $0x4] sm:$0xf]
        %v1423 = vld [vmem:[%s13 + $0x8] sm:$0xf]
        %v1424 = vld [vmem:[%s13 + $0xc] sm:$0xf]
        %v1425 = vld [vmem:[%s13 + $0x10] sm:$0xf]
        %v1426 = vld [vmem:[%s13 + $0x14] sm:$0xf]
        %v1427 = vld [vmem:[%s13 + $0x18] sm:$0xf]
        %v1428 = vld [vmem:[%s13 + $0x1c] sm:$0xf]
        %v1429 = vld [vmem:[%s13 + $0x20] sm:$0xf]
        %v1430 = vld [vmem:[%s13 + $0x24] sm:$0xf]
        %v1431 = vld [vmem:[%s13 + $0x28] sm:$0xf]
        %v1432 = vld [vmem:[%s13 + $0x2c] sm:$0xf]
        %v1433 = vld [vmem:[%s13 + $0x30] sm:$0xf]
        %v1434 = vld [vmem:[%s13 + $0x34] sm:$0xf]
        %v1435 = vld [vmem:[%s13 + $0x38] sm:$0xf]
        %v1436 = vld [vmem:[%s13 + $0x3c] sm:$0xf]
        %v1437 = vld [vmem:[%s14] sm:$0x1]
        %v1439 = vlaneseq
        %v1440 = vshrl.u32 %v1439, 7
        %v1441 = vsub.s32 0, %v1440
        %v1442 = vrot.slane %v1437, %v1441
        %v1460 = vunpack.c.l.b16 %v1421
        %v1461 = vunpack.c.l.b16 %v1422
        %v1462 = vunpack.c.l.b16 %v1423
        %v1463 = vunpack.c.l.b16 %v1424
        %v1464 = vunpack.c.l.b16 %v1425
        %v1465 = vunpack.c.l.b16 %v1426
        %v1466 = vunpack.c.l.b16 %v1427
        %v1467 = vunpack.c.l.b16 %v1428
        %v1468 = vunpack.c.l.b16 %v1429
        %v1469 = vunpack.c.l.b16 %v1430
        %v1470 = vunpack.c.l.b16 %v1431
        %v1471 = vunpack.c.l.b16 %v1432
        %v1472 = vunpack.c.l.b16 %v1433
        %v1473 = vunpack.c.l.b16 %v1434
        %v1474 = vunpack.c.l.b16 %v1435
        %v1475 = vunpack.c.l.b16 %v1436
        %v1476 = vpack.c.b16 %v1461, %v1460
        %v1477 = vpack.c.b16 %v1463, %v1462
        %v1478 = vpack.c.b16 %v1465, %v1464
        %v1479 = vpack.c.b16 %v1467, %v1466
        %v1480 = vpack.c.b16 %v1469, %v1468
        %v1481 = vpack.c.b16 %v1471, %v1470
        %v1482 = vpack.c.b16 %v1473, %v1472
        %v1483 = vpack.c.b16 %v1475, %v1474
        %1492 = vmatprep.subr.bf16.mxu0 0
        %1493 = vmatpush1.bf16.msra.mxu0 %v1476
        %1494 = vmatprep.subr.bf16.mxu0 0
        %1495 = vmatpush1.bf16.msra.mxu0 %v1477
        %1496 = vmatprep.subr.bf16.mxu0 0
        %1497 = vmatpush1.bf16.msra.mxu0 %v1478
        %1498 = vmatprep.subr.bf16.mxu0 0
        %1499 = vmatpush1.bf16.msra.mxu0 %v1479
        %1500 = vmatprep.subr.bf16.mxu0 0
        %1501 = vmatpush1.bf16.msra.mxu0 %v1480
        %1502 = vmatprep.subr.bf16.mxu0 0
        %1503 = vmatpush1.bf16.msra.mxu0 %v1481
        %1504 = vmatprep.subr.bf16.mxu0 0
        %1505 = vmatpush1.bf16.msra.mxu0 %v1482
        %1506 = vmatprep.subr.bf16.mxu0 0
        %1507 = vmatpush1.bf16.msra.mxu0 %v1483
        %1508 = vmatprep.subr.bf16.mxu0 0
        %1509 = vmatpush1.bf16.msra.mxu0 0
        %1510 = vmatprep.subr.bf16.mxu0 0
        %1511 = vmatpush1.bf16.msra.mxu0 0
        %1512 = vmatprep.subr.bf16.mxu0 0
        %1513 = vmatpush1.bf16.msra.mxu0 0
        %1514 = vmatprep.subr.bf16.mxu0 0
        %1515 = vmatpush1.bf16.msra.mxu0 0
        %1516 = vmatprep.subr.bf16.mxu0 0
        %1517 = vmatpush1.bf16.msra.mxu0 0
        %1518 = vmatprep.subr.bf16.mxu0 0
        %1519 = vmatpush1.bf16.msra.mxu0 0
        %1520 = vmatprep.subr.bf16.mxu0 0
        %1521 = vmatpush1.bf16.msra.mxu0 0
        %1522 = vmatprep.subr.bf16.mxu0 0
        %1523 = vmatpush1.bf16.msra.mxu0 0
        %1524 = vmatprep.mubr.bf16.mxu0 0
        %1525 = vmatmul.mubr.bf16.gmra.mrb[0].mxu0 %v1420
        %v1526 = vpop.f32.mrb[0].mxu0
        %v1527 = vadd.f32 %v1442, %v1526
        %v1528 = vpop.f32.mrb[0].mxu0
        %v1529 = vpop.f32.mrb[0].mxu0
        %v1530 = vpop.f32.mrb[0].mxu0
        %1531 = vdwg.mxu0
        %v1532 = vadd.f32 %v1351, %v1527
        %v1533 = vpack.c.bf16 %v1532, %v1532
        %v1534 = vld [vmem:[%s15] sm:$0xf]
        %v1535 = vld [vmem:[%s15 + $0x4] sm:$0xf]
        %v1536 = vld [vmem:[%s15 + $0x8] sm:$0xf]
        %v1537 = vld [vmem:[%s15 + $0xc] sm:$0xf]
        %v1538 = vld [vmem:[%s16] sm:$0x1]
        %v1540 = vlaneseq
        %v1541 = vshrl.u32 %v1540, 7
        %v1542 = vsub.s32 0, %v1541
        %v1543 = vrot.slane %v1538, %v1542
        %v1549 = vunpack.c.l.b16 %v1534
        %v1550 = vunpack.c.l.b16 %v1535
        %v1551 = vunpack.c.l.b16 %v1536
        %v1552 = vunpack.c.l.b16 %v1537
        %v1553 = vpack.c.b16 %v1550, %v1549
        %v1554 = vpack.c.b16 %v1552, %v1551
        %v1558 = vsel %vm643, %v1533, 0
        %1560 = vmatprep.subr.bf16.mxu0 0
        %1561 = vmatpush1.bf16.msra.mxu0 %v1553
        %1562 = vmatprep.subr.bf16.mxu0 0
        %1563 = vmatpush1.bf16.msra.mxu0 %v1554
        %1564 = vmatprep.subr.bf16.mxu0 0
        %1565 = vmatpush1.bf16.msra.mxu0 0
        %1566 = vmatprep.subr.bf16.mxu0 0
        %1567 = vmatpush1.bf16.msra.mxu0 0
        %1568 = vmatprep.subr.bf16.mxu0 0
        %1569 = vmatpush1.bf16.msra.mxu0 0
        %1570 = vmatprep.subr.bf16.mxu0 0
        %1571 = vmatpush1.bf16.msra.mxu0 0
        %1572 = vmatprep.subr.bf16.mxu0 0
        %1573 = vmatpush1.bf16.msra.mxu0 0
        %1574 = vmatprep.subr.bf16.mxu0 0
        %1575 = vmatpush1.bf16.msra.mxu0 0
        %1576 = vmatprep.subr.bf16.mxu0 0
        %1577 = vmatpush1.bf16.msra.mxu0 0
        %1578 = vmatprep.subr.bf16.mxu0 0
        %1579 = vmatpush1.bf16.msra.mxu0 0
        %1580 = vmatprep.subr.bf16.mxu0 0
        %1581 = vmatpush1.bf16.msra.mxu0 0
        %1582 = vmatprep.subr.bf16.mxu0 0
        %1583 = vmatpush1.bf16.msra.mxu0 0
        %1584 = vmatprep.subr.bf16.mxu0 0
        %1585 = vmatpush1.bf16.msra.mxu0 0
        %1586 = vmatprep.subr.bf16.mxu0 0
        %1587 = vmatpush1.bf16.msra.mxu0 0
        %1588 = vmatprep.subr.bf16.mxu0 0
        %1589 = vmatpush1.bf16.msra.mxu0 0
        %1590 = vmatprep.subr.bf16.mxu0 0
        %1591 = vmatpush1.bf16.msra.mxu0 0
        %1592 = vmatprep.mubr.bf16.mxu0 0
        %1593 = vmatmul.mubr.bf16.gmra.mrb[0].mxu0 %v1558
        %v1594 = vpop.f32.mrb[0].mxu0
        %v1595 = vadd.f32 %v1543, %v1594
        %v1596 = vpop.f32.mrb[0].mxu0
        %v1597 = vpop.f32.mrb[0].mxu0
        %v1598 = vpop.f32.mrb[0].mxu0
        %1599 = vdwg.mxu0
        %1600 = vst [vmem:[%s541] sm:$0xff] %v1595
        %s1601 = sand.u32 %s401, 1
        %s1602 = scalar_lea.sflag [#allocation4], %s1601
        %s1603 = sand.u32 %s401, 1
        %s1604 = smul.addr %s1603, 8
        %s1605 = scalar_lea.vmem [#allocation3], %s1604
        // Predicated region
        $region89: #{tpu_custom_call.1} parent=87 // pred_check
          %p1606 = pneg %p411
        $region90: #{tpu_custom_call.1} parent=87 // pred_check_branch
          %1608 = sbr.rel (%p1606) target = $region92
        $region91: #{tpu_custom_call.1} parent=87 // pred_region
          %s1610 = ssub.s32 128, 128
          %1611 = vsyncadd %s1602, %s1610
          %s1612 = smul.addr %s31, 128
          %s1613 = scalar_lea.hbm %s17, %s1612
          %s1615 = sshll.u32 %s1605, 4
          %s1616 = int_to_ptr.vmem [resolvable:$true] %s1615
          %1618 = dma.vmem_to_hbm [thread:$0]  %s1616, 128, %s1613, %s1602
        $region92: #{tpu_custom_call.1} parent=87 // pred_fallthru
          _
      $region88: #{tpu_custom_call.1} parent=5 // pred_fallthru
        _
      %p1619 = scmp.le.s32.totalorder 2, %s26
      // Predicated region
      $region93: #{tpu_custom_call.1} parent=5 // pred_check
        %p1620 = pneg %p1619
      $region94: #{tpu_custom_call.1} parent=5 // pred_check_branch
        %1622 = sbr.rel (%p1620) target = $region96
      $region95: #{tpu_custom_call.1} parent=5 // pred_region
        %s1623 = ssub.s32 %s26, 2
        // Predicated region
        $region97: #{tpu_custom_call.1} parent=95 // pred_check
          %p1624 = pneg %p417
        $region98: #{tpu_custom_call.1} parent=95 // pred_check_branch
          %1626 = sbr.rel (%p1624) target = $region100
        $region99: #{tpu_custom_call.1} parent=95 // pred_region
          %s1627 = sand.u32 %s402, 1
          %s1628 = scalar_lea.sflag [#allocation4], %s1627
          %s1629 = sand.u32 %s402, 1
          %s1630 = smul.addr %s1629, 8
          %s1631 = scalar_lea.vmem [#allocation3], %s1630
          %1632 = dma.done %s1628, 128
        $region100: #{tpu_custom_call.1} parent=95 // pred_fallthru
          _
      $region96: #{tpu_custom_call.1} parent=5 // pred_fallthru
        _
    $region6: #{tpu_custom_call.1} parent=1 // loop_footer
      %s30 = sadd.s32 1, %s26
    $region7: #{tpu_custom_call.1} parent=1 // loop_footer_branch
      %25 = sbr.rel target = $region3
    $region8: #{tpu_custom_call.1} parent=1 // loop_exit
      _
    %1633 = vsyncpa [#allocation4], 1
    %s1634 = scalar_lea.sflag [#allocation4], 1
    %1635 = vsyncpa %s1634, 1

</llo_original>
